<compile_context>
chip_gen: v6e
topology: v6e:2x2x1
jax: 0.10.0
libtpu: 0.0.40
codegen_flags: <defaults>
</compile_context>

<pallas_src>
import functools

import jax
import jax.numpy as jnp
from jax import lax
from jax.experimental import pallas as pl
from jax.experimental.pallas import tpu as pltpu

_VMEM_LIMIT = 32 * 1024 * 1024   # explicit scoped-VMEM limit (> v5e 16 MiB default)


def _compiler_params(grid_steps):
    sem = ("parallel",) if grid_steps > 1 else ("arbitrary",)
    return pltpu.CompilerParams(dimension_semantics=sem,
                                vmem_limit_bytes=_VMEM_LIMIT)


def _row_tile(m):
    """Single grid step for small M; only tile when every tile keeps >=128 rows."""
    if m <= 512:
        return m
    for t in (512, 256, 128):
        if m % t == 0:
            return t
    return m


# ----------------------------------------------------------------------------
# In-kernel helpers
# ----------------------------------------------------------------------------
def _maxpool2x2(img):
    """2x2/stride-2 max-pool of an (H, W, C) value held in registers."""
    h, w, c = img.shape
    a = img.reshape(h // 2, 2, w // 2, 2, c)
    a = jnp.maximum(a[:, 0], a[:, 1])            # (H/2, W/2, 2, C)
    return jnp.maximum(a[:, :, 0], a[:, :, 1])   # (H/2, W/2, C)


# ----------------------------------------------------------------------------
# Pallas kernels
# ----------------------------------------------------------------------------
def _conv_pool_only_kernel(x_ref, w_ref, b_ref, pool_ref, *, h, w):
    """im2col 3x3 conv + ReLU + fused 2x2 max-pool; only the pooled tile is stored.

    x_ref:    (1, H*W, Kpad)       bf16  im2col rows (zero-padded lanes)
    w_ref:    (Kpad, Cout)         bf16
    b_ref:    (1, Cout)            f32
    pool_ref: (1, H/2, W/2, Cout)  bf16
    """
    c = pool_ref.shape[-1]
    acc = jnp.dot(x_ref[0], w_ref[...], preferred_element_type=jnp.float32)
    acc = jnp.maximum(acc + b_ref[...], 0.0)
    pool_ref[0] = _maxpool2x2(acc.reshape(h, w, c)).astype(pool_ref.dtype)


def _conv_skip_pool_kernel(x_ref, w_ref, b_ref, skip_ref, pool_ref, *, h, w, wp):
    """3x3 conv folded along K (one K=3*Cin dot per dy) + ReLU + fused 2x2 pool.

    x_ref:    (1, (H+2)*Wp, 3*Cin) bf16  dx-concatenated, row-flattened image
    w_ref:    (3, 3*Cin, Cout)     bf16  one (3*Cin, Cout) block per dy
    b_ref:    (1, Cout)            f32
    skip_ref: (1, H, W, Cout)      bf16
    pool_ref: (1, H/2, W/2, Cout)  bf16
    """
    cout = skip_ref.shape[-1]
    rows = h * wp                                   # dy offsets dy*wp are 8-aligned
    acc = jnp.zeros((rows, cout), jnp.float32)
    for dy in range(3):
        acc = acc + jnp.dot(x_ref[0, dy * wp:dy * wp + rows, :], w_ref[dy],
                            preferred_element_type=jnp.float32)
    acc = jnp.maximum(acc + b_ref[...], 0.0)
    img = acc.reshape(h, wp, cout)
    if wp != w:                                      # drop alignment-padding columns
        img = img[:, :w, :]
    skip_ref[0] = img.astype(skip_ref.dtype)
    pool_ref[0] = _maxpool2x2(img).astype(pool_ref.dtype)


def _mm2_kernel(x_ref, w1_ref, b1_ref, w2_ref, b2_ref, o_ref, *, relu1, relu2):
    """o = [relu](([relu](x@W1 + b1)) @ W2 + b2): two chained MXU matmuls."""
    hid = jnp.dot(x_ref[...], w1_ref[...], preferred_element_type=jnp.float32)
    hid = hid + b1_ref[...]
    if relu1:
        hid = jnp.maximum(hid, 0.0)
    out = jnp.dot(hid.astype(jnp.bfloat16), w2_ref[...],
                  preferred_element_type=jnp.float32)
    out = out + b2_ref[...]
    if relu2:
        out = jnp.maximum(out, 0.0)
    o_ref[...] = out.astype(o_ref.dtype)


# ----------------------------------------------------------------------------
# Wrappers (XLA glue: padding, im2col, interleave, weight algebra)
# ----------------------------------------------------------------------------
def _pad_hw1(x):
    return jnp.pad(x, ((0, 0), (1, 1), (1, 1), (0, 0)))


def _im2col3x3(xp, h, w):
    """(N, H+2, W+2, C) halo-padded -> (N, H, W, 9*C) with (dy, dx, c) ordering."""
    slabs = [xp[:, dy:dy + h, dx:dx + w, :] for dy in range(3) for dx in range(3)]
    return jnp.concatenate(slabs, axis=-1)


def encoder_pool_only(x, w, b):
    """Encoder block 1: maxpool(relu(conv3x3(x))); the full-res skip is never stored."""
    n, h, wd, cin = x.shape
    cout = w.shape[-1]
    k = 9 * cin
    kpad = 128 * pl.cdiv(k, 128)
    cols = _im2col3x3(_pad_hw1(x.astype(jnp.bfloat16)), h, wd)
    cols = jnp.pad(cols.reshape(n, h * wd, k), ((0, 0), (0, 0), (0, kpad - k)))
    wmat = jnp.pad(w.reshape(k, cout), ((0, kpad - k), (0, 0))).astype(jnp.bfloat16)
    b2 = b.reshape(1, cout).astype(jnp.float32)
    return pl.pallas_call(
        functools.partial(_conv_pool_only_kernel, h=h, w=wd),
        out_shape=jax.ShapeDtypeStruct((n, h // 2, wd // 2, cout), jnp.bfloat16),
        grid=(n,),
        in_specs=[pl.BlockSpec((1, h * wd, kpad), lambda i: (i, 0, 0)),
                  pl.BlockSpec((kpad, cout), lambda i: (0, 0)),
                  pl.BlockSpec((1, cout), lambda i: (0, 0))],
        out_specs=pl.BlockSpec((1, h // 2, wd // 2, cout), lambda i: (i, 0, 0, 0)),
        compiler_params=_compiler_params(n),
    )(cols, wmat, b2)


def encoder_skip_pool(x, w, b):
    """Encoder block 2: returns (skip = relu(conv3x3(x)), maxpool(skip)), both bf16."""
    n, h, wd, cin = x.shape
    cout = w.shape[-1]
    wp = 8 * pl.cdiv(wd, 8)                  # pad row width so dy offsets are 8-aligned
    xp = _pad_hw1(x.astype(jnp.bfloat16))    # (n, h+2, wd+2, cin)
    xcat = jnp.concatenate([xp[:, :, dx:dx + wd, :] for dx in range(3)], axis=-1)
    if wp != wd:
        xcat = jnp.pad(xcat, ((0, 0), (0, 0), (0, wp - wd), (0, 0)))
    xrows = xcat.reshape(n, (h + 2) * wp, 3 * cin)
    w3 = w.reshape(3, 3 * cin, cout).astype(jnp.bfloat16)
    b2 = b.reshape(1, cout).astype(jnp.float32)
    return pl.pallas_call(
        functools.partial(_conv_skip_pool_kernel, h=h, w=wd, wp=wp),
        out_shape=(jax.ShapeDtypeStruct((n, h, wd, cout), jnp.bfloat16),
                   jax.ShapeDtypeStruct((n, h // 2, wd // 2, cout), jnp.bfloat16)),
        grid=(n,),
        in_specs=[pl.BlockSpec((1, (h + 2) * wp, 3 * cin), lambda i: (i, 0, 0)),
                  pl.BlockSpec((3, 3 * cin, cout), lambda i: (0, 0, 0)),
                  pl.BlockSpec((1, cout), lambda i: (0, 0))],
        out_specs=(pl.BlockSpec((1, h, wd, cout), lambda i: (i, 0, 0, 0)),
                   pl.BlockSpec((1, h // 2, wd // 2, cout), lambda i: (i, 0, 0, 0))),
        compiler_params=_compiler_params(n),
    )(xrows, w3, b2)


def fused_double_matmul(x, w1, b1, w2, b2, *, relu1, relu2=False,
                        out_dtype=jnp.float32):
    """[relu]-chained (M,K1)@(K1,Kmid)@(Kmid,N) with biases, in one kernel."""
    m, k1 = x.shape
    kmid = w1.shape[1]
    nout = w2.shape[1]
    tm = _row_tile(m)
    steps = m // tm
    return pl.pallas_call(
        functools.partial(_mm2_kernel, relu1=relu1, relu2=relu2),
        out_shape=jax.ShapeDtypeStruct((m, nout), out_dtype),
        grid=(steps,),
        in_specs=[pl.BlockSpec((tm, k1), lambda i: (i, 0)),
                  pl.BlockSpec((k1, kmid), lambda i: (0, 0)),
                  pl.BlockSpec((1, kmid), lambda i: (0, 0)),
                  pl.BlockSpec((kmid, nout), lambda i: (0, 0)),
                  pl.BlockSpec((1, nout), lambda i: (0, 0))],
        out_specs=pl.BlockSpec((tm, nout), lambda i: (i, 0)),
        compiler_params=_compiler_params(steps),
    )(x, w1, b1, w2, b2)


def _conv_transpose_weights(w, b, pad_cols_to=None):
    """(2,2,Cin,Cout) -> ((Cin, 4*Cout) matrix, (1, 4*Cout) bias); cols = (ky,kx,co)."""
    cin, cout = w.shape[2], w.shape[3]
    wm = jnp.transpose(w, (2, 0, 1, 3)).reshape(cin, 4 * cout)
    bm = jnp.tile(b, 4)
    ncols = 4 * cout
    if pad_cols_to is not None and ncols < pad_cols_to:
        wm = jnp.pad(wm, ((0, 0), (0, pad_cols_to - ncols)))
        bm = jnp.pad(bm, (0, pad_cols_to - ncols))
        ncols = pad_cols_to
    return wm.astype(jnp.bfloat16), bm.reshape(1, ncols).astype(jnp.float32)


def _interleave2x2(rows, n, h, w, cout):
    """(n*h*w, 4*cout) sub-pixel column groups -> (n, 2h, 2w, cout)."""
    y = rows.reshape(n, h, w, 2, 2, cout).transpose(0, 1, 3, 2, 4, 5)
    return y.reshape(n, 2 * h, 2 * w, cout)


# ----------------------------------------------------------------------------
# Parameter init & Unet forward
# ----------------------------------------------------------------------------
def init_params(key):
    def w(k, shape, scale=0.02):
        return (scale * jax.random.normal(k, shape)).astype(jnp.float32)

    ks = jax.random.split(key, 10)
    return dict(
        enc1_w=w(ks[0], (3, 3, 9, 128)),     enc1_b=jnp.zeros((128,), jnp.float32),
        enc2_w=w(ks[1], (3, 3, 128, 128)),   enc2_b=jnp.zeros((128,), jnp.float32),
        bott_w=w(ks[2], (3, 3, 128, 256)),   bott_b=jnp.zeros((256,), jnp.float32),
        bott_skip_w=w(ks[3], (128, 256)),    bott_skip_b=jnp.zeros((256,), jnp.float32),
        dec_up_w=w(ks[4], (2, 2, 256, 128)), dec_up_b=jnp.zeros((128,), jnp.float32),
        aux_w=w(ks[5], (128, 256)),          aux_b=jnp.zeros((256,), jnp.float32),
        fc_main_w=w(ks[6], (256, 256)),      fc_main_b=jnp.zeros((256,), jnp.float32),
        fc_aux_w=w(ks[7], (256, 256)),       fc_aux_b=jnp.zeros((256,), jnp.float32),
        fin_w=w(ks[8], (2, 2, 256, 3)),      fin_b=jnp.zeros((3,), jnp.float32),
    )


def unet_forward(x_nchw, p):
    x = jnp.transpose(x_nchw, (0, 2, 3, 1)).astype(jnp.float32)    # NCHW -> NHWC
    n, h, wd, _ = x.shape
    h2, w2 = h // 2, wd // 2
    h4, w4 = h // 4, wd // 4

    # ---- Encoder ----------------------------------------------------------
    # Block 1: skip1 is unused downstream -> pooled-only kernel (no skip write).
    enc1 = encoder_pool_only(x, p["enc1_w"], p["enc1_b"])          # (N,H/2,W/2,128) bf16
    # Block 2: skip2 feeds the decoder concat; enc2 feeds the bottleneck.
    skip2, enc2 = encoder_skip_pool(enc1, p["enc2_w"], p["enc2_b"])

    # ---- Bottleneck + decoder up-sample (one fused kernel) -----------------
    # bottleneck = relu(conv3x3(enc2) + conv1x1(maxpool(skip2))); maxpool(skip2)
    # == enc2, so the 1x1 weights fold into the centre tap of the 3x3.  The
    # decoder ConvTranspose2d(256->128, k=2, s=2) is the second matmul of the
    # same kernel, so the bottleneck activation never touches HBM.
    cin = enc2.shape[-1]
    cmid = p["bott_w"].shape[-1]
    wb = p["bott_w"].at[1, 1].add(p["bott_skip_w"]).reshape(9 * cin, cmid)
    bb = (p["bott_b"] + p["bott_skip_b"]).reshape(1, cmid)
    wu, bu = _conv_transpose_weights(p["dec_up_w"], p["dec_up_b"])
    cols = _im2col3x3(_pad_hw1(enc2), h4, w4).reshape(n * h4 * w4, 9 * cin)
    up_rows = fused_double_matmul(cols, wb.astype(jnp.bfloat16),
                                  bb.astype(jnp.float32), wu, bu,
                                  relu1=True, out_dtype=jnp.bfloat16)
    up = _interleave2x2(up_rows, n, h4, w4, p["dec_up_w"].shape[-1])   # (N,H/2,W/2,128)

    # ---- FC block + final up-sample (one fused kernel) ---------------------
    # fc = relu(concat([up, skip2]) @ fc_main + (enc1 @ aux_w + aux_b) @ fc_aux + b)
    #    = relu([up, skip2, enc1] @ W_all + b_all)     (aux 1x1s folded, K = 384)
    c = up.shape[-1]
    m2 = n * h2 * w2
    xcat = jnp.concatenate([up.reshape(m2, c), skip2.reshape(m2, c),
                            enc1.reshape(m2, c)], axis=-1)             # (M, 384) bf16
    w_aux_eff = jnp.dot(p["aux_w"], p["fc_aux_w"])                     # (128, 256)
    w_all = jnp.concatenate([p["fc_main_w"][:c], p["fc_main_w"][c:], w_aux_eff],
                            axis=0)                                    # (384, 256)
    b_all = p["fc_main_b"] + jnp.dot(p["aux_b"], p["fc_aux_w"]) + p["fc_aux_b"]
    cfin = p["fin_w"].shape[-1]
    wf, bf = _conv_transpose_weights(p["fin_w"], p["fin_b"], pad_cols_to=128)
    out_rows = fused_double_matmul(xcat, w_all.astype(jnp.bfloat16),
                                   b_all.reshape(1, -1).astype(jnp.float32),
                                   wf, bf, relu1=True, out_dtype=jnp.float32)
    out = _interleave2x2(out_rows[:, :4 * cfin], n, h2, w2, cfin)      # (N, H, W, 3)
    return jnp.transpose(out, (0, 3, 1, 2))                            # NHWC -> NCHW


# ----------------------------------------------------------------------------
# Pure-JAX f32 reference (same inferred architecture) for a tolerance check
# ----------------------------------------------------------------------------
def _ref_conv3x3(x, w, b):
    y = lax.conv_general_dilated(x, w, window_strides=(1, 1),
                                 padding=((1, 1), (1, 1)),
                                 dimension_numbers=("NHWC", "HWIO", "NHWC"))
    return y + b


def _ref_pool(x):
    return lax.reduce_window(x, -jnp.inf, lax.max, (1, 2, 2, 1), (1, 2, 2, 1), "VALID")


def _ref_conv_transpose2x2(x, w, b):
    n, h, wd, _ = x.shape
    co = w.shape[-1]
    y = jnp.einsum("nhwc,uvcd->nhuwvd", x, w).reshape(n, 2 * h, 2 * wd, co)
    return y + b


def unet_reference(x_nchw, p):
    x = jnp.transpose(x_nchw, (0, 2, 3, 1)).astype(jnp.float32)
    skip1 = jax.nn.relu(_ref_conv3x3(x, p["enc1_w"], p["enc1_b"]))
    enc1 = _ref_pool(skip1)
    skip2 = jax.nn.relu(_ref_conv3x3(enc1, p["enc2_w"], p["enc2_b"]))
    enc2 = _ref_pool(skip2)
    bott = jax.nn.relu(_ref_conv3x3(enc2, p["bott_w"], p["bott_b"])
                       + jnp.einsum("nhwc,cd->nhwd", _ref_pool(skip2),
                                    p["bott_skip_w"])
                       + p["bott_skip_b"])
    up = _ref_conv_transpose2x2(bott, p["dec_up_w"], p["dec_up_b"])
    dec = jnp.concatenate([up, skip2], axis=-1)
    aux = jnp.einsum("nhwc,cd->nhwd", enc1, p["aux_w"]) + p["aux_b"]
    fc = jax.nn.relu(jnp.einsum("nhwc,cd->nhwd", dec, p["fc_main_w"])
                     + p["fc_main_b"]
                     + jnp.einsum("nhwc,cd->nhwd", aux, p["fc_aux_w"])
                     + p["fc_aux_b"])
    fin = _ref_conv_transpose2x2(fc, p["fin_w"], p["fin_b"])
    return jnp.transpose(fin, (0, 3, 1, 2))


if __name__ == "__main__":
    key = jax.random.PRNGKey(0)
    k_x, k_p = jax.random.split(key)
    x = jax.random.normal(k_x, (2, 9, 16, 16), dtype=jnp.float32)   # NCHW like PyTorch
    params = init_params(k_p)

    out = jax.block_until_ready(jax.jit(unet_forward)(x, params))
    assert out.shape == (2, 3, 16, 16), out.shape
    assert bool(jnp.all(jnp.isfinite(out)))

    # tolerance check vs a pure-JAX f32 reference (Pallas path uses bf16
    # activations/weights, so allow a few percent of the output dynamic range)
    ref = jax.block_until_ready(jax.jit(unet_reference)(x, params))
    err = float(jnp.max(jnp.abs(out - ref)))
    scale = float(jnp.max(jnp.abs(ref))) + 1e-6
    assert err <= 0.1 * scale, (err, scale)
    print("KERNEL_OK")
</pallas_src>

<mosaic_0001>
module attributes {stable_mosaic.version = 11 : i64} {
  func.func @_conv_pool_only_kernel(%arg0: i32, %arg1: memref<1x256x128xbf16, #tpu.memory_space<vmem>>, %arg2: memref<128x128xbf16, #tpu.memory_space<vmem>>, %arg3: memref<1x128xf32, #tpu.memory_space<vmem>>, %arg4: memref<1x8x8x128xbf16, #tpu.memory_space<vmem>>) attributes {dimension_semantics = [#tpu.dimension_semantics<parallel>], iteration_bounds = array<i64: 2>, scalar_prefetch = 0 : i64, scratch_operands = 0 : i64, tpu.core_type = #tpu.core_type<tc>, window_params = [{transform_indices = @transform_0, window_bounds = array<i64: 1, 256, 128>}, {pipeline_mode = #tpu.pipeline_mode<synchronous>, transform_indices = @transform_1, window_bounds = array<i64: 128, 128>}, {pipeline_mode = #tpu.pipeline_mode<synchronous>, transform_indices = @transform_2, window_bounds = array<i64: 1, 128>}, {transform_indices = @transform_3, window_bounds = array<i64: 1, 8, 8, 128>}]} {
    %c0 = arith.constant 0 : index
    %c0_0 = arith.constant 0 : index
    %c0_1 = arith.constant 0 : index
    %0 = vector.load %arg1[%c0, %c0_0, %c0_1] : memref<1x256x128xbf16, #tpu.memory_space<vmem>>, vector<1x256x128xbf16>
    %1 = vector.shape_cast %0 : vector<1x256x128xbf16> to vector<256x128xbf16>
    %c0_2 = arith.constant 0 : index
    %c0_3 = arith.constant 0 : index
    %2 = vector.load %arg2[%c0_2, %c0_3] : memref<128x128xbf16, #tpu.memory_space<vmem>>, vector<128x128xbf16>
    %cst = arith.constant dense<0.000000e+00> : vector<256x128xf32>
    %3 = tpu.matmul %1, %2, %cst {dimension_numbers = #tpu.dot_dimension_numbers<[1], [0], [0], [1], [0, 0, 1, 1], [], []>} : vector<256x128xbf16>, vector<128x128xbf16>, vector<256x128xf32> -> vector<256x128xf32>
    %c0_4 = arith.constant 0 : index
    %c0_5 = arith.constant 0 : index
    %4 = vector.load %arg3[%c0_4, %c0_5] : memref<1x128xf32, #tpu.memory_space<vmem>>, vector<1x128xf32>
    %5 = vector.broadcast %4 : vector<1x128xf32> to vector<256x128xf32>
    %6 = arith.addf %3, %5 : vector<256x128xf32>
    %cst_6 = arith.constant 0.000000e+00 : f32
    %7 = vector.broadcast %cst_6 : f32 to vector<256x128xf32>
    %8 = arith.maximumf %6, %7 : vector<256x128xf32>
    %9 = vector.shape_cast %8 : vector<256x128xf32> to vector<16x16x128xf32>
    %10 = vector.shape_cast %9 : vector<16x16x128xf32> to vector<8x2x8x2x128xf32>
    %11 = vector.extract_strided_slice %10 {offsets = [0, 0, 0, 0, 0], sizes = [8, 1, 8, 2, 128], strides = [1, 1, 1, 1, 1]} : vector<8x2x8x2x128xf32> to vector<8x1x8x2x128xf32>
    %12 = vector.shape_cast %11 : vector<8x1x8x2x128xf32> to vector<8x8x2x128xf32>
    %13 = vector.extract_strided_slice %10 {offsets = [0, 1, 0, 0, 0], sizes = [8, 1, 8, 2, 128], strides = [1, 1, 1, 1, 1]} : vector<8x2x8x2x128xf32> to vector<8x1x8x2x128xf32>
    %14 = vector.shape_cast %13 : vector<8x1x8x2x128xf32> to vector<8x8x2x128xf32>
    %15 = arith.maximumf %12, %14 : vector<8x8x2x128xf32>
    %16 = vector.extract_strided_slice %15 {offsets = [0, 0, 0, 0], sizes = [8, 8, 1, 128], strides = [1, 1, 1, 1]} : vector<8x8x2x128xf32> to vector<8x8x1x128xf32>
    %17 = vector.shape_cast %16 : vector<8x8x1x128xf32> to vector<8x8x128xf32>
    %18 = vector.extract_strided_slice %15 {offsets = [0, 0, 1, 0], sizes = [8, 8, 1, 128], strides = [1, 1, 1, 1]} : vector<8x8x2x128xf32> to vector<8x8x1x128xf32>
    %19 = vector.shape_cast %18 : vector<8x8x1x128xf32> to vector<8x8x128xf32>
    %20 = arith.maximumf %17, %19 : vector<8x8x128xf32>
    %21 = arith.truncf %20 : vector<8x8x128xf32> to vector<8x8x128xbf16>
    %c0_7 = arith.constant 0 : index
    %c0_8 = arith.constant 0 : index
    %c0_9 = arith.constant 0 : index
    %c0_10 = arith.constant 0 : index
    %22 = vector.load %arg4[%c0_7, %c0_8, %c0_9, %c0_10] : memref<1x8x8x128xbf16, #tpu.memory_space<vmem>>, vector<1x8x8x128xbf16>
    %23 = vector.shape_cast %22 : vector<1x8x8x128xbf16> to vector<8x8x128xbf16>
    %24 = vector.shape_cast %21 : vector<8x8x128xbf16> to vector<1x8x8x128xbf16>
    tpu.vector_store %arg4[%c0_7, %c0_8, %c0_9, %c0_10], %24 {strides = array<i32>} : memref<1x8x8x128xbf16, #tpu.memory_space<vmem>>, vector<1x8x8x128xbf16>,
    return
  }
  func.func @transform_0(%arg0: i32) -> (i32, i32, i32) {
    %c0_i32 = arith.constant 0 : i32
    %c0_i32_0 = arith.constant 0 : i32
    %c0_i32_1 = arith.constant 0 : i32
    return %arg0, %c0_i32, %c0_i32_0 : i32, i32, i32
  }
  func.func @transform_1(%arg0: i32) -> (i32, i32) {
    %c0_i32 = arith.constant 0 : i32
    %c0_i32_0 = arith.constant 0 : i32
    %c0_i32_1 = arith.constant 0 : i32
    return %c0_i32, %c0_i32_0 : i32, i32
  }
  func.func @transform_2(%arg0: i32) -> (i32, i32) {
    %c0_i32 = arith.constant 0 : i32
    %c0_i32_0 = arith.constant 0 : i32
    %c0_i32_1 = arith.constant 0 : i32
    return %c0_i32, %c0_i32_0 : i32, i32
  }
  func.func @transform_3(%arg0: i32) -> (i32, i32, i32, i32) {
    %c0_i32 = arith.constant 0 : i32
    %c0_i32_0 = arith.constant 0 : i32
    %c0_i32_1 = arith.constant 0 : i32
    %c0_i32_2 = arith.constant 0 : i32
    return %arg0, %c0_i32, %c0_i32_0, %c0_i32_1 : i32, i32, i32, i32
  }
}

module attributes {stable_mosaic.version = 11 : i64} {
  func.func @_conv_skip_pool_kernel(%arg0: i32, %arg1: memref<1x80x384xbf16, #tpu.memory_space<vmem>>, %arg2: memref<3x384x128xbf16, #tpu.memory_space<vmem>>, %arg3: memref<1x128xf32, #tpu.memory_space<vmem>>, %arg4: memref<1x8x8x128xbf16, #tpu.memory_space<vmem>>, %arg5: memref<1x4x4x128xbf16, #tpu.memory_space<vmem>>) attributes {dimension_semantics = [#tpu.dimension_semantics<parallel>], iteration_bounds = array<i64: 2>, scalar_prefetch = 0 : i64, scratch_operands = 0 : i64, tpu.core_type = #tpu.core_type<tc>, window_params = [{transform_indices = @transform_0, window_bounds = array<i64: 1, 80, 384>}, {pipeline_mode = #tpu.pipeline_mode<synchronous>, transform_indices = @transform_1, window_bounds = array<i64: 3, 384, 128>}, {pipeline_mode = #tpu.pipeline_mode<synchronous>, transform_indices = @transform_2, window_bounds = array<i64: 1, 128>}, {transform_indices = @transform_3, window_bounds = array<i64: 1, 8, 8, 128>}, {transform_indices = @transform_4, window_bounds = array<i64: 1, 4, 4, 128>}]} {
    %cst = arith.constant 0.000000e+00 : f32
    %0 = vector.broadcast %cst : f32 to vector<64x128xf32>
    %c0 = arith.constant 0 : index
    %c0_0 = arith.constant 0 : index
    %c0_1 = arith.constant 0 : index
    %1 = vector.load %arg1[%c0, %c0_0, %c0_1] : memref<1x80x384xbf16, #tpu.memory_space<vmem>>, vector<1x64x384xbf16>
    %2 = vector.shape_cast %1 : vector<1x64x384xbf16> to vector<64x384xbf16>
    %c0_2 = arith.constant 0 : index
    %c0_3 = arith.constant 0 : index
    %c0_4 = arith.constant 0 : index
    %3 = vector.load %arg2[%c0_2, %c0_3, %c0_4] : memref<3x384x128xbf16, #tpu.memory_space<vmem>>, vector<1x384x128xbf16>
    %4 = vector.shape_cast %3 : vector<1x384x128xbf16> to vector<384x128xbf16>
    %cst_5 = arith.constant dense<0.000000e+00> : vector<64x128xf32>
    %5 = tpu.matmul %2, %4, %cst_5 {dimension_numbers = #tpu.dot_dimension_numbers<[1], [0], [0], [1], [0, 0, 1, 1], [], []>} : vector<64x384xbf16>, vector<384x128xbf16>, vector<64x128xf32> -> vector<64x128xf32>
    %6 = arith.addf %0, %5 : vector<64x128xf32>
    %c0_6 = arith.constant 0 : index
    %c8 = arith.constant 8 : index
    %c0_7 = arith.constant 0 : index
    %7 = vector.load %arg1[%c0_6, %c8, %c0_7] : memref<1x80x384xbf16, #tpu.memory_space<vmem>>, vector<1x64x384xbf16>
    %8 = vector.shape_cast %7 : vector<1x64x384xbf16> to vector<64x384xbf16>
    %c1 = arith.constant 1 : index
    %c0_8 = arith.constant 0 : index
    %c0_9 = arith.constant 0 : index
    %9 = vector.load %arg2[%c1, %c0_8, %c0_9] : memref<3x384x128xbf16, #tpu.memory_space<vmem>>, vector<1x384x128xbf16>
    %10 = vector.shape_cast %9 : vector<1x384x128xbf16> to vector<384x128xbf16>
    %cst_10 = arith.constant dense<0.000000e+00> : vector<64x128xf32>
    %11 = tpu.matmul %8, %10, %cst_10 {dimension_numbers = #tpu.dot_dimension_numbers<[1], [0], [0], [1], [0, 0, 1, 1], [], []>} : vector<64x384xbf16>, vector<384x128xbf16>, vector<64x128xf32> -> vector<64x128xf32>
    %12 = arith.addf %6, %11 : vector<64x128xf32>
    %c0_11 = arith.constant 0 : index
    %c16 = arith.constant 16 : index
    %c0_12 = arith.constant 0 : index
    %13 = vector.load %arg1[%c0_11, %c16, %c0_12] : memref<1x80x384xbf16, #tpu.memory_space<vmem>>, vector<1x64x384xbf16>
    %14 = vector.shape_cast %13 : vector<1x64x384xbf16> to vector<64x384xbf16>
    %c2 = arith.constant 2 : index
    %c0_13 = arith.constant 0 : index
    %c0_14 = arith.constant 0 : index
    %15 = vector.load %arg2[%c2, %c0_13, %c0_14] : memref<3x384x128xbf16, #tpu.memory_space<vmem>>, vector<1x384x128xbf16>
    %16 = vector.shape_cast %15 : vector<1x384x128xbf16> to vector<384x128xbf16>
    %cst_15 = arith.constant dense<0.000000e+00> : vector<64x128xf32>
    %17 = tpu.matmul %14, %16, %cst_15 {dimension_numbers = #tpu.dot_dimension_numbers<[1], [0], [0], [1], [0, 0, 1, 1], [], []>} : vector<64x384xbf16>, vector<384x128xbf16>, vector<64x128xf32> -> vector<64x128xf32>
    %18 = arith.addf %12, %17 : vector<64x128xf32>
    %c0_16 = arith.constant 0 : index
    %c0_17 = arith.constant 0 : index
    %19 = vector.load %arg3[%c0_16, %c0_17] : memref<1x128xf32, #tpu.memory_space<vmem>>, vector<1x128xf32>
    %20 = vector.broadcast %19 : vector<1x128xf32> to vector<64x128xf32>
    %21 = arith.addf %18, %20 : vector<64x128xf32>
    %cst_18 = arith.constant 0.000000e+00 : f32
    %22 = vector.broadcast %cst_18 : f32 to vector<64x128xf32>
    %23 = arith.maximumf %21, %22 : vector<64x128xf32>
    %24 = vector.shape_cast %23 : vector<64x128xf32> to vector<8x8x128xf32>
    %25 = arith.truncf %24 : vector<8x8x128xf32> to vector<8x8x128xbf16>
    %c0_19 = arith.constant 0 : index
    %c0_20 = arith.constant 0 : index
    %c0_21 = arith.constant 0 : index
    %c0_22 = arith.constant 0 : index
    %26 = vector.load %arg4[%c0_19, %c0_20, %c0_21, %c0_22] : memref<1x8x8x128xbf16, #tpu.memory_space<vmem>>, vector<1x8x8x128xbf16>
    %27 = vector.shape_cast %26 : vector<1x8x8x128xbf16> to vector<8x8x128xbf16>
    %28 = vector.shape_cast %25 : vector<8x8x128xbf16> to vector<1x8x8x128xbf16>
    tpu.vector_store %arg4[%c0_19, %c0_20, %c0_21, %c0_22], %28 {strides = array<i32>} : memref<1x8x8x128xbf16, #tpu.memory_space<vmem>>, vector<1x8x8x128xbf16>,
    %29 = vector.shape_cast %24 : vector<8x8x128xf32> to vector<4x2x4x2x128xf32>
    %30 = vector.extract_strided_slice %29 {offsets = [0, 0, 0, 0, 0], sizes = [4, 1, 4, 2, 128], strides = [1, 1, 1, 1, 1]} : vector<4x2x4x2x128xf32> to vector<4x1x4x2x128xf32>
    %31 = vector.shape_cast %30 : vector<4x1x4x2x128xf32> to vector<4x4x2x128xf32>
    %32 = vector.extract_strided_slice %29 {offsets = [0, 1, 0, 0, 0], sizes = [4, 1, 4, 2, 128], strides = [1, 1, 1, 1, 1]} : vector<4x2x4x2x128xf32> to vector<4x1x4x2x128xf32>
    %33 = vector.shape_cast %32 : vector<4x1x4x2x128xf32> to vector<4x4x2x128xf32>
    %34 = arith.maximumf %31, %33 : vector<4x4x2x128xf32>
    %35 = vector.extract_strided_slice %34 {offsets = [0, 0, 0, 0], sizes = [4, 4, 1, 128], strides = [1, 1, 1, 1]} : vector<4x4x2x128xf32> to vector<4x4x1x128xf32>
    %36 = vector.shape_cast %35 : vector<4x4x1x128xf32> to vector<4x4x128xf32>
    %37 = vector.extract_strided_slice %34 {offsets = [0, 0, 1, 0], sizes = [4, 4, 1, 128], strides = [1, 1, 1, 1]} : vector<4x4x2x128xf32> to vector<4x4x1x128xf32>
    %38 = vector.shape_cast %37 : vector<4x4x1x128xf32> to vector<4x4x128xf32>
    %39 = arith.maximumf %36, %38 : vector<4x4x128xf32>
    %40 = arith.truncf %39 : vector<4x4x128xf32> to vector<4x4x128xbf16>
    %c0_23 = arith.constant 0 : index
    %c0_24 = arith.constant 0 : index
    %c0_25 = arith.constant 0 : index
    %c0_26 = arith.constant 0 : index
    %41 = vector.load %arg5[%c0_23, %c0_24, %c0_25, %c0_26] : memref<1x4x4x128xbf16, #tpu.memory_space<vmem>>, vector<1x4x4x128xbf16>
    %42 = vector.shape_cast %41 : vector<1x4x4x128xbf16> to vector<4x4x128xbf16>
    %43 = vector.shape_cast %40 : vector<4x4x128xbf16> to vector<1x4x4x128xbf16>
    tpu.vector_store %arg5[%c0_23, %c0_24, %c0_25, %c0_26], %43 {strides = array<i32>} : memref<1x4x4x128xbf16, #tpu.memory_space<vmem>>, vector<1x4x4x128xbf16>,
    return
  }
  func.func @transform_0(%arg0: i32) -> (i32, i32, i32) {
    %c0_i32 = arith.constant 0 : i32
    %c0_i32_0 = arith.constant 0 : i32
    %c0_i32_1 = arith.constant 0 : i32
    return %arg0, %c0_i32, %c0_i32_0 : i32, i32, i32
  }
  func.func @transform_1(%arg0: i32) -> (i32, i32, i32) {
    %c0_i32 = arith.constant 0 : i32
    %c0_i32_0 = arith.constant 0 : i32
    %c0_i32_1 = arith.constant 0 : i32
    %c0_i32_2 = arith.constant 0 : i32
    return %c0_i32, %c0_i32_0, %c0_i32_1 : i32, i32, i32
  }
  func.func @transform_2(%arg0: i32) -> (i32, i32) {
    %c0_i32 = arith.constant 0 : i32
    %c0_i32_0 = arith.constant 0 : i32
    %c0_i32_1 = arith.constant 0 : i32
    return %c0_i32, %c0_i32_0 : i32, i32
  }
  func.func @transform_3(%arg0: i32) -> (i32, i32, i32, i32) {
    %c0_i32 = arith.constant 0 : i32
    %c0_i32_0 = arith.constant 0 : i32
    %c0_i32_1 = arith.constant 0 : i32
    %c0_i32_2 = arith.constant 0 : i32
    return %arg0, %c0_i32, %c0_i32_0, %c0_i32_1 : i32, i32, i32, i32
  }
  func.func @transform_4(%arg0: i32) -> (i32, i32, i32, i32) {
    %c0_i32 = arith.constant 0 : i32
    %c0_i32_0 = arith.constant 0 : i32
    %c0_i32_1 = arith.constant 0 : i32
    %c0_i32_2 = arith.constant 0 : i32
    return %arg0, %c0_i32, %c0_i32_0, %c0_i32_1 : i32, i32, i32, i32
  }
}

module attributes {stable_mosaic.version = 11 : i64} {
  func.func @_mm2_kernel(%arg0: i32, %arg1: memref<32x1152xbf16, #tpu.memory_space<vmem>>, %arg2: memref<1152x256xbf16, #tpu.memory_space<vmem>>, %arg3: memref<1x256xf32, #tpu.memory_space<vmem>>, %arg4: memref<256x512xbf16, #tpu.memory_space<vmem>>, %arg5: memref<1x512xf32, #tpu.memory_space<vmem>>, %arg6: memref<32x512xbf16, #tpu.memory_space<vmem>>) attributes {dimension_semantics = [#tpu.dimension_semantics<arbitrary>], iteration_bounds = array<i64: 1>, scalar_prefetch = 0 : i64, scratch_operands = 0 : i64, tpu.core_type = #tpu.core_type<tc>, window_params = [{transform_indices = @transform_0, window_bounds = array<i64: 32, 1152>}, {pipeline_mode = #tpu.pipeline_mode<synchronous>, transform_indices = @transform_1, window_bounds = array<i64: 1152, 256>}, {pipeline_mode = #tpu.pipeline_mode<synchronous>, transform_indices = @transform_2, window_bounds = array<i64: 1, 256>}, {pipeline_mode = #tpu.pipeline_mode<synchronous>, transform_indices = @transform_3, window_bounds = array<i64: 256, 512>}, {pipeline_mode = #tpu.pipeline_mode<synchronous>, transform_indices = @transform_4, window_bounds = array<i64: 1, 512>}, {transform_indices = @transform_5, window_bounds = array<i64: 32, 512>}]} {
    %c0 = arith.constant 0 : index
    %c0_0 = arith.constant 0 : index
    %0 = vector.load %arg1[%c0, %c0_0] : memref<32x1152xbf16, #tpu.memory_space<vmem>>, vector<32x1152xbf16>
    %c0_1 = arith.constant 0 : index
    %c0_2 = arith.constant 0 : index
    %1 = vector.load %arg2[%c0_1, %c0_2] : memref<1152x256xbf16, #tpu.memory_space<vmem>>, vector<1152x256xbf16>
    %cst = arith.constant dense<0.000000e+00> : vector<32x256xf32>
    %2 = tpu.matmul %0, %1, %cst {dimension_numbers = #tpu.dot_dimension_numbers<[1], [0], [0], [1], [0, 0, 1, 1], [], []>} : vector<32x1152xbf16>, vector<1152x256xbf16>, vector<32x256xf32> -> vector<32x256xf32>
    %c0_3 = arith.constant 0 : index
    %c0_4 = arith.constant 0 : index
    %3 = vector.load %arg3[%c0_3, %c0_4] : memref<1x256xf32, #tpu.memory_space<vmem>>, vector<1x256xf32>
    %4 = vector.broadcast %3 : vector<1x256xf32> to vector<32x256xf32>
    %5 = arith.addf %2, %4 : vector<32x256xf32>
    %cst_5 = arith.constant 0.000000e+00 : f32
    %6 = vector.broadcast %cst_5 : f32 to vector<32x256xf32>
    %7 = arith.maximumf %5, %6 : vector<32x256xf32>
    %8 = arith.truncf %7 : vector<32x256xf32> to vector<32x256xbf16>
    %c0_6 = arith.constant 0 : index
    %c0_7 = arith.constant 0 : index
    %9 = vector.load %arg4[%c0_6, %c0_7] : memref<256x512xbf16, #tpu.memory_space<vmem>>, vector<256x512xbf16>
    %cst_8 = arith.constant dense<0.000000e+00> : vector<32x512xf32>
    %10 = tpu.matmul %8, %9, %cst_8 {dimension_numbers = #tpu.dot_dimension_numbers<[1], [0], [0], [1], [0, 0, 1, 1], [], []>} : vector<32x256xbf16>, vector<256x512xbf16>, vector<32x512xf32> -> vector<32x512xf32>
    %c0_9 = arith.constant 0 : index
    %c0_10 = arith.constant 0 : index
    %11 = vector.load %arg5[%c0_9, %c0_10] : memref<1x512xf32, #tpu.memory_space<vmem>>, vector<1x512xf32>
    %12 = vector.broadcast %11 : vector<1x512xf32> to vector<32x512xf32>
    %13 = arith.addf %10, %12 : vector<32x512xf32>
    %14 = arith.truncf %13 : vector<32x512xf32> to vector<32x512xbf16>
    %c0_11 = arith.constant 0 : index
    %c0_12 = arith.constant 0 : index
    %15 = vector.load %arg6[%c0_11, %c0_12] : memref<32x512xbf16, #tpu.memory_space<vmem>>, vector<32x512xbf16>
    tpu.vector_store %arg6[%c0_11, %c0_12], %14 {strides = array<i32>} : memref<32x512xbf16, #tpu.memory_space<vmem>>, vector<32x512xbf16>,
    return
  }
  func.func @transform_0(%arg0: i32) -> (i32, i32) {
    %c0_i32 = arith.constant 0 : i32
    %c0_i32_0 = arith.constant 0 : i32
    return %arg0, %c0_i32 : i32, i32
  }
  func.func @transform_1(%arg0: i32) -> (i32, i32) {
    %c0_i32 = arith.constant 0 : i32
    %c0_i32_0 = arith.constant 0 : i32
    %c0_i32_1 = arith.constant 0 : i32
    return %c0_i32, %c0_i32_0 : i32, i32
  }
  func.func @transform_2(%arg0: i32) -> (i32, i32) {
    %c0_i32 = arith.constant 0 : i32
    %c0_i32_0 = arith.constant 0 : i32
    %c0_i32_1 = arith.constant 0 : i32
    return %c0_i32, %c0_i32_0 : i32, i32
  }
  func.func @transform_3(%arg0: i32) -> (i32, i32) {
    %c0_i32 = arith.constant 0 : i32
    %c0_i32_0 = arith.constant 0 : i32
    %c0_i32_1 = arith.constant 0 : i32
    return %c0_i32, %c0_i32_0 : i32, i32
  }
  func.func @transform_4(%arg0: i32) -> (i32, i32) {
    %c0_i32 = arith.constant 0 : i32
    %c0_i32_0 = arith.constant 0 : i32
    %c0_i32_1 = arith.constant 0 : i32
    return %c0_i32, %c0_i32_0 : i32, i32
  }
  func.func @transform_5(%arg0: i32) -> (i32, i32) {
    %c0_i32 = arith.constant 0 : i32
    %c0_i32_0 = arith.constant 0 : i32
    return %arg0, %c0_i32 : i32, i32
  }
}

module attributes {stable_mosaic.version = 11 : i64} {
  func.func @_mm2_kernel(%arg0: i32, %arg1: memref<128x384xbf16, #tpu.memory_space<vmem>>, %arg2: memref<384x256xbf16, #tpu.memory_space<vmem>>, %arg3: memref<1x256xf32, #tpu.memory_space<vmem>>, %arg4: memref<256x128xbf16, #tpu.memory_space<vmem>>, %arg5: memref<1x128xf32, #tpu.memory_space<vmem>>, %arg6: memref<128x128xf32, #tpu.memory_space<vmem>>) attributes {dimension_semantics = [#tpu.dimension_semantics<arbitrary>], iteration_bounds = array<i64: 1>, scalar_prefetch = 0 : i64, scratch_operands = 0 : i64, tpu.core_type = #tpu.core_type<tc>, window_params = [{transform_indices = @transform_0, window_bounds = array<i64: 128, 384>}, {pipeline_mode = #tpu.pipeline_mode<synchronous>, transform_indices = @transform_1, window_bounds = array<i64: 384, 256>}, {pipeline_mode = #tpu.pipeline_mode<synchronous>, transform_indices = @transform_2, window_bounds = array<i64: 1, 256>}, {pipeline_mode = #tpu.pipeline_mode<synchronous>, transform_indices = @transform_3, window_bounds = array<i64: 256, 128>}, {pipeline_mode = #tpu.pipeline_mode<synchronous>, transform_indices = @transform_4, window_bounds = array<i64: 1, 128>}, {transform_indices = @transform_5, window_bounds = array<i64: 128, 128>}]} {
    %c0 = arith.constant 0 : index
    %c0_0 = arith.constant 0 : index
    %0 = vector.load %arg1[%c0, %c0_0] : memref<128x384xbf16, #tpu.memory_space<vmem>>, vector<128x384xbf16>
    %c0_1 = arith.constant 0 : index
    %c0_2 = arith.constant 0 : index
    %1 = vector.load %arg2[%c0_1, %c0_2] : memref<384x256xbf16, #tpu.memory_space<vmem>>, vector<384x256xbf16>
    %cst = arith.constant dense<0.000000e+00> : vector<128x256xf32>
    %2 = tpu.matmul %0, %1, %cst {dimension_numbers = #tpu.dot_dimension_numbers<[1], [0], [0], [1], [0, 0, 1, 1], [], []>} : vector<128x384xbf16>, vector<384x256xbf16>, vector<128x256xf32> -> vector<128x256xf32>
    %c0_3 = arith.constant 0 : index
    %c0_4 = arith.constant 0 : index
    %3 = vector.load %arg3[%c0_3, %c0_4] : memref<1x256xf32, #tpu.memory_space<vmem>>, vector<1x256xf32>
    %4 = vector.broadcast %3 : vector<1x256xf32> to vector<128x256xf32>
    %5 = arith.addf %2, %4 : vector<128x256xf32>
    %cst_5 = arith.constant 0.000000e+00 : f32
    %6 = vector.broadcast %cst_5 : f32 to vector<128x256xf32>
    %7 = arith.maximumf %5, %6 : vector<128x256xf32>
    %8 = arith.truncf %7 : vector<128x256xf32> to vector<128x256xbf16>
    %c0_6 = arith.constant 0 : index
    %c0_7 = arith.constant 0 : index
    %9 = vector.load %arg4[%c0_6, %c0_7] : memref<256x128xbf16, #tpu.memory_space<vmem>>, vector<256x128xbf16>
    %cst_8 = arith.constant dense<0.000000e+00> : vector<128x128xf32>
    %10 = tpu.matmul %8, %9, %cst_8 {dimension_numbers = #tpu.dot_dimension_numbers<[1], [0], [0], [1], [0, 0, 1, 1], [], []>} : vector<128x256xbf16>, vector<256x128xbf16>, vector<128x128xf32> -> vector<128x128xf32>
    %c0_9 = arith.constant 0 : index
    %c0_10 = arith.constant 0 : index
    %11 = vector.load %arg5[%c0_9, %c0_10] : memref<1x128xf32, #tpu.memory_space<vmem>>, vector<1x128xf32>
    %12 = vector.broadcast %11 : vector<1x128xf32> to vector<128x128xf32>
    %13 = arith.addf %10, %12 : vector<128x128xf32>
    %c0_11 = arith.constant 0 : index
    %c0_12 = arith.constant 0 : index
    %14 = vector.load %arg6[%c0_11, %c0_12] : memref<128x128xf32, #tpu.memory_space<vmem>>, vector<128x128xf32>
    tpu.vector_store %arg6[%c0_11, %c0_12], %13 {strides = array<i32>} : memref<128x128xf32, #tpu.memory_space<vmem>>, vector<128x128xf32>,
    return
  }
  func.func @transform_0(%arg0: i32) -> (i32, i32) {
    %c0_i32 = arith.constant 0 : i32
    %c0_i32_0 = arith.constant 0 : i32
    return %arg0, %c0_i32 : i32, i32
  }
  func.func @transform_1(%arg0: i32) -> (i32, i32) {
    %c0_i32 = arith.constant 0 : i32
    %c0_i32_0 = arith.constant 0 : i32
    %c0_i32_1 = arith.constant 0 : i32
    return %c0_i32, %c0_i32_0 : i32, i32
  }
  func.func @transform_2(%arg0: i32) -> (i32, i32) {
    %c0_i32 = arith.constant 0 : i32
    %c0_i32_0 = arith.constant 0 : i32
    %c0_i32_1 = arith.constant 0 : i32
    return %c0_i32, %c0_i32_0 : i32, i32
  }
  func.func @transform_3(%arg0: i32) -> (i32, i32) {
    %c0_i32 = arith.constant 0 : i32
    %c0_i32_0 = arith.constant 0 : i32
    %c0_i32_1 = arith.constant 0 : i32
    return %c0_i32, %c0_i32_0 : i32, i32
  }
  func.func @transform_4(%arg0: i32) -> (i32, i32) {
    %c0_i32 = arith.constant 0 : i32
    %c0_i32_0 = arith.constant 0 : i32
    %c0_i32_1 = arith.constant 0 : i32
    return %c0_i32, %c0_i32_0 : i32, i32
  }
  func.func @transform_5(%arg0: i32) -> (i32, i32) {
    %c0_i32 = arith.constant 0 : i32
    %c0_i32_0 = arith.constant 0 : i32
    return %arg0, %c0_i32 : i32, i32
  }
}

</mosaic_0001>

<llo_original>
// kernel: unet_forward.4
$region0: #{unet_forward.4}
  #allocation0 [shape = 'u32[]', space=smem, size = 0x4, offset = 0x4, fixed_abs, tag = 'smem constant byte address 0x4 - core index']
  #allocation1 [shape = 'u32[144,128]{1,0:T(1,128)}', space=vmem, size = 0x12000, scoped, tag = 'internal scratch']
  %s0 = inlined_call_operand.vmem [shape: bf16[2,256,128], index: 0, kind: input, shape index: {}]
  %s1 = inlined_call_operand.vmem [shape: bf16[128,128], index: 1, kind: input, shape index: {}]
  %s2 = inlined_call_operand.vmem [shape: f32[1,128], index: 2, kind: input, shape index: {}]
  %s3 = inlined_call_operand.vmem [shape: bf16[2,8,8,128], index: 3, kind: output, shape index: {}]
  %s4 = sld [smem:[#allocation0]]
  $region45: #{unet_forward.4} parent=0
    _
  %s6 = ssub.s32 1, %s4
  %s7 = scalar_select 0, %s6, %s4
  loop: start=0, step=1, limit=4
  $region2: #{unet_forward.4} parent=0 // loop_pre_header
    _
  $region3: #{unet_forward.4} parent=0 // loop_header
    %s9 = sphi 0, %s13
    %p10 = scmp.ge.s32.totalorder %s9, 4
    %s19 = sphi 0, %s21
    %s22 = sphi 0, %s19
    %s23 = sphi 0, %s22
    %s39 = sphi 0, %s23
    %s43 = sphi 0, %s43
    %s45 = sphi 0, %s43
    %s46 = sphi 0, %s45
    %s60 = sphi 0, %s46
    %s64 = sphi 0, %s64
    %s66 = sphi 0, %s64
    %s67 = sphi 0, %s66
    %s81 = sphi 0, %s67
    %s87 = sphi 0, %s89
    %s90 = sphi 0, %s87
    %s91 = sphi 0, %s90
    %s107 = sphi 0, %s91
  $region4: #{unet_forward.4} parent=0 // loop_header_branch
    %12 = sbr.rel (%p10) target = $region8
  $region5: #{unet_forward.4} parent=0 // loop_body
    %s14 = ssub.s32 %s9, 1
    %s15 = ssub.s32 %s9, 2
    %s16 = sadd.s32 %s9, 1
    %s17 = ssub.s32 %s9, %s16
    %p18 = scmp.eq.s32.totalorder %s17, 0
    %s20 = sadd.s32 %s19, 1
    %s21 = scalar_select %p18, %s19, %s20
    %p24 = pneg %p18
    %p25 = scmp.eq.s32.totalorder %s9, 1
    %p26 = por %p24, %p25
    %p27 = scmp.ne.s32.totalorder %s19, %s22
    %p28 = scmp.eq.s32.totalorder %s9, 0
    %p29 = por %p27, %p28
    %p30 = scmp.ne.s32.totalorder %s19, %s22
    %p31 = scmp.eq.s32.totalorder %s14, 1
    %p32 = por %p30, %p31
    %p33 = scmp.ne.s32.totalorder %s22, %s23
    %p34 = scmp.eq.s32.totalorder %s14, 0
    %p35 = por %p33, %p34
    %p36 = scmp.ne.s32.totalorder %s22, %s23
    %p37 = scmp.eq.s32.totalorder %s15, 1
    %p38 = por %p36, %p37
    %p40 = scmp.ne.s32.totalorder %s23, %s39
    %p41 = scmp.eq.s32.totalorder %s15, 0
    %p42 = por %p40, %p41
    %s44 = sadd.s32 %s43, 1
    %p47 = scmp.eq.s32.totalorder %s9, 1
    %p48 = scmp.ne.s32.totalorder %s43, %s45
    %p49 = scmp.eq.s32.totalorder %s9, 0
    %p50 = por %p48, %p49
    %p51 = scmp.ne.s32.totalorder %s43, %s45
    %p52 = scmp.eq.s32.totalorder %s14, 1
    %p53 = por %p51, %p52
    %p54 = scmp.ne.s32.totalorder %s45, %s46
    %p55 = scmp.eq.s32.totalorder %s14, 0
    %p56 = por %p54, %p55
    %p57 = scmp.ne.s32.totalorder %s45, %s46
    %p58 = scmp.eq.s32.totalorder %s15, 1
    %p59 = por %p57, %p58
    %p61 = scmp.ne.s32.totalorder %s46, %s60
    %p62 = scmp.eq.s32.totalorder %s15, 0
    %p63 = por %p61, %p62
    %s65 = sadd.s32 %s64, 1
    %p68 = scmp.eq.s32.totalorder %s9, 1
    %p69 = scmp.ne.s32.totalorder %s64, %s66
    %p70 = scmp.eq.s32.totalorder %s9, 0
    %p71 = por %p69, %p70
    %p72 = scmp.ne.s32.totalorder %s64, %s66
    %p73 = scmp.eq.s32.totalorder %s14, 1
    %p74 = por %p72, %p73
    %p75 = scmp.ne.s32.totalorder %s66, %s67
    %p76 = scmp.eq.s32.totalorder %s14, 0
    %p77 = por %p75, %p76
    %p78 = scmp.ne.s32.totalorder %s66, %s67
    %p79 = scmp.eq.s32.totalorder %s15, 1
    %p80 = por %p78, %p79
    %p82 = scmp.ne.s32.totalorder %s67, %s81
    %p83 = scmp.eq.s32.totalorder %s15, 0
    %p84 = por %p82, %p83
    %s85 = ssub.s32 %s9, %s16
    %p86 = scmp.eq.s32.totalorder %s85, 0
    %s88 = sadd.s32 %s87, 1
    %s89 = scalar_select %p86, %s87, %s88
    %p92 = pneg %p86
    %p93 = scmp.eq.s32.totalorder %s9, 1
    %p94 = por %p92, %p93
    %p95 = scmp.ne.s32.totalorder %s87, %s90
    %p96 = scmp.eq.s32.totalorder %s9, 0
    %p97 = por %p95, %p96
    %p98 = scmp.ne.s32.totalorder %s87, %s90
    %p99 = scmp.eq.s32.totalorder %s14, 1
    %p100 = por %p98, %p99
    %p101 = scmp.ne.s32.totalorder %s90, %s91
    %p102 = scmp.eq.s32.totalorder %s14, 0
    %p103 = por %p101, %p102
    %p104 = scmp.ne.s32.totalorder %s90, %s91
    %p105 = scmp.eq.s32.totalorder %s15, 1
    %p106 = por %p104, %p105
    %p108 = scmp.ne.s32.totalorder %s91, %s107
    %p109 = scmp.eq.s32.totalorder %s15, 0
    %p110 = por %p108, %p109
    %p111 = scmp.le.s32.totalorder 1, %s9
    %p112 = scmp.lt.s32.totalorder %s9, 3
    %p113 = pnand %p111, %p112
    %p114 = pneg %p113
    // Predicated region
    $region9: #{unet_forward.4} parent=5 // pred_check
      _
    $region10: #{unet_forward.4} parent=5 // pred_check_branch
      %116 = sbr.rel (%p113) target = $region12
    $region11: #{unet_forward.4} parent=5 // pred_region
      %s117 = ssub.s32 %s9, 1
      // Predicated region
      $region13: #{unet_forward.4} parent=11 // pred_check
        %p118 = pneg %p56
      $region14: #{unet_forward.4} parent=11 // pred_check_branch
        %120 = sbr.rel (%p118) target = $region16
      $region15: #{unet_forward.4} parent=11 // pred_region
        _
      $region16: #{unet_forward.4} parent=11 // pred_fallthru
        _
      // Predicated region
      $region17: #{unet_forward.4} parent=11 // pred_check
        %p121 = pneg %p77
      $region18: #{unet_forward.4} parent=11 // pred_check_branch
        %123 = sbr.rel (%p121) target = $region20
      $region19: #{unet_forward.4} parent=11 // pred_region
        _
      $region20: #{unet_forward.4} parent=11 // pred_fallthru
        _
    $region12: #{unet_forward.4} parent=5 // pred_fallthru
      _
    %p124 = scmp.lt.s32.totalorder %s9, 2
    // Predicated region
    $region21: #{unet_forward.4} parent=5 // pred_check
      %p125 = pneg %p124
    $region22: #{unet_forward.4} parent=5 // pred_check_branch
      %127 = sbr.rel (%p125) target = $region24
    $region23: #{unet_forward.4} parent=5 // pred_region
      // Predicated region
      $region25: #{unet_forward.4} parent=23 // pred_check
        %p128 = pneg %p29
      $region26: #{unet_forward.4} parent=23 // pred_check_branch
        %130 = sbr.rel (%p128) target = $region28
      $region27: #{unet_forward.4} parent=23 // pred_region
        %p131 = scmp.lt.s32.totalorder %s9, 1
        %s132 = scalar_select %p131, %s9, 1
        %s133 = smul.addr %s132, 32
        %s134 = smul.addr %s133, 4
        %s135 = scalar_lea.vmem %s0, %s134
      $region28: #{unet_forward.4} parent=23 // pred_fallthru
        _
    $region24: #{unet_forward.4} parent=5 // pred_fallthru
      _
    %p136 = scmp.le.s32.totalorder 1, %s9
    %p137 = scmp.lt.s32.totalorder %s9, 3
    %p138 = pnand %p136, %p137
    %p139 = pneg %p138
    // Predicated region
    $region29: #{unet_forward.4} parent=5 // pred_check
      _
    $region30: #{unet_forward.4} parent=5 // pred_check_branch
      %141 = sbr.rel (%p138) target = $region32
    $region31: #{unet_forward.4} parent=5 // pred_region
      %s142 = ssub.s32 %s9, 1
      %p143 = scmp.lt.s32.totalorder %s14, 1
      %s144 = scalar_select %p143, %s14, 1
      %s145 = smul.addr %s144, 32
      %s146 = smul.addr %s145, 4
      %s147 = scalar_lea.vmem %s0, %s146
      %p148 = pneg %p35
      %p149 = pneg %p32
      %p150 = pneg %p56
      %p151 = pneg %p53
      %p152 = pneg %p77
      %p153 = pneg %p74
      %p154 = pneg %p103
      %p155 = pneg %p100
      %p156 = scmp.lt.s32.totalorder %s14, 1
      %s157 = scalar_select %p156, %s14, 1
      %s158 = smul.addr %s157, 8
      %s159 = smul.addr %s158, 4
      %s160 = scalar_lea.vmem %s3, %s159
      %p161 = scmp.lt.s32.totalorder %s14, 1
      %s162 = scalar_select %p161, %s14, 1
      %s163 = smul.addr %s162, 32
      %s164 = smul.addr %s163, 4
      %s165 = scalar_lea.vmem %s0, %s164
      %p166 = scmp.lt.s32.totalorder %s14, 1
      %s167 = scalar_select %p166, %s14, 1
      %s168 = smul.addr %s167, 8
      %s169 = smul.addr %s168, 4
      %s170 = scalar_lea.vmem %s3, %s169
      %v172 = vld [vmem:[%s165] sm:$0xf]
      %v173 = vld [vmem:[%s165 + $0x4] sm:$0xf]
      %v174 = vld [vmem:[%s165 + $0x8] sm:$0xf]
      %v175 = vld [vmem:[%s165 + $0xc] sm:$0xf]
      %v176 = vld [vmem:[%s165 + $0x10] sm:$0xf]
      %v177 = vld [vmem:[%s165 + $0x14] sm:$0xf]
      %v178 = vld [vmem:[%s165 + $0x18] sm:$0xf]
      %v179 = vld [vmem:[%s165 + $0x1c] sm:$0xf]
      %v180 = vld [vmem:[%s165 + $0x20] sm:$0xf]
      %v181 = vld [vmem:[%s165 + $0x24] sm:$0xf]
      %v182 = vld [vmem:[%s165 + $0x28] sm:$0xf]
      %v183 = vld [vmem:[%s165 + $0x2c] sm:$0xf]
      %v184 = vld [vmem:[%s165 + $0x30] sm:$0xf]
      %v185 = vld [vmem:[%s165 + $0x34] sm:$0xf]
      %v186 = vld [vmem:[%s165 + $0x38] sm:$0xf]
      %v187 = vld [vmem:[%s165 + $0x3c] sm:$0xf]
      %v188 = vld [vmem:[%s165 + $0x40] sm:$0xf]
      %v189 = vld [vmem:[%s165 + $0x44] sm:$0xf]
      %v190 = vld [vmem:[%s165 + $0x48] sm:$0xf]
      %v191 = vld [vmem:[%s165 + $0x4c] sm:$0xf]
      %v192 = vld [vmem:[%s165 + $0x50] sm:$0xf]
      %v193 = vld [vmem:[%s165 + $0x54] sm:$0xf]
      %v194 = vld [vmem:[%s165 + $0x58] sm:$0xf]
      %v195 = vld [vmem:[%s165 + $0x5c] sm:$0xf]
      %v196 = vld [vmem:[%s165 + $0x60] sm:$0xf]
      %v197 = vld [vmem:[%s165 + $0x64] sm:$0xf]
      %v198 = vld [vmem:[%s165 + $0x68] sm:$0xf]
      %v199 = vld [vmem:[%s165 + $0x6c] sm:$0xf]
      %v200 = vld [vmem:[%s165 + $0x70] sm:$0xf]
      %v201 = vld [vmem:[%s165 + $0x74] sm:$0xf]
      %v202 = vld [vmem:[%s165 + $0x78] sm:$0xf]
      %v203 = vld [vmem:[%s165 + $0x7c] sm:$0xf]
      %v204 = vld [vmem:[%s1] sm:$0xf]
      %v205 = vld [vmem:[%s1 + $0x4] sm:$0xf]
      %v206 = vld [vmem:[%s1 + $0x8] sm:$0xf]
      %v207 = vld [vmem:[%s1 + $0xc] sm:$0xf]
      %v208 = vld [vmem:[%s1 + $0x10] sm:$0xf]
      %v209 = vld [vmem:[%s1 + $0x14] sm:$0xf]
      %v210 = vld [vmem:[%s1 + $0x18] sm:$0xf]
      %v211 = vld [vmem:[%s1 + $0x1c] sm:$0xf]
      %v212 = vld [vmem:[%s1 + $0x20] sm:$0xf]
      %v213 = vld [vmem:[%s1 + $0x24] sm:$0xf]
      %v214 = vld [vmem:[%s1 + $0x28] sm:$0xf]
      %v215 = vld [vmem:[%s1 + $0x2c] sm:$0xf]
      %v216 = vld [vmem:[%s1 + $0x30] sm:$0xf]
      %v217 = vld [vmem:[%s1 + $0x34] sm:$0xf]
      %v218 = vld [vmem:[%s1 + $0x38] sm:$0xf]
      %v219 = vld [vmem:[%s1 + $0x3c] sm:$0xf]
      %v220 = vld [vmem:[%s2] sm:$0x1]
      %v222 = vlaneseq
      %v223 = vshrl.u32 %v222, 7
      %v224 = vsub.s32 0, %v223
      %v225 = vrot.slane %v220, %v224
      %v259 = vunpack.c.l.b16 %v172
      %v260 = vunpack.c.l.b16 %v173
      %v261 = vunpack.c.l.b16 %v174
      %v262 = vunpack.c.l.b16 %v175
      %v263 = vunpack.c.l.b16 %v176
      %v264 = vunpack.c.l.b16 %v177
      %v265 = vunpack.c.l.b16 %v178
      %v266 = vunpack.c.l.b16 %v179
      %v267 = vunpack.c.l.b16 %v180
      %v268 = vunpack.c.l.b16 %v181
      %v269 = vunpack.c.l.b16 %v182
      %v270 = vunpack.c.l.b16 %v183
      %v271 = vunpack.c.l.b16 %v184
      %v272 = vunpack.c.l.b16 %v185
      %v273 = vunpack.c.l.b16 %v186
      %v274 = vunpack.c.l.b16 %v187
      %v275 = vunpack.c.l.b16 %v188
      %v276 = vunpack.c.l.b16 %v189
      %v277 = vunpack.c.l.b16 %v190
      %v278 = vunpack.c.l.b16 %v191
      %v279 = vunpack.c.l.b16 %v192
      %v280 = vunpack.c.l.b16 %v193
      %v281 = vunpack.c.l.b16 %v194
      %v282 = vunpack.c.l.b16 %v195
      %v283 = vunpack.c.l.b16 %v196
      %v284 = vunpack.c.l.b16 %v197
      %v285 = vunpack.c.l.b16 %v198
      %v286 = vunpack.c.l.b16 %v199
      %v287 = vunpack.c.l.b16 %v200
      %v288 = vunpack.c.l.b16 %v201
      %v289 = vunpack.c.l.b16 %v202
      %v290 = vunpack.c.l.b16 %v203
      %v291 = vpack.c.b16 %v260, %v259
      %v292 = vpack.c.b16 %v262, %v261
      %v293 = vpack.c.b16 %v264, %v263
      %v294 = vpack.c.b16 %v266, %v265
      %v295 = vpack.c.b16 %v268, %v267
      %v296 = vpack.c.b16 %v270, %v269
      %v297 = vpack.c.b16 %v272, %v271
      %v298 = vpack.c.b16 %v274, %v273
      %v299 = vpack.c.b16 %v276, %v275
      %v300 = vpack.c.b16 %v278, %v277
      %v301 = vpack.c.b16 %v280, %v279
      %v302 = vpack.c.b16 %v282, %v281
      %v303 = vpack.c.b16 %v284, %v283
      %v304 = vpack.c.b16 %v286, %v285
      %v305 = vpack.c.b16 %v288, %v287
      %v306 = vpack.c.b16 %v290, %v289
      %v339 = vunpack.c.l.b16 %v204
      %v340 = vunpack.c.l.b16 %v205
      %v341 = vunpack.c.l.b16 %v206
      %v342 = vunpack.c.l.b16 %v207
      %v343 = vunpack.c.l.b16 %v208
      %v344 = vunpack.c.l.b16 %v209
      %v345 = vunpack.c.l.b16 %v210
      %v346 = vunpack.c.l.b16 %v211
      %v347 = vunpack.c.l.b16 %v212
      %v348 = vunpack.c.l.b16 %v213
      %v349 = vunpack.c.l.b16 %v214
      %v350 = vunpack.c.l.b16 %v215
      %v351 = vunpack.c.l.b16 %v216
      %v352 = vunpack.c.l.b16 %v217
      %v353 = vunpack.c.l.b16 %v218
      %v354 = vunpack.c.l.b16 %v219
      %v355 = vpack.c.b16 %v340, %v339
      %v356 = vpack.c.b16 %v342, %v341
      %v357 = vpack.c.b16 %v344, %v343
      %v358 = vpack.c.b16 %v346, %v345
      %v359 = vpack.c.b16 %v348, %v347
      %v360 = vpack.c.b16 %v350, %v349
      %v361 = vpack.c.b16 %v352, %v351
      %v362 = vpack.c.b16 %v354, %v353
      %371 = vmatprep.subr.bf16.mxu0 0
      %372 = vmatpush1.bf16.msra.mxu0 %v362
      %373 = vmatprep.subr.bf16.mxu0 0
      %374 = vmatpush1.bf16.msra.mxu0 %v361
      %375 = vmatprep.subr.bf16.mxu0 0
      %376 = vmatpush1.bf16.msra.mxu0 %v360
      %377 = vmatprep.subr.bf16.mxu0 0
      %378 = vmatpush1.bf16.msra.mxu0 %v359
      %379 = vmatprep.subr.bf16.mxu0 0
      %380 = vmatpush1.bf16.msra.mxu0 %v358
      %381 = vmatprep.subr.bf16.mxu0 0
      %382 = vmatpush1.bf16.msra.mxu0 %v357
      %383 = vmatprep.subr.bf16.mxu0 0
      %384 = vmatpush1.bf16.msra.mxu0 %v356
      %385 = vmatprep.subr.bf16.mxu0 0
      %386 = vmatpush1.bf16.msra.mxu0 %v355
      %387 = vmatprep.subr.bf16.mxu0 0
      %388 = vmatpush2.bf16.msra.mxu0 0
      %389 = vmatprep.subr.bf16.mxu0 0
      %390 = vmatpush2.bf16.msra.mxu0 0
      %391 = vmatprep.subr.bf16.mxu0 0
      %392 = vmatpush2.bf16.msra.mxu0 0
      %393 = vmatprep.subr.bf16.mxu0 0
      %394 = vmatpush2.bf16.msra.mxu0 0
      %395 = vmatprep.subr.bf16.mxu0 0
      %396 = vmatpush2.bf16.msra.mxu0 0
      %397 = vmatprep.subr.bf16.mxu0 0
      %398 = vmatpush2.bf16.msra.mxu0 0
      %399 = vmatprep.subr.bf16.mxu0 0
      %400 = vmatpush2.bf16.msra.mxu0 0
      %401 = vmatprep.subr.bf16.mxu0 0
      %402 = vmatpush2.bf16.msra.mxu0 0
      %403 = vmatprep.mubr.bf16.mxu0 0
      %404 = vmatmul.mubr.bf16.gmra.mxu0 %v291
      %v405 = vpop.f32.mrf.mxu0
      %v406 = vadd.f32 %v225, %v405
      %v407 = vpop.f32.mrf.mxu0
      %v408 = vpop.f32.mrf.mxu0
      %v409 = vadd.f32 %v225, %v408
      %v410 = vpop.f32.mrf.mxu0
      %411 = vmatprep.mubr.bf16.mxu0 0
      %412 = vmatmul.mubr.bf16.gmra.mxu0 %v292
      %v413 = vpop.f32.mrf.mxu0
      %v414 = vadd.f32 %v225, %v413
      %v415 = vpop.f32.mrf.mxu0
      %v416 = vpop.f32.mrf.mxu0
      %v417 = vadd.f32 %v225, %v416
      %v418 = vpop.f32.mrf.mxu0
      %419 = vmatprep.mubr.bf16.mxu0 0
      %420 = vmatmul.mubr.bf16.gmra.mxu0 %v293
      %v421 = vpop.f32.mrf.mxu0
      %v422 = vadd.f32 %v225, %v421
      %v423 = vpop.f32.mrf.mxu0
      %v424 = vpop.f32.mrf.mxu0
      %v425 = vadd.f32 %v225, %v424
      %v426 = vpop.f32.mrf.mxu0
      %427 = vmatprep.mubr.bf16.mxu0 0
      %428 = vmatmul.mubr.bf16.gmra.mxu0 %v294
      %v429 = vpop.f32.mrf.mxu0
      %v430 = vadd.f32 %v225, %v429
      %v431 = vpop.f32.mrf.mxu0
      %v432 = vpop.f32.mrf.mxu0
      %v433 = vadd.f32 %v225, %v432
      %v434 = vpop.f32.mrf.mxu0
      %435 = vmatprep.mubr.bf16.mxu0 0
      %436 = vmatmul.mubr.bf16.gmra.mxu0 %v295
      %v437 = vpop.f32.mrf.mxu0
      %v438 = vadd.f32 %v225, %v437
      %v439 = vpop.f32.mrf.mxu0
      %v440 = vpop.f32.mrf.mxu0
      %v441 = vadd.f32 %v225, %v440
      %v442 = vpop.f32.mrf.mxu0
      %443 = vmatprep.mubr.bf16.mxu0 0
      %444 = vmatmul.mubr.bf16.gmra.mxu0 %v296
      %v445 = vpop.f32.mrf.mxu0
      %v446 = vadd.f32 %v225, %v445
      %v447 = vpop.f32.mrf.mxu0
      %v448 = vpop.f32.mrf.mxu0
      %v449 = vadd.f32 %v225, %v448
      %v450 = vpop.f32.mrf.mxu0
      %451 = vmatprep.mubr.bf16.mxu0 0
      %452 = vmatmul.mubr.bf16.gmra.mxu0 %v297
      %v453 = vpop.f32.mrf.mxu0
      %v454 = vadd.f32 %v225, %v453
      %v455 = vpop.f32.mrf.mxu0
      %v456 = vpop.f32.mrf.mxu0
      %v457 = vadd.f32 %v225, %v456
      %v458 = vpop.f32.mrf.mxu0
      %459 = vmatprep.mubr.bf16.mxu0 0
      %460 = vmatmul.mubr.bf16.gmra.mxu0 %v298
      %v461 = vpop.f32.mrf.mxu0
      %v462 = vadd.f32 %v225, %v461
      %v463 = vpop.f32.mrf.mxu0
      %v464 = vpop.f32.mrf.mxu0
      %v465 = vadd.f32 %v225, %v464
      %v466 = vpop.f32.mrf.mxu0
      %467 = vmatprep.mubr.bf16.mxu0 0
      %468 = vmatmul.mubr.bf16.gmra.mxu0 %v299
      %v469 = vpop.f32.mrf.mxu0
      %v470 = vadd.f32 %v225, %v469
      %v471 = vpop.f32.mrf.mxu0
      %v472 = vpop.f32.mrf.mxu0
      %v473 = vadd.f32 %v225, %v472
      %v474 = vpop.f32.mrf.mxu0
      %475 = vmatprep.mubr.bf16.mxu0 0
      %476 = vmatmul.mubr.bf16.gmra.mxu0 %v300
      %v477 = vpop.f32.mrf.mxu0
      %v478 = vadd.f32 %v225, %v477
      %v479 = vpop.f32.mrf.mxu0
      %v480 = vpop.f32.mrf.mxu0
      %v481 = vadd.f32 %v225, %v480
      %v482 = vpop.f32.mrf.mxu0
      %483 = vmatprep.mubr.bf16.mxu0 0
      %484 = vmatmul.mubr.bf16.gmra.mxu0 %v301
      %v485 = vpop.f32.mrf.mxu0
      %v486 = vadd.f32 %v225, %v485
      %v487 = vpop.f32.mrf.mxu0
      %v488 = vpop.f32.mrf.mxu0
      %v489 = vadd.f32 %v225, %v488
      %v490 = vpop.f32.mrf.mxu0
      %491 = vmatprep.mubr.bf16.mxu0 0
      %492 = vmatmul.mubr.bf16.gmra.mxu0 %v302
      %v493 = vpop.f32.mrf.mxu0
      %v494 = vadd.f32 %v225, %v493
      %v495 = vpop.f32.mrf.mxu0
      %v496 = vpop.f32.mrf.mxu0
      %v497 = vadd.f32 %v225, %v496
      %v498 = vpop.f32.mrf.mxu0
      %499 = vmatprep.mubr.bf16.mxu0 0
      %500 = vmatmul.mubr.bf16.gmra.mxu0 %v303
      %v501 = vpop.f32.mrf.mxu0
      %v502 = vadd.f32 %v225, %v501
      %v503 = vpop.f32.mrf.mxu0
      %v504 = vpop.f32.mrf.mxu0
      %v505 = vadd.f32 %v225, %v504
      %v506 = vpop.f32.mrf.mxu0
      %507 = vmatprep.mubr.bf16.mxu0 0
      %508 = vmatmul.mubr.bf16.gmra.mxu0 %v304
      %v509 = vpop.f32.mrf.mxu0
      %v510 = vadd.f32 %v225, %v509
      %v511 = vpop.f32.mrf.mxu0
      %v512 = vpop.f32.mrf.mxu0
      %v513 = vadd.f32 %v225, %v512
      %v514 = vpop.f32.mrf.mxu0
      %515 = vmatprep.mubr.bf16.mxu0 0
      %516 = vmatmul.mubr.bf16.gmra.mxu0 %v305
      %v517 = vpop.f32.mrf.mxu0
      %v518 = vadd.f32 %v225, %v517
      %v519 = vpop.f32.mrf.mxu0
      %v520 = vpop.f32.mrf.mxu0
      %v521 = vadd.f32 %v225, %v520
      %v522 = vpop.f32.mrf.mxu0
      %523 = vmatprep.mubr.bf16.mxu0 0
      %524 = vmatmul.mubr.bf16.gmra.mxu0 %v306
      %v525 = vpop.f32.mrf.mxu0
      %v526 = vadd.f32 %v225, %v525
      %v527 = vpop.f32.mrf.mxu0
      %v528 = vpop.f32.mrf.mxu0
      %v529 = vadd.f32 %v225, %v528
      %v530 = vpop.f32.mrf.mxu0
      %531 = vdwg.mxu0
      %v532 = vmax.f32 %v406, 0.0
      %v533 = vmax.f32 %v409, 0.0
      %v534 = vmax.f32 %v414, 0.0
      %v535 = vmax.f32 %v417, 0.0
      %v536 = vmax.f32 %v422, 0.0
      %v537 = vmax.f32 %v425, 0.0
      %v538 = vmax.f32 %v430, 0.0
      %v539 = vmax.f32 %v433, 0.0
      %v540 = vmax.f32 %v438, 0.0
      %v541 = vmax.f32 %v441, 0.0
      %v542 = vmax.f32 %v446, 0.0
      %v543 = vmax.f32 %v449, 0.0
      %v544 = vmax.f32 %v454, 0.0
      %v545 = vmax.f32 %v457, 0.0
      %v546 = vmax.f32 %v462, 0.0
      %v547 = vmax.f32 %v465, 0.0
      %v548 = vmax.f32 %v470, 0.0
      %v549 = vmax.f32 %v473, 0.0
      %v550 = vmax.f32 %v478, 0.0
      %v551 = vmax.f32 %v481, 0.0
      %v552 = vmax.f32 %v486, 0.0
      %v553 = vmax.f32 %v489, 0.0
      %v554 = vmax.f32 %v494, 0.0
      %v555 = vmax.f32 %v497, 0.0
      %v556 = vmax.f32 %v502, 0.0
      %v557 = vmax.f32 %v505, 0.0
      %v558 = vmax.f32 %v510, 0.0
      %v559 = vmax.f32 %v513, 0.0
      %v560 = vmax.f32 %v518, 0.0
      %v561 = vmax.f32 %v521, 0.0
      %v562 = vmax.f32 %v526, 0.0
      %v563 = vmax.f32 %v529, 0.0
      %v596 = vcombine.high %v532, %v532
      %v598 = vunpack.c.l.s4 1983009808
      %v599 = vunpack.c.0.s8 %v598
      %v600 = vlaneseq
      %v601 = vshrl.u32 %v600, 7
      %v602 = vsub.s32 %v599, %v601
      %v603 = vrot.slane %v532, %v602
      %v605 = vunpack.c.l.s4 1983009808
      %v606 = vunpack.c.0.s8 %v605
      %v607 = vlaneseq
      %v608 = vshrl.u32 %v607, 7
      %v609 = vsub.s32 %v606, %v608
      %v610 = vrot.slane %v596, %v609
      %v611 = vcombine.high %v603, %v603
      %v612 = vcombine.high %v610, %v610
      %v613 = vcombine.high %v533, %v533
      %v615 = vunpack.c.l.s4 1983009808
      %v616 = vunpack.c.0.s8 %v615
      %v617 = vlaneseq
      %v618 = vshrl.u32 %v617, 7
      %v619 = vsub.s32 %v616, %v618
      %v620 = vrot.slane %v533, %v619
      %v622 = vunpack.c.l.s4 1983009808
      %v623 = vunpack.c.0.s8 %v622
      %v624 = vlaneseq
      %v625 = vshrl.u32 %v624, 7
      %v626 = vsub.s32 %v623, %v625
      %v627 = vrot.slane %v613, %v626
      %v628 = vcombine.high %v620, %v620
      %v629 = vcombine.high %v627, %v627
      %v630 = vcombine.high %v534, %v534
      %v632 = vunpack.c.l.s4 1983009808
      %v633 = vunpack.c.0.s8 %v632
      %v634 = vlaneseq
      %v635 = vshrl.u32 %v634, 7
      %v636 = vsub.s32 %v633, %v635
      %v637 = vrot.slane %v534, %v636
      %v639 = vunpack.c.l.s4 1983009808
      %v640 = vunpack.c.0.s8 %v639
      %v641 = vlaneseq
      %v642 = vshrl.u32 %v641, 7
      %v643 = vsub.s32 %v640, %v642
      %v644 = vrot.slane %v630, %v643
      %v645 = vcombine.high %v637, %v637
      %v646 = vcombine.high %v644, %v644
      %v647 = vcombine.high %v535, %v535
      %v649 = vunpack.c.l.s4 1983009808
      %v650 = vunpack.c.0.s8 %v649
      %v651 = vlaneseq
      %v652 = vshrl.u32 %v651, 7
      %v653 = vsub.s32 %v650, %v652
      %v654 = vrot.slane %v535, %v653
      %v656 = vunpack.c.l.s4 1983009808
      %v657 = vunpack.c.0.s8 %v656
      %v658 = vlaneseq
      %v659 = vshrl.u32 %v658, 7
      %v660 = vsub.s32 %v657, %v659
      %v661 = vrot.slane %v647, %v660
      %v662 = vcombine.high %v654, %v654
      %v663 = vcombine.high %v661, %v661
      %v664 = vcombine.high %v536, %v536
      %v666 = vunpack.c.l.s4 1983009808
      %v667 = vunpack.c.0.s8 %v666
      %v668 = vlaneseq
      %v669 = vshrl.u32 %v668, 7
      %v670 = vsub.s32 %v667, %v669
      %v671 = vrot.slane %v536, %v670
      %v673 = vunpack.c.l.s4 1983009808
      %v674 = vunpack.c.0.s8 %v673
      %v675 = vlaneseq
      %v676 = vshrl.u32 %v675, 7
      %v677 = vsub.s32 %v674, %v676
      %v678 = vrot.slane %v664, %v677
      %v679 = vcombine.high %v671, %v671
      %v680 = vcombine.high %v678, %v678
      %v681 = vcombine.high %v537, %v537
      %v683 = vunpack.c.l.s4 1983009808
      %v684 = vunpack.c.0.s8 %v683
      %v685 = vlaneseq
      %v686 = vshrl.u32 %v685, 7
      %v687 = vsub.s32 %v684, %v686
      %v688 = vrot.slane %v537, %v687
      %v690 = vunpack.c.l.s4 1983009808
      %v691 = vunpack.c.0.s8 %v690
      %v692 = vlaneseq
      %v693 = vshrl.u32 %v692, 7
      %v694 = vsub.s32 %v691, %v693
      %v695 = vrot.slane %v681, %v694
      %v696 = vcombine.high %v688, %v688
      %v697 = vcombine.high %v695, %v695
      %v698 = vcombine.high %v538, %v538
      %v700 = vunpack.c.l.s4 1983009808
      %v701 = vunpack.c.0.s8 %v700
      %v702 = vlaneseq
      %v703 = vshrl.u32 %v702, 7
      %v704 = vsub.s32 %v701, %v703
      %v705 = vrot.slane %v538, %v704
      %v707 = vunpack.c.l.s4 1983009808
      %v708 = vunpack.c.0.s8 %v707
      %v709 = vlaneseq
      %v710 = vshrl.u32 %v709, 7
      %v711 = vsub.s32 %v708, %v710
      %v712 = vrot.slane %v698, %v711
      %v713 = vcombine.high %v705, %v705
      %v714 = vcombine.high %v712, %v712
      %v715 = vcombine.high %v539, %v539
      %v717 = vunpack.c.l.s4 1983009808
      %v718 = vunpack.c.0.s8 %v717
      %v719 = vlaneseq
      %v720 = vshrl.u32 %v719, 7
      %v721 = vsub.s32 %v718, %v720
      %v722 = vrot.slane %v539, %v721
      %v724 = vunpack.c.l.s4 1983009808
      %v725 = vunpack.c.0.s8 %v724
      %v726 = vlaneseq
      %v727 = vshrl.u32 %v726, 7
      %v728 = vsub.s32 %v725, %v727
      %v729 = vrot.slane %v715, %v728
      %v730 = vcombine.high %v722, %v722
      %v731 = vcombine.high %v729, %v729
      %v732 = vcombine.high %v540, %v540
      %v734 = vunpack.c.l.s4 1983009808
      %v735 = vunpack.c.0.s8 %v734
      %v736 = vlaneseq
      %v737 = vshrl.u32 %v736, 7
      %v738 = vsub.s32 %v735, %v737
      %v739 = vrot.slane %v540, %v738
      %v741 = vunpack.c.l.s4 1983009808
      %v742 = vunpack.c.0.s8 %v741
      %v743 = vlaneseq
      %v744 = vshrl.u32 %v743, 7
      %v745 = vsub.s32 %v742, %v744
      %v746 = vrot.slane %v732, %v745
      %v747 = vcombine.high %v739, %v739
      %v748 = vcombine.high %v746, %v746
      %v749 = vcombine.high %v541, %v541
      %v751 = vunpack.c.l.s4 1983009808
      %v752 = vunpack.c.0.s8 %v751
      %v753 = vlaneseq
      %v754 = vshrl.u32 %v753, 7
      %v755 = vsub.s32 %v752, %v754
      %v756 = vrot.slane %v541, %v755
      %v758 = vunpack.c.l.s4 1983009808
      %v759 = vunpack.c.0.s8 %v758
      %v760 = vlaneseq
      %v761 = vshrl.u32 %v760, 7
      %v762 = vsub.s32 %v759, %v761
      %v763 = vrot.slane %v749, %v762
      %v764 = vcombine.high %v756, %v756
      %v765 = vcombine.high %v763, %v763
      %v766 = vcombine.high %v542, %v542
      %v768 = vunpack.c.l.s4 1983009808
      %v769 = vunpack.c.0.s8 %v768
      %v770 = vlaneseq
      %v771 = vshrl.u32 %v770, 7
      %v772 = vsub.s32 %v769, %v771
      %v773 = vrot.slane %v542, %v772
      %v775 = vunpack.c.l.s4 1983009808
      %v776 = vunpack.c.0.s8 %v775
      %v777 = vlaneseq
      %v778 = vshrl.u32 %v777, 7
      %v779 = vsub.s32 %v776, %v778
      %v780 = vrot.slane %v766, %v779
      %v781 = vcombine.high %v773, %v773
      %v782 = vcombine.high %v780, %v780
      %v783 = vcombine.high %v543, %v543
      %v785 = vunpack.c.l.s4 1983009808
      %v786 = vunpack.c.0.s8 %v785
      %v787 = vlaneseq
      %v788 = vshrl.u32 %v787, 7
      %v789 = vsub.s32 %v786, %v788
      %v790 = vrot.slane %v543, %v789
      %v792 = vunpack.c.l.s4 1983009808
      %v793 = vunpack.c.0.s8 %v792
      %v794 = vlaneseq
      %v795 = vshrl.u32 %v794, 7
      %v796 = vsub.s32 %v793, %v795
      %v797 = vrot.slane %v783, %v796
      %v798 = vcombine.high %v790, %v790
      %v799 = vcombine.high %v797, %v797
      %v800 = vcombine.high %v544, %v544
      %v802 = vunpack.c.l.s4 1983009808
      %v803 = vunpack.c.0.s8 %v802
      %v804 = vlaneseq
      %v805 = vshrl.u32 %v804, 7
      %v806 = vsub.s32 %v803, %v805
      %v807 = vrot.slane %v544, %v806
      %v809 = vunpack.c.l.s4 1983009808
      %v810 = vunpack.c.0.s8 %v809
      %v811 = vlaneseq
      %v812 = vshrl.u32 %v811, 7
      %v813 = vsub.s32 %v810, %v812
      %v814 = vrot.slane %v800, %v813
      %v815 = vcombine.high %v807, %v807
      %v816 = vcombine.high %v814, %v814
      %v817 = vcombine.high %v545, %v545
      %v819 = vunpack.c.l.s4 1983009808
      %v820 = vunpack.c.0.s8 %v819
      %v821 = vlaneseq
      %v822 = vshrl.u32 %v821, 7
      %v823 = vsub.s32 %v820, %v822
      %v824 = vrot.slane %v545, %v823
      %v826 = vunpack.c.l.s4 1983009808
      %v827 = vunpack.c.0.s8 %v826
      %v828 = vlaneseq
      %v829 = vshrl.u32 %v828, 7
      %v830 = vsub.s32 %v827, %v829
      %v831 = vrot.slane %v817, %v830
      %v832 = vcombine.high %v824, %v824
      %v833 = vcombine.high %v831, %v831
      %v834 = vcombine.high %v546, %v546
      %v836 = vunpack.c.l.s4 1983009808
      %v837 = vunpack.c.0.s8 %v836
      %v838 = vlaneseq
      %v839 = vshrl.u32 %v838, 7
      %v840 = vsub.s32 %v837, %v839
      %v841 = vrot.slane %v546, %v840
      %v843 = vunpack.c.l.s4 1983009808
      %v844 = vunpack.c.0.s8 %v843
      %v845 = vlaneseq
      %v846 = vshrl.u32 %v845, 7
      %v847 = vsub.s32 %v844, %v846
      %v848 = vrot.slane %v834, %v847
      %v849 = vcombine.high %v841, %v841
      %v850 = vcombine.high %v848, %v848
      %v851 = vcombine.high %v547, %v547
      %v853 = vunpack.c.l.s4 1983009808
      %v854 = vunpack.c.0.s8 %v853
      %v855 = vlaneseq
      %v856 = vshrl.u32 %v855, 7
      %v857 = vsub.s32 %v854, %v856
      %v858 = vrot.slane %v547, %v857
      %v860 = vunpack.c.l.s4 1983009808
      %v861 = vunpack.c.0.s8 %v860
      %v862 = vlaneseq
      %v863 = vshrl.u32 %v862, 7
      %v864 = vsub.s32 %v861, %v863
      %v865 = vrot.slane %v851, %v864
      %v866 = vcombine.high %v858, %v858
      %v867 = vcombine.high %v865, %v865
      %v868 = vcombine.high %v548, %v548
      %v870 = vunpack.c.l.s4 1983009808
      %v871 = vunpack.c.0.s8 %v870
      %v872 = vlaneseq
      %v873 = vshrl.u32 %v872, 7
      %v874 = vsub.s32 %v871, %v873
      %v875 = vrot.slane %v548, %v874
      %v877 = vunpack.c.l.s4 1983009808
      %v878 = vunpack.c.0.s8 %v877
      %v879 = vlaneseq
      %v880 = vshrl.u32 %v879, 7
      %v881 = vsub.s32 %v878, %v880
      %v882 = vrot.slane %v868, %v881
      %v883 = vcombine.high %v875, %v875
      %v884 = vcombine.high %v882, %v882
      %v885 = vcombine.high %v549, %v549
      %v887 = vunpack.c.l.s4 1983009808
      %v888 = vunpack.c.0.s8 %v887
      %v889 = vlaneseq
      %v890 = vshrl.u32 %v889, 7
      %v891 = vsub.s32 %v888, %v890
      %v892 = vrot.slane %v549, %v891
      %v894 = vunpack.c.l.s4 1983009808
      %v895 = vunpack.c.0.s8 %v894
      %v896 = vlaneseq
      %v897 = vshrl.u32 %v896, 7
      %v898 = vsub.s32 %v895, %v897
      %v899 = vrot.slane %v885, %v898
      %v900 = vcombine.high %v892, %v892
      %v901 = vcombine.high %v899, %v899
      %v902 = vcombine.high %v550, %v550
      %v904 = vunpack.c.l.s4 1983009808
      %v905 = vunpack.c.0.s8 %v904
      %v906 = vlaneseq
      %v907 = vshrl.u32 %v906, 7
      %v908 = vsub.s32 %v905, %v907
      %v909 = vrot.slane %v550, %v908
      %v911 = vunpack.c.l.s4 1983009808
      %v912 = vunpack.c.0.s8 %v911
      %v913 = vlaneseq
      %v914 = vshrl.u32 %v913, 7
      %v915 = vsub.s32 %v912, %v914
      %v916 = vrot.slane %v902, %v915
      %v917 = vcombine.high %v909, %v909
      %v918 = vcombine.high %v916, %v916
      %v919 = vcombine.high %v551, %v551
      %v921 = vunpack.c.l.s4 1983009808
      %v922 = vunpack.c.0.s8 %v921
      %v923 = vlaneseq
      %v924 = vshrl.u32 %v923, 7
      %v925 = vsub.s32 %v922, %v924
      %v926 = vrot.slane %v551, %v925
      %v928 = vunpack.c.l.s4 1983009808
      %v929 = vunpack.c.0.s8 %v928
      %v930 = vlaneseq
      %v931 = vshrl.u32 %v930, 7
      %v932 = vsub.s32 %v929, %v931
      %v933 = vrot.slane %v919, %v932
      %v934 = vcombine.high %v926, %v926
      %v935 = vcombine.high %v933, %v933
      %v936 = vcombine.high %v552, %v552
      %v938 = vunpack.c.l.s4 1983009808
      %v939 = vunpack.c.0.s8 %v938
      %v940 = vlaneseq
      %v941 = vshrl.u32 %v940, 7
      %v942 = vsub.s32 %v939, %v941
      %v943 = vrot.slane %v552, %v942
      %v945 = vunpack.c.l.s4 1983009808
      %v946 = vunpack.c.0.s8 %v945
      %v947 = vlaneseq
      %v948 = vshrl.u32 %v947, 7
      %v949 = vsub.s32 %v946, %v948
      %v950 = vrot.slane %v936, %v949
      %v951 = vcombine.high %v943, %v943
      %v952 = vcombine.high %v950, %v950
      %v953 = vcombine.high %v553, %v553
      %v955 = vunpack.c.l.s4 1983009808
      %v956 = vunpack.c.0.s8 %v955
      %v957 = vlaneseq
      %v958 = vshrl.u32 %v957, 7
      %v959 = vsub.s32 %v956, %v958
      %v960 = vrot.slane %v553, %v959
      %v962 = vunpack.c.l.s4 1983009808
      %v963 = vunpack.c.0.s8 %v962
      %v964 = vlaneseq
      %v965 = vshrl.u32 %v964, 7
      %v966 = vsub.s32 %v963, %v965
      %v967 = vrot.slane %v953, %v966
      %v968 = vcombine.high %v960, %v960
      %v969 = vcombine.high %v967, %v967
      %v970 = vcombine.high %v554, %v554
      %v972 = vunpack.c.l.s4 1983009808
      %v973 = vunpack.c.0.s8 %v972
      %v974 = vlaneseq
      %v975 = vshrl.u32 %v974, 7
      %v976 = vsub.s32 %v973, %v975
      %v977 = vrot.slane %v554, %v976
      %v979 = vunpack.c.l.s4 1983009808
      %v980 = vunpack.c.0.s8 %v979
      %v981 = vlaneseq
      %v982 = vshrl.u32 %v981, 7
      %v983 = vsub.s32 %v980, %v982
      %v984 = vrot.slane %v970, %v983
      %v985 = vcombine.high %v977, %v977
      %v986 = vcombine.high %v984, %v984
      %v987 = vcombine.high %v555, %v555
      %v989 = vunpack.c.l.s4 1983009808
      %v990 = vunpack.c.0.s8 %v989
      %v991 = vlaneseq
      %v992 = vshrl.u32 %v991, 7
      %v993 = vsub.s32 %v990, %v992
      %v994 = vrot.slane %v555, %v993
      %v996 = vunpack.c.l.s4 1983009808
      %v997 = vunpack.c.0.s8 %v996
      %v998 = vlaneseq
      %v999 = vshrl.u32 %v998, 7
      %v1000 = vsub.s32 %v997, %v999
      %v1001 = vrot.slane %v987, %v1000
      %v1002 = vcombine.high %v994, %v994
      %v1003 = vcombine.high %v1001, %v1001
      %v1004 = vcombine.high %v556, %v556
      %v1006 = vunpack.c.l.s4 1983009808
      %v1007 = vunpack.c.0.s8 %v1006
      %v1008 = vlaneseq
      %v1009 = vshrl.u32 %v1008, 7
      %v1010 = vsub.s32 %v1007, %v1009
      %v1011 = vrot.slane %v556, %v1010
      %v1013 = vunpack.c.l.s4 1983009808
      %v1014 = vunpack.c.0.s8 %v1013
      %v1015 = vlaneseq
      %v1016 = vshrl.u32 %v1015, 7
      %v1017 = vsub.s32 %v1014, %v1016
      %v1018 = vrot.slane %v1004, %v1017
      %v1019 = vcombine.high %v1011, %v1011
      %v1020 = vcombine.high %v1018, %v1018
      %v1021 = vcombine.high %v557, %v557
      %v1023 = vunpack.c.l.s4 1983009808
      %v1024 = vunpack.c.0.s8 %v1023
      %v1025 = vlaneseq
      %v1026 = vshrl.u32 %v1025, 7
      %v1027 = vsub.s32 %v1024, %v1026
      %v1028 = vrot.slane %v557, %v1027
      %v1030 = vunpack.c.l.s4 1983009808
      %v1031 = vunpack.c.0.s8 %v1030
      %v1032 = vlaneseq
      %v1033 = vshrl.u32 %v1032, 7
      %v1034 = vsub.s32 %v1031, %v1033
      %v1035 = vrot.slane %v1021, %v1034
      %v1036 = vcombine.high %v1028, %v1028
      %v1037 = vcombine.high %v1035, %v1035
      %v1038 = vcombine.high %v558, %v558
      %v1040 = vunpack.c.l.s4 1983009808
      %v1041 = vunpack.c.0.s8 %v1040
      %v1042 = vlaneseq
      %v1043 = vshrl.u32 %v1042, 7
      %v1044 = vsub.s32 %v1041, %v1043
      %v1045 = vrot.slane %v558, %v1044
      %v1047 = vunpack.c.l.s4 1983009808
      %v1048 = vunpack.c.0.s8 %v1047
      %v1049 = vlaneseq
      %v1050 = vshrl.u32 %v1049, 7
      %v1051 = vsub.s32 %v1048, %v1050
      %v1052 = vrot.slane %v1038, %v1051
      %v1053 = vcombine.high %v1045, %v1045
      %v1054 = vcombine.high %v1052, %v1052
      %v1055 = vcombine.high %v559, %v559
      %v1057 = vunpack.c.l.s4 1983009808
      %v1058 = vunpack.c.0.s8 %v1057
      %v1059 = vlaneseq
      %v1060 = vshrl.u32 %v1059, 7
      %v1061 = vsub.s32 %v1058, %v1060
      %v1062 = vrot.slane %v559, %v1061
      %v1064 = vunpack.c.l.s4 1983009808
      %v1065 = vunpack.c.0.s8 %v1064
      %v1066 = vlaneseq
      %v1067 = vshrl.u32 %v1066, 7
      %v1068 = vsub.s32 %v1065, %v1067
      %v1069 = vrot.slane %v1055, %v1068
      %v1070 = vcombine.high %v1062, %v1062
      %v1071 = vcombine.high %v1069, %v1069
      %v1072 = vcombine.high %v560, %v560
      %v1074 = vunpack.c.l.s4 1983009808
      %v1075 = vunpack.c.0.s8 %v1074
      %v1076 = vlaneseq
      %v1077 = vshrl.u32 %v1076, 7
      %v1078 = vsub.s32 %v1075, %v1077
      %v1079 = vrot.slane %v560, %v1078
      %v1081 = vunpack.c.l.s4 1983009808
      %v1082 = vunpack.c.0.s8 %v1081
      %v1083 = vlaneseq
      %v1084 = vshrl.u32 %v1083, 7
      %v1085 = vsub.s32 %v1082, %v1084
      %v1086 = vrot.slane %v1072, %v1085
      %v1087 = vcombine.high %v1079, %v1079
      %v1088 = vcombine.high %v1086, %v1086
      %v1089 = vcombine.high %v561, %v561
      %v1091 = vunpack.c.l.s4 1983009808
      %v1092 = vunpack.c.0.s8 %v1091
      %v1093 = vlaneseq
      %v1094 = vshrl.u32 %v1093, 7
      %v1095 = vsub.s32 %v1092, %v1094
      %v1096 = vrot.slane %v561, %v1095
      %v1098 = vunpack.c.l.s4 1983009808
      %v1099 = vunpack.c.0.s8 %v1098
      %v1100 = vlaneseq
      %v1101 = vshrl.u32 %v1100, 7
      %v1102 = vsub.s32 %v1099, %v1101
      %v1103 = vrot.slane %v1089, %v1102
      %v1104 = vcombine.high %v1096, %v1096
      %v1105 = vcombine.high %v1103, %v1103
      %v1106 = vcombine.high %v562, %v562
      %v1108 = vunpack.c.l.s4 1983009808
      %v1109 = vunpack.c.0.s8 %v1108
      %v1110 = vlaneseq
      %v1111 = vshrl.u32 %v1110, 7
      %v1112 = vsub.s32 %v1109, %v1111
      %v1113 = vrot.slane %v562, %v1112
      %v1115 = vunpack.c.l.s4 1983009808
      %v1116 = vunpack.c.0.s8 %v1115
      %v1117 = vlaneseq
      %v1118 = vshrl.u32 %v1117, 7
      %v1119 = vsub.s32 %v1116, %v1118
      %v1120 = vrot.slane %v1106, %v1119
      %v1121 = vcombine.high %v1113, %v1113
      %v1122 = vcombine.high %v1120, %v1120
      %v1123 = vcombine.high %v563, %v563
      %v1125 = vunpack.c.l.s4 1983009808
      %v1126 = vunpack.c.0.s8 %v1125
      %v1127 = vlaneseq
      %v1128 = vshrl.u32 %v1127, 7
      %v1129 = vsub.s32 %v1126, %v1128
      %v1130 = vrot.slane %v563, %v1129
      %v1132 = vunpack.c.l.s4 1983009808
      %v1133 = vunpack.c.0.s8 %v1132
      %v1134 = vlaneseq
      %v1135 = vshrl.u32 %v1134, 7
      %v1136 = vsub.s32 %v1133, %v1135
      %v1137 = vrot.slane %v1123, %v1136
      %v1138 = vcombine.high %v1130, %v1130
      %v1139 = vcombine.high %v1137, %v1137
      %v1268 = vmax.f32 %v603, %v637
      %v1269 = vmax.f32 %v611, %v645
      %v1270 = vmax.f32 %v610, %v644
      %v1271 = vmax.f32 %v612, %v646
      %v1272 = vmax.f32 %v620, %v654
      %v1273 = vmax.f32 %v628, %v662
      %v1274 = vmax.f32 %v627, %v661
      %v1275 = vmax.f32 %v629, %v663
      %v1276 = vmax.f32 %v671, %v705
      %v1277 = vmax.f32 %v679, %v713
      %v1278 = vmax.f32 %v678, %v712
      %v1279 = vmax.f32 %v680, %v714
      %v1280 = vmax.f32 %v688, %v722
      %v1281 = vmax.f32 %v696, %v730
      %v1282 = vmax.f32 %v695, %v729
      %v1283 = vmax.f32 %v697, %v731
      %v1284 = vmax.f32 %v739, %v773
      %v1285 = vmax.f32 %v747, %v781
      %v1286 = vmax.f32 %v746, %v780
      %v1287 = vmax.f32 %v748, %v782
      %v1288 = vmax.f32 %v756, %v790
      %v1289 = vmax.f32 %v764, %v798
      %v1290 = vmax.f32 %v763, %v797
      %v1291 = vmax.f32 %v765, %v799
      %v1292 = vmax.f32 %v807, %v841
      %v1293 = vmax.f32 %v815, %v849
      %v1294 = vmax.f32 %v814, %v848
      %v1295 = vmax.f32 %v816, %v850
      %v1296 = vmax.f32 %v824, %v858
      %v1297 = vmax.f32 %v832, %v866
      %v1298 = vmax.f32 %v831, %v865
      %v1299 = vmax.f32 %v833, %v867
      %v1300 = vmax.f32 %v875, %v909
      %v1301 = vmax.f32 %v883, %v917
      %v1302 = vmax.f32 %v882, %v916
      %v1303 = vmax.f32 %v884, %v918
      %v1304 = vmax.f32 %v892, %v926
      %v1305 = vmax.f32 %v900, %v934
      %v1306 = vmax.f32 %v899, %v933
      %v1307 = vmax.f32 %v901, %v935
      %v1308 = vmax.f32 %v943, %v977
      %v1309 = vmax.f32 %v951, %v985
      %v1310 = vmax.f32 %v950, %v984
      %v1311 = vmax.f32 %v952, %v986
      %v1312 = vmax.f32 %v960, %v994
      %v1313 = vmax.f32 %v968, %v1002
      %v1314 = vmax.f32 %v967, %v1001
      %v1315 = vmax.f32 %v969, %v1003
      %v1316 = vmax.f32 %v1011, %v1045
      %v1317 = vmax.f32 %v1019, %v1053
      %v1318 = vmax.f32 %v1018, %v1052
      %v1319 = vmax.f32 %v1020, %v1054
      %v1320 = vmax.f32 %v1028, %v1062
      %v1321 = vmax.f32 %v1036, %v1070
      %v1322 = vmax.f32 %v1035, %v1069
      %v1323 = vmax.f32 %v1037, %v1071
      %v1324 = vmax.f32 %v1079, %v1113
      %v1325 = vmax.f32 %v1087, %v1121
      %v1326 = vmax.f32 %v1086, %v1120
      %v1327 = vmax.f32 %v1088, %v1122
      %v1328 = vmax.f32 %v1096, %v1130
      %v1329 = vmax.f32 %v1104, %v1138
      %v1330 = vmax.f32 %v1103, %v1137
      %v1331 = vmax.f32 %v1105, %v1139
      %v1396 = vrot.slane %v1268, 7
      %v1397 = vrot.slane %v1396, 2
      %v1398 = vrot.slane %v1269, 7
      %v1399 = vrot.slane %v1398, 2
      %v1400 = vrot.slane %v1270, 7
      %v1401 = vrot.slane %v1400, 2
      %v1402 = vrot.slane %v1271, 7
      %v1403 = vrot.slane %v1402, 2
      %v1404 = vrot.slane %v1272, 7
      %v1405 = vrot.slane %v1404, 2
      %v1406 = vrot.slane %v1273, 7
      %v1407 = vrot.slane %v1406, 2
      %v1408 = vrot.slane %v1274, 7
      %v1409 = vrot.slane %v1408, 2
      %v1410 = vrot.slane %v1275, 7
      %v1411 = vrot.slane %v1410, 2
      %v1412 = vrot.slane %v1276, 7
      %v1413 = vrot.slane %v1412, 2
      %v1414 = vrot.slane %v1277, 7
      %v1415 = vrot.slane %v1414, 2
      %v1416 = vrot.slane %v1278, 7
      %v1417 = vrot.slane %v1416, 2
      %v1418 = vrot.slane %v1279, 7
      %v1419 = vrot.slane %v1418, 2
      %v1420 = vrot.slane %v1280, 7
      %v1421 = vrot.slane %v1420, 2
      %v1422 = vrot.slane %v1281, 7
      %v1423 = vrot.slane %v1422, 2
      %v1424 = vrot.slane %v1282, 7
      %v1425 = vrot.slane %v1424, 2
      %v1426 = vrot.slane %v1283, 7
      %v1427 = vrot.slane %v1426, 2
      %v1428 = vrot.slane %v1284, 7
      %v1429 = vrot.slane %v1428, 2
      %v1430 = vrot.slane %v1285, 7
      %v1431 = vrot.slane %v1430, 2
      %v1432 = vrot.slane %v1286, 7
      %v1433 = vrot.slane %v1432, 2
      %v1434 = vrot.slane %v1287, 7
      %v1435 = vrot.slane %v1434, 2
      %v1436 = vrot.slane %v1288, 7
      %v1437 = vrot.slane %v1436, 2
      %v1438 = vrot.slane %v1289, 7
      %v1439 = vrot.slane %v1438, 2
      %v1440 = vrot.slane %v1290, 7
      %v1441 = vrot.slane %v1440, 2
      %v1442 = vrot.slane %v1291, 7
      %v1443 = vrot.slane %v1442, 2
      %v1444 = vrot.slane %v1292, 7
      %v1445 = vrot.slane %v1444, 2
      %v1446 = vrot.slane %v1293, 7
      %v1447 = vrot.slane %v1446, 2
      %v1448 = vrot.slane %v1294, 7
      %v1449 = vrot.slane %v1448, 2
      %v1450 = vrot.slane %v1295, 7
      %v1451 = vrot.slane %v1450, 2
      %v1452 = vrot.slane %v1296, 7
      %v1453 = vrot.slane %v1452, 2
      %v1454 = vrot.slane %v1297, 7
      %v1455 = vrot.slane %v1454, 2
      %v1456 = vrot.slane %v1298, 7
      %v1457 = vrot.slane %v1456, 2
      %v1458 = vrot.slane %v1299, 7
      %v1459 = vrot.slane %v1458, 2
      %v1460 = vrot.slane %v1300, 7
      %v1461 = vrot.slane %v1460, 2
      %v1462 = vrot.slane %v1301, 7
      %v1463 = vrot.slane %v1462, 2
      %v1464 = vrot.slane %v1302, 7
      %v1465 = vrot.slane %v1464, 2
      %v1466 = vrot.slane %v1303, 7
      %v1467 = vrot.slane %v1466, 2
      %v1468 = vrot.slane %v1304, 7
      %v1469 = vrot.slane %v1468, 2
      %v1470 = vrot.slane %v1305, 7
      %v1471 = vrot.slane %v1470, 2
      %v1472 = vrot.slane %v1306, 7
      %v1473 = vrot.slane %v1472, 2
      %v1474 = vrot.slane %v1307, 7
      %v1475 = vrot.slane %v1474, 2
      %v1476 = vrot.slane %v1308, 7
      %v1477 = vrot.slane %v1476, 2
      %v1478 = vrot.slane %v1309, 7
      %v1479 = vrot.slane %v1478, 2
      %v1480 = vrot.slane %v1310, 7
      %v1481 = vrot.slane %v1480, 2
      %v1482 = vrot.slane %v1311, 7
      %v1483 = vrot.slane %v1482, 2
      %v1484 = vrot.slane %v1312, 7
      %v1485 = vrot.slane %v1484, 2
      %v1486 = vrot.slane %v1313, 7
      %v1487 = vrot.slane %v1486, 2
      %v1488 = vrot.slane %v1314, 7
      %v1489 = vrot.slane %v1488, 2
      %v1490 = vrot.slane %v1315, 7
      %v1491 = vrot.slane %v1490, 2
      %v1492 = vrot.slane %v1316, 7
      %v1493 = vrot.slane %v1492, 2
      %v1494 = vrot.slane %v1317, 7
      %v1495 = vrot.slane %v1494, 2
      %v1496 = vrot.slane %v1318, 7
      %v1497 = vrot.slane %v1496, 2
      %v1498 = vrot.slane %v1319, 7
      %v1499 = vrot.slane %v1498, 2
      %v1500 = vrot.slane %v1320, 7
      %v1501 = vrot.slane %v1500, 2
      %v1502 = vrot.slane %v1321, 7
      %v1503 = vrot.slane %v1502, 2
      %v1504 = vrot.slane %v1322, 7
      %v1505 = vrot.slane %v1504, 2
      %v1506 = vrot.slane %v1323, 7
      %v1507 = vrot.slane %v1506, 2
      %v1508 = vrot.slane %v1324, 7
      %v1509 = vrot.slane %v1508, 2
      %v1510 = vrot.slane %v1325, 7
      %v1511 = vrot.slane %v1510, 2
      %v1512 = vrot.slane %v1326, 7
      %v1513 = vrot.slane %v1512, 2
      %v1514 = vrot.slane %v1327, 7
      %v1515 = vrot.slane %v1514, 2
      %v1516 = vrot.slane %v1328, 7
      %v1517 = vrot.slane %v1516, 2
      %v1518 = vrot.slane %v1329, 7
      %v1519 = vrot.slane %v1518, 2
      %v1520 = vrot.slane %v1330, 7
      %v1521 = vrot.slane %v1520, 2
      %v1522 = vrot.slane %v1331, 7
      %v1523 = vrot.slane %v1522, 2
      %v1588 = vmax.f32 %v1268, %v1397
      %v1589 = vmax.f32 %v1269, %v1399
      %v1590 = vmax.f32 %v1270, %v1401
      %v1591 = vmax.f32 %v1271, %v1403
      %v1592 = vmax.f32 %v1272, %v1405
      %v1593 = vmax.f32 %v1273, %v1407
      %v1594 = vmax.f32 %v1274, %v1409
      %v1595 = vmax.f32 %v1275, %v1411
      %v1596 = vmax.f32 %v1276, %v1413
      %v1597 = vmax.f32 %v1277, %v1415
      %v1598 = vmax.f32 %v1278, %v1417
      %v1599 = vmax.f32 %v1279, %v1419
      %v1600 = vmax.f32 %v1280, %v1421
      %v1601 = vmax.f32 %v1281, %v1423
      %v1602 = vmax.f32 %v1282, %v1425
      %v1603 = vmax.f32 %v1283, %v1427
      %v1604 = vmax.f32 %v1284, %v1429
      %v1605 = vmax.f32 %v1285, %v1431
      %v1606 = vmax.f32 %v1286, %v1433
      %v1607 = vmax.f32 %v1287, %v1435
      %v1608 = vmax.f32 %v1288, %v1437
      %v1609 = vmax.f32 %v1289, %v1439
      %v1610 = vmax.f32 %v1290, %v1441
      %v1611 = vmax.f32 %v1291, %v1443
      %v1612 = vmax.f32 %v1292, %v1445
      %v1613 = vmax.f32 %v1293, %v1447
      %v1614 = vmax.f32 %v1294, %v1449
      %v1615 = vmax.f32 %v1295, %v1451
      %v1616 = vmax.f32 %v1296, %v1453
      %v1617 = vmax.f32 %v1297, %v1455
      %v1618 = vmax.f32 %v1298, %v1457
      %v1619 = vmax.f32 %v1299, %v1459
      %v1620 = vmax.f32 %v1300, %v1461
      %v1621 = vmax.f32 %v1301, %v1463
      %v1622 = vmax.f32 %v1302, %v1465
      %v1623 = vmax.f32 %v1303, %v1467
      %v1624 = vmax.f32 %v1304, %v1469
      %v1625 = vmax.f32 %v1305, %v1471
      %v1626 = vmax.f32 %v1306, %v1473
      %v1627 = vmax.f32 %v1307, %v1475
      %v1628 = vmax.f32 %v1308, %v1477
      %v1629 = vmax.f32 %v1309, %v1479
      %v1630 = vmax.f32 %v1310, %v1481
      %v1631 = vmax.f32 %v1311, %v1483
      %v1632 = vmax.f32 %v1312, %v1485
      %v1633 = vmax.f32 %v1313, %v1487
      %v1634 = vmax.f32 %v1314, %v1489
      %v1635 = vmax.f32 %v1315, %v1491
      %v1636 = vmax.f32 %v1316, %v1493
      %v1637 = vmax.f32 %v1317, %v1495
      %v1638 = vmax.f32 %v1318, %v1497
      %v1639 = vmax.f32 %v1319, %v1499
      %v1640 = vmax.f32 %v1320, %v1501
      %v1641 = vmax.f32 %v1321, %v1503
      %v1642 = vmax.f32 %v1322, %v1505
      %v1643 = vmax.f32 %v1323, %v1507
      %v1644 = vmax.f32 %v1324, %v1509
      %v1645 = vmax.f32 %v1325, %v1511
      %v1646 = vmax.f32 %v1326, %v1513
      %v1647 = vmax.f32 %v1327, %v1515
      %v1648 = vmax.f32 %v1328, %v1517
      %v1649 = vmax.f32 %v1329, %v1519
      %v1650 = vmax.f32 %v1330, %v1521
      %v1651 = vmax.f32 %v1331, %v1523
      %v1652 = vpack.c.bf16 %v1588, %v1588
      %v1653 = vpack.c.bf16 %v1589, %v1589
      %v1654 = vpack.c.bf16 %v1590, %v1590
      %v1655 = vpack.c.bf16 %v1591, %v1591
      %v1656 = vpack.c.bf16 %v1592, %v1592
      %v1657 = vpack.c.bf16 %v1593, %v1593
      %v1658 = vpack.c.bf16 %v1594, %v1594
      %v1659 = vpack.c.bf16 %v1595, %v1595
      %v1660 = vpack.c.bf16 %v1596, %v1596
      %v1661 = vpack.c.bf16 %v1597, %v1597
      %v1662 = vpack.c.bf16 %v1598, %v1598
      %v1663 = vpack.c.bf16 %v1599, %v1599
      %v1664 = vpack.c.bf16 %v1600, %v1600
      %v1665 = vpack.c.bf16 %v1601, %v1601
      %v1666 = vpack.c.bf16 %v1602, %v1602
      %v1667 = vpack.c.bf16 %v1603, %v1603
      %v1668 = vpack.c.bf16 %v1604, %v1604
      %v1669 = vpack.c.bf16 %v1605, %v1605
      %v1670 = vpack.c.bf16 %v1606, %v1606
      %v1671 = vpack.c.bf16 %v1607, %v1607
      %v1672 = vpack.c.bf16 %v1608, %v1608
      %v1673 = vpack.c.bf16 %v1609, %v1609
      %v1674 = vpack.c.bf16 %v1610, %v1610
      %v1675 = vpack.c.bf16 %v1611, %v1611
      %v1676 = vpack.c.bf16 %v1612, %v1612
      %v1677 = vpack.c.bf16 %v1613, %v1613
      %v1678 = vpack.c.bf16 %v1614, %v1614
      %v1679 = vpack.c.bf16 %v1615, %v1615
      %v1680 = vpack.c.bf16 %v1616, %v1616
      %v1681 = vpack.c.bf16 %v1617, %v1617
      %v1682 = vpack.c.bf16 %v1618, %v1618
      %v1683 = vpack.c.bf16 %v1619, %v1619
      %v1684 = vpack.c.bf16 %v1620, %v1620
      %v1685 = vpack.c.bf16 %v1621, %v1621
      %v1686 = vpack.c.bf16 %v1622, %v1622
      %v1687 = vpack.c.bf16 %v1623, %v1623
      %v1688 = vpack.c.bf16 %v1624, %v1624
      %v1689 = vpack.c.bf16 %v1625, %v1625
      %v1690 = vpack.c.bf16 %v1626, %v1626
      %v1691 = vpack.c.bf16 %v1627, %v1627
      %v1692 = vpack.c.bf16 %v1628, %v1628
      %v1693 = vpack.c.bf16 %v1629, %v1629
      %v1694 = vpack.c.bf16 %v1630, %v1630
      %v1695 = vpack.c.bf16 %v1631, %v1631
      %v1696 = vpack.c.bf16 %v1632, %v1632
      %v1697 = vpack.c.bf16 %v1633, %v1633
      %v1698 = vpack.c.bf16 %v1634, %v1634
      %v1699 = vpack.c.bf16 %v1635, %v1635
      %v1700 = vpack.c.bf16 %v1636, %v1636
      %v1701 = vpack.c.bf16 %v1637, %v1637
      %v1702 = vpack.c.bf16 %v1638, %v1638
      %v1703 = vpack.c.bf16 %v1639, %v1639
      %v1704 = vpack.c.bf16 %v1640, %v1640
      %v1705 = vpack.c.bf16 %v1641, %v1641
      %v1706 = vpack.c.bf16 %v1642, %v1642
      %v1707 = vpack.c.bf16 %v1643, %v1643
      %v1708 = vpack.c.bf16 %v1644, %v1644
      %v1709 = vpack.c.bf16 %v1645, %v1645
      %v1710 = vpack.c.bf16 %v1646, %v1646
      %v1711 = vpack.c.bf16 %v1647, %v1647
      %v1712 = vpack.c.bf16 %v1648, %v1648
      %v1713 = vpack.c.bf16 %v1649, %v1649
      %v1714 = vpack.c.bf16 %v1650, %v1650
      %v1715 = vpack.c.bf16 %v1651, %v1651
      %v1780 = vunpack.c.l.b16 %v1652
      %v1781 = vunpack.c.l.b16 %v1653
      %v1782 = vunpack.c.l.b16 %v1654
      %v1783 = vunpack.c.l.b16 %v1655
      %v1784 = vunpack.c.l.b16 %v1656
      %v1785 = vunpack.c.l.b16 %v1657
      %v1786 = vunpack.c.l.b16 %v1658
      %v1787 = vunpack.c.l.b16 %v1659
      %v1788 = vunpack.c.l.b16 %v1660
      %v1789 = vunpack.c.l.b16 %v1661
      %v1790 = vunpack.c.l.b16 %v1662
      %v1791 = vunpack.c.l.b16 %v1663
      %v1792 = vunpack.c.l.b16 %v1664
      %v1793 = vunpack.c.l.b16 %v1665
      %v1794 = vunpack.c.l.b16 %v1666
      %v1795 = vunpack.c.l.b16 %v1667
      %v1796 = vunpack.c.l.b16 %v1668
      %v1797 = vunpack.c.l.b16 %v1669
      %v1798 = vunpack.c.l.b16 %v1670
      %v1799 = vunpack.c.l.b16 %v1671
      %v1800 = vunpack.c.l.b16 %v1672
      %v1801 = vunpack.c.l.b16 %v1673
      %v1802 = vunpack.c.l.b16 %v1674
      %v1803 = vunpack.c.l.b16 %v1675
      %v1804 = vunpack.c.l.b16 %v1676
      %v1805 = vunpack.c.l.b16 %v1677
      %v1806 = vunpack.c.l.b16 %v1678
      %v1807 = vunpack.c.l.b16 %v1679
      %v1808 = vunpack.c.l.b16 %v1680
      %v1809 = vunpack.c.l.b16 %v1681
      %v1810 = vunpack.c.l.b16 %v1682
      %v1811 = vunpack.c.l.b16 %v1683
      %v1812 = vunpack.c.l.b16 %v1684
      %v1813 = vunpack.c.l.b16 %v1685
      %v1814 = vunpack.c.l.b16 %v1686
      %v1815 = vunpack.c.l.b16 %v1687
      %v1816 = vunpack.c.l.b16 %v1688
      %v1817 = vunpack.c.l.b16 %v1689
      %v1818 = vunpack.c.l.b16 %v1690
      %v1819 = vunpack.c.l.b16 %v1691
      %v1820 = vunpack.c.l.b16 %v1692
      %v1821 = vunpack.c.l.b16 %v1693
      %v1822 = vunpack.c.l.b16 %v1694
      %v1823 = vunpack.c.l.b16 %v1695
      %v1824 = vunpack.c.l.b16 %v1696
      %v1825 = vunpack.c.l.b16 %v1697
      %v1826 = vunpack.c.l.b16 %v1698
      %v1827 = vunpack.c.l.b16 %v1699
      %v1828 = vunpack.c.l.b16 %v1700
      %v1829 = vunpack.c.l.b16 %v1701
      %v1830 = vunpack.c.l.b16 %v1702
      %v1831 = vunpack.c.l.b16 %v1703
      %v1832 = vunpack.c.l.b16 %v1704
      %v1833 = vunpack.c.l.b16 %v1705
      %v1834 = vunpack.c.l.b16 %v1706
      %v1835 = vunpack.c.l.b16 %v1707
      %v1836 = vunpack.c.l.b16 %v1708
      %v1837 = vunpack.c.l.b16 %v1709
      %v1838 = vunpack.c.l.b16 %v1710
      %v1839 = vunpack.c.l.b16 %v1711
      %v1840 = vunpack.c.l.b16 %v1712
      %v1841 = vunpack.c.l.b16 %v1713
      %v1842 = vunpack.c.l.b16 %v1714
      %v1843 = vunpack.c.l.b16 %v1715
      %v1844 = vpack.c.b16 %v1780, %v1780
      %v1845 = vpack.c.b16 %v1781, %v1781
      %v1846 = vpack.c.b16 %v1782, %v1782
      %v1847 = vpack.c.b16 %v1783, %v1783
      %v1848 = vpack.c.b16 %v1784, %v1784
      %v1849 = vpack.c.b16 %v1785, %v1785
      %v1850 = vpack.c.b16 %v1786, %v1786
      %v1851 = vpack.c.b16 %v1787, %v1787
      %v1852 = vpack.c.b16 %v1788, %v1788
      %v1853 = vpack.c.b16 %v1789, %v1789
      %v1854 = vpack.c.b16 %v1790, %v1790
      %v1855 = vpack.c.b16 %v1791, %v1791
      %v1856 = vpack.c.b16 %v1792, %v1792
      %v1857 = vpack.c.b16 %v1793, %v1793
      %v1858 = vpack.c.b16 %v1794, %v1794
      %v1859 = vpack.c.b16 %v1795, %v1795
      %v1860 = vpack.c.b16 %v1796, %v1796
      %v1861 = vpack.c.b16 %v1797, %v1797
      %v1862 = vpack.c.b16 %v1798, %v1798
      %v1863 = vpack.c.b16 %v1799, %v1799
      %v1864 = vpack.c.b16 %v1800, %v1800
      %v1865 = vpack.c.b16 %v1801, %v1801
      %v1866 = vpack.c.b16 %v1802, %v1802
      %v1867 = vpack.c.b16 %v1803, %v1803
      %v1868 = vpack.c.b16 %v1804, %v1804
      %v1869 = vpack.c.b16 %v1805, %v1805
      %v1870 = vpack.c.b16 %v1806, %v1806
      %v1871 = vpack.c.b16 %v1807, %v1807
      %v1872 = vpack.c.b16 %v1808, %v1808
      %v1873 = vpack.c.b16 %v1809, %v1809
      %v1874 = vpack.c.b16 %v1810, %v1810
      %v1875 = vpack.c.b16 %v1811, %v1811
      %v1876 = vpack.c.b16 %v1812, %v1812
      %v1877 = vpack.c.b16 %v1813, %v1813
      %v1878 = vpack.c.b16 %v1814, %v1814
      %v1879 = vpack.c.b16 %v1815, %v1815
      %v1880 = vpack.c.b16 %v1816, %v1816
      %v1881 = vpack.c.b16 %v1817, %v1817
      %v1882 = vpack.c.b16 %v1818, %v1818
      %v1883 = vpack.c.b16 %v1819, %v1819
      %v1884 = vpack.c.b16 %v1820, %v1820
      %v1885 = vpack.c.b16 %v1821, %v1821
      %v1886 = vpack.c.b16 %v1822, %v1822
      %v1887 = vpack.c.b16 %v1823, %v1823
      %v1888 = vpack.c.b16 %v1824, %v1824
      %v1889 = vpack.c.b16 %v1825, %v1825
      %v1890 = vpack.c.b16 %v1826, %v1826
      %v1891 = vpack.c.b16 %v1827, %v1827
      %v1892 = vpack.c.b16 %v1828, %v1828
      %v1893 = vpack.c.b16 %v1829, %v1829
      %v1894 = vpack.c.b16 %v1830, %v1830
      %v1895 = vpack.c.b16 %v1831, %v1831
      %v1896 = vpack.c.b16 %v1832, %v1832
      %v1897 = vpack.c.b16 %v1833, %v1833
      %v1898 = vpack.c.b16 %v1834, %v1834
      %v1899 = vpack.c.b16 %v1835, %v1835
      %v1900 = vpack.c.b16 %v1836, %v1836
      %v1901 = vpack.c.b16 %v1837, %v1837
      %v1902 = vpack.c.b16 %v1838, %v1838
      %v1903 = vpack.c.b16 %v1839, %v1839
      %v1904 = vpack.c.b16 %v1840, %v1840
      %v1905 = vpack.c.b16 %v1841, %v1841
      %v1906 = vpack.c.b16 %v1842, %v1842
      %v1907 = vpack.c.b16 %v1843, %v1843
      %v1908 = vunpack.c.l.b16 %v1844
      %v1909 = vunpack.c.l.b16 %v1845
      %v1910 = vunpack.c.l.b16 %v1846
      %v1911 = vunpack.c.l.b16 %v1847
      %v1912 = vunpack.c.l.b16 %v1848
      %v1913 = vunpack.c.l.b16 %v1849
      %v1914 = vunpack.c.l.b16 %v1850
      %v1915 = vunpack.c.l.b16 %v1851
      %v1916 = vunpack.c.l.b16 %v1852
      %v1917 = vunpack.c.l.b16 %v1853
      %v1918 = vunpack.c.l.b16 %v1854
      %v1919 = vunpack.c.l.b16 %v1855
      %v1920 = vunpack.c.l.b16 %v1856
      %v1921 = vunpack.c.l.b16 %v1857
      %v1922 = vunpack.c.l.b16 %v1858
      %v1923 = vunpack.c.l.b16 %v1859
      %v1924 = vunpack.c.l.b16 %v1860
      %v1925 = vunpack.c.l.b16 %v1861
      %v1926 = vunpack.c.l.b16 %v1862
      %v1927 = vunpack.c.l.b16 %v1863
      %v1928 = vunpack.c.l.b16 %v1864
      %v1929 = vunpack.c.l.b16 %v1865
      %v1930 = vunpack.c.l.b16 %v1866
      %v1931 = vunpack.c.l.b16 %v1867
      %v1932 = vunpack.c.l.b16 %v1868
      %v1933 = vunpack.c.l.b16 %v1869
      %v1934 = vunpack.c.l.b16 %v1870
      %v1935 = vunpack.c.l.b16 %v1871
      %v1936 = vunpack.c.l.b16 %v1872
      %v1937 = vunpack.c.l.b16 %v1873
      %v1938 = vunpack.c.l.b16 %v1874
      %v1939 = vunpack.c.l.b16 %v1875
      %v1940 = vunpack.c.l.b16 %v1876
      %v1941 = vunpack.c.l.b16 %v1877
      %v1942 = vunpack.c.l.b16 %v1878
      %v1943 = vunpack.c.l.b16 %v1879
      %v1944 = vunpack.c.l.b16 %v1880
      %v1945 = vunpack.c.l.b16 %v1881
      %v1946 = vunpack.c.l.b16 %v1882
      %v1947 = vunpack.c.l.b16 %v1883
      %v1948 = vunpack.c.l.b16 %v1884
      %v1949 = vunpack.c.l.b16 %v1885
      %v1950 = vunpack.c.l.b16 %v1886
      %v1951 = vunpack.c.l.b16 %v1887
      %v1952 = vunpack.c.l.b16 %v1888
      %v1953 = vunpack.c.l.b16 %v1889
      %v1954 = vunpack.c.l.b16 %v1890
      %v1955 = vunpack.c.l.b16 %v1891
      %v1956 = vunpack.c.l.b16 %v1892
      %v1957 = vunpack.c.l.b16 %v1893
      %v1958 = vunpack.c.l.b16 %v1894
      %v1959 = vunpack.c.l.b16 %v1895
      %v1960 = vunpack.c.l.b16 %v1896
      %v1961 = vunpack.c.l.b16 %v1897
      %v1962 = vunpack.c.l.b16 %v1898
      %v1963 = vunpack.c.l.b16 %v1899
      %v1964 = vunpack.c.l.b16 %v1900
      %v1965 = vunpack.c.l.b16 %v1901
      %v1966 = vunpack.c.l.b16 %v1902
      %v1967 = vunpack.c.l.b16 %v1903
      %v1968 = vunpack.c.l.b16 %v1904
      %v1969 = vunpack.c.l.b16 %v1905
      %v1970 = vunpack.c.l.b16 %v1906
      %v1971 = vunpack.c.l.b16 %v1907
      %v1972 = vrot.slane %v1909, 7
      %vm1973 = vcmask 1041409
      %v1974 = vsel %vm1973, %v1972, %v1908
      %v1975 = vrot.slane %v1910, 6
      %vm1976 = vcmask 1042434
      %v1977 = vsel %vm1976, %v1975, %v1974
      %v1978 = vrot.slane %v1911, 5
      %vm1979 = vcmask 1043459
      %v1980 = vsel %vm1979, %v1978, %v1977
      %v1981 = vrot.slane %v1912, 4
      %vm1982 = vcmask 1044484
      %v1983 = vsel %vm1982, %v1981, %v1980
      %v1984 = vrot.slane %v1913, 3
      %vm1985 = vcmask 1045509
      %v1986 = vsel %vm1985, %v1984, %v1983
      %v1987 = vrot.slane %v1914, 2
      %vm1988 = vcmask 1046534
      %v1989 = vsel %vm1988, %v1987, %v1986
      %v1990 = vrot.slane %v1915, 1
      %vm1991 = vcmask 1047559
      %v1992 = vsel %vm1991, %v1990, %v1989
      %v1993 = vrot.slane %v1917, 7
      %v1994 = vsel %vm1973, %v1993, %v1916
      %v1995 = vrot.slane %v1918, 6
      %v1996 = vsel %vm1976, %v1995, %v1994
      %v1997 = vrot.slane %v1919, 5
      %v1998 = vsel %vm1979, %v1997, %v1996
      %v1999 = vrot.slane %v1920, 4
      %v2000 = vsel %vm1982, %v1999, %v1998
      %v2001 = vrot.slane %v1921, 3
      %v2002 = vsel %vm1985, %v2001, %v2000
      %v2003 = vrot.slane %v1922, 2
      %v2004 = vsel %vm1988, %v2003, %v2002
      %v2005 = vrot.slane %v1923, 1
      %v2006 = vsel %vm1991, %v2005, %v2004
      %v2007 = vrot.slane %v1925, 7
      %v2008 = vsel %vm1973, %v2007, %v1924
      %v2009 = vrot.slane %v1926, 6
      %v2010 = vsel %vm1976, %v2009, %v2008
      %v2011 = vrot.slane %v1927, 5
      %v2012 = vsel %vm1979, %v2011, %v2010
      %v2013 = vrot.slane %v1928, 4
      %v2014 = vsel %vm1982, %v2013, %v2012
      %v2015 = vrot.slane %v1929, 3
      %v2016 = vsel %vm1985, %v2015, %v2014
      %v2017 = vrot.slane %v1930, 2
      %v2018 = vsel %vm1988, %v2017, %v2016
      %v2019 = vrot.slane %v1931, 1
      %v2020 = vsel %vm1991, %v2019, %v2018
      %v2021 = vrot.slane %v1933, 7
      %v2022 = vsel %vm1973, %v2021, %v1932
      %v2023 = vrot.slane %v1934, 6
      %v2024 = vsel %vm1976, %v2023, %v2022
      %v2025 = vrot.slane %v1935, 5
      %v2026 = vsel %vm1979, %v2025, %v2024
      %v2027 = vrot.slane %v1936, 4
      %v2028 = vsel %vm1982, %v2027, %v2026
      %v2029 = vrot.slane %v1937, 3
      %v2030 = vsel %vm1985, %v2029, %v2028
      %v2031 = vrot.slane %v1938, 2
      %v2032 = vsel %vm1988, %v2031, %v2030
      %v2033 = vrot.slane %v1939, 1
      %v2034 = vsel %vm1991, %v2033, %v2032
      %v2035 = vrot.slane %v1941, 7
      %v2036 = vsel %vm1973, %v2035, %v1940
      %v2037 = vrot.slane %v1942, 6
      %v2038 = vsel %vm1976, %v2037, %v2036
      %v2039 = vrot.slane %v1943, 5
      %v2040 = vsel %vm1979, %v2039, %v2038
      %v2041 = vrot.slane %v1944, 4
      %v2042 = vsel %vm1982, %v2041, %v2040
      %v2043 = vrot.slane %v1945, 3
      %v2044 = vsel %vm1985, %v2043, %v2042
      %v2045 = vrot.slane %v1946, 2
      %v2046 = vsel %vm1988, %v2045, %v2044
      %v2047 = vrot.slane %v1947, 1
      %v2048 = vsel %vm1991, %v2047, %v2046
      %v2049 = vrot.slane %v1949, 7
      %v2050 = vsel %vm1973, %v2049, %v1948
      %v2051 = vrot.slane %v1950, 6
      %v2052 = vsel %vm1976, %v2051, %v2050
      %v2053 = vrot.slane %v1951, 5
      %v2054 = vsel %vm1979, %v2053, %v2052
      %v2055 = vrot.slane %v1952, 4
      %v2056 = vsel %vm1982, %v2055, %v2054
      %v2057 = vrot.slane %v1953, 3
      %v2058 = vsel %vm1985, %v2057, %v2056
      %v2059 = vrot.slane %v1954, 2
      %v2060 = vsel %vm1988, %v2059, %v2058
      %v2061 = vrot.slane %v1955, 1
      %v2062 = vsel %vm1991, %v2061, %v2060
      %v2063 = vrot.slane %v1957, 7
      %v2064 = vsel %vm1973, %v2063, %v1956
      %v2065 = vrot.slane %v1958, 6
      %v2066 = vsel %vm1976, %v2065, %v2064
      %v2067 = vrot.slane %v1959, 5
      %v2068 = vsel %vm1979, %v2067, %v2066
      %v2069 = vrot.slane %v1960, 4
      %v2070 = vsel %vm1982, %v2069, %v2068
      %v2071 = vrot.slane %v1961, 3
      %v2072 = vsel %vm1985, %v2071, %v2070
      %v2073 = vrot.slane %v1962, 2
      %v2074 = vsel %vm1988, %v2073, %v2072
      %v2075 = vrot.slane %v1963, 1
      %v2076 = vsel %vm1991, %v2075, %v2074
      %v2077 = vrot.slane %v1965, 7
      %v2078 = vsel %vm1973, %v2077, %v1964
      %v2079 = vrot.slane %v1966, 6
      %v2080 = vsel %vm1976, %v2079, %v2078
      %v2081 = vrot.slane %v1967, 5
      %v2082 = vsel %vm1979, %v2081, %v2080
      %v2083 = vrot.slane %v1968, 4
      %v2084 = vsel %vm1982, %v2083, %v2082
      %v2085 = vrot.slane %v1969, 3
      %v2086 = vsel %vm1985, %v2085, %v2084
      %v2087 = vrot.slane %v1970, 2
      %v2088 = vsel %vm1988, %v2087, %v2086
      %v2089 = vrot.slane %v1971, 1
      %v2090 = vsel %vm1991, %v2089, %v2088
      %v2091 = vpack.c.b16 %v1992, %v1992
      %v2092 = vpack.c.b16 %v2006, %v2006
      %v2093 = vpack.c.b16 %v2020, %v2020
      %v2094 = vpack.c.b16 %v2034, %v2034
      %v2095 = vpack.c.b16 %v2048, %v2048
      %v2096 = vpack.c.b16 %v2062, %v2062
      %v2097 = vpack.c.b16 %v2076, %v2076
      %v2098 = vpack.c.b16 %v2090, %v2090
      %2107 = vst [vmem:[%s170] sm:$0xf] %v2091
      %2108 = vst [vmem:[%s170 + $0x4] sm:$0xf] %v2092
      %2109 = vst [vmem:[%s170 + $0x8] sm:$0xf] %v2093
      %2110 = vst [vmem:[%s170 + $0xc] sm:$0xf] %v2094
      %2111 = vst [vmem:[%s170 + $0x10] sm:$0xf] %v2095
      %2112 = vst [vmem:[%s170 + $0x14] sm:$0xf] %v2096
      %2113 = vst [vmem:[%s170 + $0x18] sm:$0xf] %v2097
      %2114 = vst [vmem:[%s170 + $0x1c] sm:$0xf] %v2098
      %p2115 = scmp.lt.s32.totalorder %s14, 1
      %s2116 = scalar_select %p2115, %s14, 1
      %s2117 = smul.addr %s2116, 8
      %s2118 = smul.addr %s2117, 4
      %s2119 = scalar_lea.vmem %s3, %s2118
      // Predicated region
      $region33: #{unet_forward.4} parent=31 // pred_check
        %p2120 = pneg %p100
      $region34: #{unet_forward.4} parent=31 // pred_check_branch
        %2122 = sbr.rel (%p2120) target = $region36
      $region35: #{unet_forward.4} parent=31 // pred_region
        _
      $region36: #{unet_forward.4} parent=31 // pred_fallthru
        _
    $region32: #{unet_forward.4} parent=5 // pred_fallthru
      _
    %p2123 = scmp.le.s32.totalorder 2, %s9
    // Predicated region
    $region37: #{unet_forward.4} parent=5 // pred_check
      %p2124 = pneg %p2123
    $region38: #{unet_forward.4} parent=5 // pred_check_branch
      %2126 = sbr.rel (%p2124) target = $region40
    $region39: #{unet_forward.4} parent=5 // pred_region
      %s2127 = ssub.s32 %s9, 2
      // Predicated region
      $region41: #{unet_forward.4} parent=39 // pred_check
        %p2128 = pneg %p106
      $region42: #{unet_forward.4} parent=39 // pred_check_branch
        %2130 = sbr.rel (%p2128) target = $region44
      $region43: #{unet_forward.4} parent=39 // pred_region
        %p2131 = scmp.lt.s32.totalorder %s15, 1
        %s2132 = scalar_select %p2131, %s15, 1
        %s2133 = smul.addr %s2132, 8
        %s2134 = smul.addr %s2133, 4
        %s2135 = scalar_lea.vmem %s3, %s2134
      $region44: #{unet_forward.4} parent=39 // pred_fallthru
        _
    $region40: #{unet_forward.4} parent=5 // pred_fallthru
      _
  $region6: #{unet_forward.4} parent=0 // loop_footer
    %s13 = sadd.s32 1, %s9
  $region7: #{unet_forward.4} parent=0 // loop_footer_branch
    %8 = sbr.rel target = $region3
  $region8: #{unet_forward.4} parent=0 // loop_exit
    _

// kernel: unet_forward.5
$region0: #{unet_forward.5}
  #allocation0 [shape = 'u32[]', space=smem, size = 0x4, offset = 0x4, fixed_abs, tag = 'smem constant byte address 0x4 - core index']
  #allocation1 [shape = 'u32[144,128]{1,0:T(1,128)}', space=vmem, size = 0x12000, scoped, tag = 'internal scratch']
  %s0 = inlined_call_operand.vmem [shape: bf16[2,80,384], index: 0, kind: input, shape index: {}]
  %s1 = inlined_call_operand.vmem [shape: bf16[3,384,128], index: 1, kind: input, shape index: {}]
  %s2 = inlined_call_operand.vmem [shape: f32[1,128], index: 2, kind: input, shape index: {}]
  %s3 = inlined_call_operand.vmem [shape: bf16[2,8,8,128], index: 3, kind: output, shape index: {0}]
  %s4 = inlined_call_operand.vmem [shape: bf16[2,4,4,128], index: 4, kind: output, shape index: {1}]
  %5 = xla_tuple %s3, %s4
  %s6 = sld [smem:[#allocation0]]
  $region53: #{unet_forward.5} parent=0
    _
  %s8 = ssub.s32 1, %s6
  %s9 = scalar_select 0, %s8, %s6
  loop: start=0, step=1, limit=4
  $region2: #{unet_forward.5} parent=0 // loop_pre_header
    _
  $region3: #{unet_forward.5} parent=0 // loop_header
    %s11 = sphi 0, %s15
    %p12 = scmp.ge.s32.totalorder %s11, 4
    %s21 = sphi 0, %s23
    %s24 = sphi 0, %s21
    %s25 = sphi 0, %s24
    %s41 = sphi 0, %s25
    %s45 = sphi 0, %s45
    %s47 = sphi 0, %s45
    %s48 = sphi 0, %s47
    %s62 = sphi 0, %s48
    %s66 = sphi 0, %s66
    %s68 = sphi 0, %s66
    %s69 = sphi 0, %s68
    %s83 = sphi 0, %s69
    %s89 = sphi 0, %s91
    %s92 = sphi 0, %s89
    %s93 = sphi 0, %s92
    %s109 = sphi 0, %s93
    %s115 = sphi 0, %s117
    %s118 = sphi 0, %s115
    %s119 = sphi 0, %s118
    %s135 = sphi 0, %s119
  $region4: #{unet_forward.5} parent=0 // loop_header_branch
    %14 = sbr.rel (%p12) target = $region8
  $region5: #{unet_forward.5} parent=0 // loop_body
    %s16 = ssub.s32 %s11, 1
    %s17 = ssub.s32 %s11, 2
    %s18 = sadd.s32 %s11, 1
    %s19 = ssub.s32 %s11, %s18
    %p20 = scmp.eq.s32.totalorder %s19, 0
    %s22 = sadd.s32 %s21, 1
    %s23 = scalar_select %p20, %s21, %s22
    %p26 = pneg %p20
    %p27 = scmp.eq.s32.totalorder %s11, 1
    %p28 = por %p26, %p27
    %p29 = scmp.ne.s32.totalorder %s21, %s24
    %p30 = scmp.eq.s32.totalorder %s11, 0
    %p31 = por %p29, %p30
    %p32 = scmp.ne.s32.totalorder %s21, %s24
    %p33 = scmp.eq.s32.totalorder %s16, 1
    %p34 = por %p32, %p33
    %p35 = scmp.ne.s32.totalorder %s24, %s25
    %p36 = scmp.eq.s32.totalorder %s16, 0
    %p37 = por %p35, %p36
    %p38 = scmp.ne.s32.totalorder %s24, %s25
    %p39 = scmp.eq.s32.totalorder %s17, 1
    %p40 = por %p38, %p39
    %p42 = scmp.ne.s32.totalorder %s25, %s41
    %p43 = scmp.eq.s32.totalorder %s17, 0
    %p44 = por %p42, %p43
    %s46 = sadd.s32 %s45, 1
    %p49 = scmp.eq.s32.totalorder %s11, 1
    %p50 = scmp.ne.s32.totalorder %s45, %s47
    %p51 = scmp.eq.s32.totalorder %s11, 0
    %p52 = por %p50, %p51
    %p53 = scmp.ne.s32.totalorder %s45, %s47
    %p54 = scmp.eq.s32.totalorder %s16, 1
    %p55 = por %p53, %p54
    %p56 = scmp.ne.s32.totalorder %s47, %s48
    %p57 = scmp.eq.s32.totalorder %s16, 0
    %p58 = por %p56, %p57
    %p59 = scmp.ne.s32.totalorder %s47, %s48
    %p60 = scmp.eq.s32.totalorder %s17, 1
    %p61 = por %p59, %p60
    %p63 = scmp.ne.s32.totalorder %s48, %s62
    %p64 = scmp.eq.s32.totalorder %s17, 0
    %p65 = por %p63, %p64
    %s67 = sadd.s32 %s66, 1
    %p70 = scmp.eq.s32.totalorder %s11, 1
    %p71 = scmp.ne.s32.totalorder %s66, %s68
    %p72 = scmp.eq.s32.totalorder %s11, 0
    %p73 = por %p71, %p72
    %p74 = scmp.ne.s32.totalorder %s66, %s68
    %p75 = scmp.eq.s32.totalorder %s16, 1
    %p76 = por %p74, %p75
    %p77 = scmp.ne.s32.totalorder %s68, %s69
    %p78 = scmp.eq.s32.totalorder %s16, 0
    %p79 = por %p77, %p78
    %p80 = scmp.ne.s32.totalorder %s68, %s69
    %p81 = scmp.eq.s32.totalorder %s17, 1
    %p82 = por %p80, %p81
    %p84 = scmp.ne.s32.totalorder %s69, %s83
    %p85 = scmp.eq.s32.totalorder %s17, 0
    %p86 = por %p84, %p85
    %s87 = ssub.s32 %s11, %s18
    %p88 = scmp.eq.s32.totalorder %s87, 0
    %s90 = sadd.s32 %s89, 1
    %s91 = scalar_select %p88, %s89, %s90
    %p94 = pneg %p88
    %p95 = scmp.eq.s32.totalorder %s11, 1
    %p96 = por %p94, %p95
    %p97 = scmp.ne.s32.totalorder %s89, %s92
    %p98 = scmp.eq.s32.totalorder %s11, 0
    %p99 = por %p97, %p98
    %p100 = scmp.ne.s32.totalorder %s89, %s92
    %p101 = scmp.eq.s32.totalorder %s16, 1
    %p102 = por %p100, %p101
    %p103 = scmp.ne.s32.totalorder %s92, %s93
    %p104 = scmp.eq.s32.totalorder %s16, 0
    %p105 = por %p103, %p104
    %p106 = scmp.ne.s32.totalorder %s92, %s93
    %p107 = scmp.eq.s32.totalorder %s17, 1
    %p108 = por %p106, %p107
    %p110 = scmp.ne.s32.totalorder %s93, %s109
    %p111 = scmp.eq.s32.totalorder %s17, 0
    %p112 = por %p110, %p111
    %s113 = ssub.s32 %s11, %s18
    %p114 = scmp.eq.s32.totalorder %s113, 0
    %s116 = sadd.s32 %s115, 1
    %s117 = scalar_select %p114, %s115, %s116
    %p120 = pneg %p114
    %p121 = scmp.eq.s32.totalorder %s11, 1
    %p122 = por %p120, %p121
    %p123 = scmp.ne.s32.totalorder %s115, %s118
    %p124 = scmp.eq.s32.totalorder %s11, 0
    %p125 = por %p123, %p124
    %p126 = scmp.ne.s32.totalorder %s115, %s118
    %p127 = scmp.eq.s32.totalorder %s16, 1
    %p128 = por %p126, %p127
    %p129 = scmp.ne.s32.totalorder %s118, %s119
    %p130 = scmp.eq.s32.totalorder %s16, 0
    %p131 = por %p129, %p130
    %p132 = scmp.ne.s32.totalorder %s118, %s119
    %p133 = scmp.eq.s32.totalorder %s17, 1
    %p134 = por %p132, %p133
    %p136 = scmp.ne.s32.totalorder %s119, %s135
    %p137 = scmp.eq.s32.totalorder %s17, 0
    %p138 = por %p136, %p137
    %p139 = scmp.le.s32.totalorder 1, %s11
    %p140 = scmp.lt.s32.totalorder %s11, 3
    %p141 = pnand %p139, %p140
    %p142 = pneg %p141
    // Predicated region
    $region9: #{unet_forward.5} parent=5 // pred_check
      _
    $region10: #{unet_forward.5} parent=5 // pred_check_branch
      %144 = sbr.rel (%p141) target = $region12
    $region11: #{unet_forward.5} parent=5 // pred_region
      %s145 = ssub.s32 %s11, 1
      // Predicated region
      $region13: #{unet_forward.5} parent=11 // pred_check
        %p146 = pneg %p58
      $region14: #{unet_forward.5} parent=11 // pred_check_branch
        %148 = sbr.rel (%p146) target = $region16
      $region15: #{unet_forward.5} parent=11 // pred_region
        _
      $region16: #{unet_forward.5} parent=11 // pred_fallthru
        _
      // Predicated region
      $region17: #{unet_forward.5} parent=11 // pred_check
        %p149 = pneg %p79
      $region18: #{unet_forward.5} parent=11 // pred_check_branch
        %151 = sbr.rel (%p149) target = $region20
      $region19: #{unet_forward.5} parent=11 // pred_region
        _
      $region20: #{unet_forward.5} parent=11 // pred_fallthru
        _
    $region12: #{unet_forward.5} parent=5 // pred_fallthru
      _
    %p152 = scmp.lt.s32.totalorder %s11, 2
    // Predicated region
    $region21: #{unet_forward.5} parent=5 // pred_check
      %p153 = pneg %p152
    $region22: #{unet_forward.5} parent=5 // pred_check_branch
      %155 = sbr.rel (%p153) target = $region24
    $region23: #{unet_forward.5} parent=5 // pred_region
      // Predicated region
      $region25: #{unet_forward.5} parent=23 // pred_check
        %p156 = pneg %p31
      $region26: #{unet_forward.5} parent=23 // pred_check_branch
        %158 = sbr.rel (%p156) target = $region28
      $region27: #{unet_forward.5} parent=23 // pred_region
        %p159 = scmp.lt.s32.totalorder %s11, 1
        %s160 = scalar_select %p159, %s11, 1
        %s161 = smul.addr %s160, 30
        %s162 = smul.addr %s161, 4
        %s163 = scalar_lea.vmem %s0, %s162
      $region28: #{unet_forward.5} parent=23 // pred_fallthru
        _
    $region24: #{unet_forward.5} parent=5 // pred_fallthru
      _
    %p164 = scmp.le.s32.totalorder 1, %s11
    %p165 = scmp.lt.s32.totalorder %s11, 3
    %p166 = pnand %p164, %p165
    %p167 = pneg %p166
    // Predicated region
    $region29: #{unet_forward.5} parent=5 // pred_check
      _
    $region30: #{unet_forward.5} parent=5 // pred_check_branch
      %169 = sbr.rel (%p166) target = $region32
    $region31: #{unet_forward.5} parent=5 // pred_region
      %s170 = ssub.s32 %s11, 1
      %p171 = scmp.lt.s32.totalorder %s16, 1
      %s172 = scalar_select %p171, %s16, 1
      %s173 = smul.addr %s172, 30
      %s174 = smul.addr %s173, 4
      %s175 = scalar_lea.vmem %s0, %s174
      %p176 = pneg %p37
      %p177 = pneg %p34
      %p178 = pneg %p58
      %p179 = pneg %p55
      %p180 = pneg %p79
      %p181 = pneg %p76
      %p182 = pneg %p105
      %p183 = pneg %p102
      %p184 = scmp.lt.s32.totalorder %s16, 1
      %s185 = scalar_select %p184, %s16, 1
      %s186 = smul.addr %s185, 8
      %s187 = smul.addr %s186, 4
      %s188 = scalar_lea.vmem %s3, %s187
      %p189 = pneg %p131
      %p190 = pneg %p128
      %p191 = scmp.lt.s32.totalorder %s16, 1
      %s192 = scalar_select %p191, %s16, 1
      %s193 = smul.addr %s192, 4
      %s194 = smul.addr %s193, 2
      %s195 = scalar_lea.vmem %s4, %s194
      %p196 = scmp.lt.s32.totalorder %s16, 1
      %s197 = scalar_select %p196, %s16, 1
      %s198 = smul.addr %s197, 30
      %s199 = smul.addr %s198, 4
      %s200 = scalar_lea.vmem %s0, %s199
      %p201 = scmp.lt.s32.totalorder %s16, 1
      %s202 = scalar_select %p201, %s16, 1
      %s203 = smul.addr %s202, 8
      %s204 = smul.addr %s203, 4
      %s205 = scalar_lea.vmem %s3, %s204
      %p206 = scmp.lt.s32.totalorder %s16, 1
      %s207 = scalar_select %p206, %s16, 1
      %s208 = smul.addr %s207, 4
      %s209 = smul.addr %s208, 2
      %s210 = scalar_lea.vmem %s4, %s209
      %v212 = vld [vmem:[%s200] sm:$0xff]
      %v213 = vld [vmem:[%s200 + $0x8] sm:$0xf]
      %v214 = vld [vmem:[%s200 + $0xc] sm:$0xff]
      %v215 = vld [vmem:[%s200 + $0x14] sm:$0xf]
      %v216 = vld [vmem:[%s200 + $0x18] sm:$0xff]
      %v217 = vld [vmem:[%s200 + $0x20] sm:$0xf]
      %v218 = vld [vmem:[%s200 + $0x24] sm:$0xff]
      %v219 = vld [vmem:[%s200 + $0x2c] sm:$0xf]
      %v220 = vld [vmem:[%s200 + $0x30] sm:$0xff]
      %v221 = vld [vmem:[%s200 + $0x38] sm:$0xf]
      %v222 = vld [vmem:[%s200 + $0x3c] sm:$0xff]
      %v223 = vld [vmem:[%s200 + $0x44] sm:$0xf]
      %v224 = vld [vmem:[%s200 + $0x48] sm:$0xff]
      %v225 = vld [vmem:[%s200 + $0x50] sm:$0xf]
      %v226 = vld [vmem:[%s200 + $0x54] sm:$0xff]
      %v227 = vld [vmem:[%s200 + $0x5c] sm:$0xf]
      %v228 = vld [vmem:[%s1] sm:$0xf]
      %v229 = vld [vmem:[%s1 + $0x4] sm:$0xf]
      %v230 = vld [vmem:[%s1 + $0x8] sm:$0xf]
      %v231 = vld [vmem:[%s1 + $0xc] sm:$0xf]
      %v232 = vld [vmem:[%s1 + $0x10] sm:$0xf]
      %v233 = vld [vmem:[%s1 + $0x14] sm:$0xf]
      %v234 = vld [vmem:[%s1 + $0x18] sm:$0xf]
      %v235 = vld [vmem:[%s1 + $0x1c] sm:$0xf]
      %v236 = vld [vmem:[%s1 + $0x20] sm:$0xf]
      %v237 = vld [vmem:[%s1 + $0x24] sm:$0xf]
      %v238 = vld [vmem:[%s1 + $0x28] sm:$0xf]
      %v239 = vld [vmem:[%s1 + $0x2c] sm:$0xf]
      %v240 = vld [vmem:[%s1 + $0x30] sm:$0xf]
      %v241 = vld [vmem:[%s1 + $0x34] sm:$0xf]
      %v242 = vld [vmem:[%s1 + $0x38] sm:$0xf]
      %v243 = vld [vmem:[%s1 + $0x3c] sm:$0xf]
      %v244 = vld [vmem:[%s1 + $0x40] sm:$0xf]
      %v245 = vld [vmem:[%s1 + $0x44] sm:$0xf]
      %v246 = vld [vmem:[%s1 + $0x48] sm:$0xf]
      %v247 = vld [vmem:[%s1 + $0x4c] sm:$0xf]
      %v248 = vld [vmem:[%s1 + $0x50] sm:$0xf]
      %v249 = vld [vmem:[%s1 + $0x54] sm:$0xf]
      %v250 = vld [vmem:[%s1 + $0x58] sm:$0xf]
      %v251 = vld [vmem:[%s1 + $0x5c] sm:$0xf]
      %v252 = vld [vmem:[%s1 + $0x60] sm:$0xf]
      %v253 = vld [vmem:[%s1 + $0x64] sm:$0xf]
      %v254 = vld [vmem:[%s1 + $0x68] sm:$0xf]
      %v255 = vld [vmem:[%s1 + $0x6c] sm:$0xf]
      %v256 = vld [vmem:[%s1 + $0x70] sm:$0xf]
      %v257 = vld [vmem:[%s1 + $0x74] sm:$0xf]
      %v258 = vld [vmem:[%s1 + $0x78] sm:$0xf]
      %v259 = vld [vmem:[%s1 + $0x7c] sm:$0xf]
      %v260 = vld [vmem:[%s1 + $0x80] sm:$0xf]
      %v261 = vld [vmem:[%s1 + $0x84] sm:$0xf]
      %v262 = vld [vmem:[%s1 + $0x88] sm:$0xf]
      %v263 = vld [vmem:[%s1 + $0x8c] sm:$0xf]
      %v264 = vld [vmem:[%s1 + $0x90] sm:$0xf]
      %v265 = vld [vmem:[%s1 + $0x94] sm:$0xf]
      %v266 = vld [vmem:[%s1 + $0x98] sm:$0xf]
      %v267 = vld [vmem:[%s1 + $0x9c] sm:$0xf]
      %v268 = vld [vmem:[%s1 + $0xa0] sm:$0xf]
      %v269 = vld [vmem:[%s1 + $0xa4] sm:$0xf]
      %v270 = vld [vmem:[%s1 + $0xa8] sm:$0xf]
      %v271 = vld [vmem:[%s1 + $0xac] sm:$0xf]
      %v272 = vld [vmem:[%s1 + $0xb0] sm:$0xf]
      %v273 = vld [vmem:[%s1 + $0xb4] sm:$0xf]
      %v274 = vld [vmem:[%s1 + $0xb8] sm:$0xf]
      %v275 = vld [vmem:[%s1 + $0xbc] sm:$0xf]
      %v276 = vld [vmem:[%s200 + $0x60] sm:$0xff]
      %v277 = vld [vmem:[%s200 + $0x68] sm:$0xf]
      %s278 = scalar_lea.vmem %s1, 192
      %v279 = vld [vmem:[%s278] sm:$0xf]
      %v280 = vld [vmem:[%s278 + $0x4] sm:$0xf]
      %v281 = vld [vmem:[%s278 + $0x8] sm:$0xf]
      %v282 = vld [vmem:[%s278 + $0xc] sm:$0xf]
      %v283 = vld [vmem:[%s278 + $0x10] sm:$0xf]
      %v284 = vld [vmem:[%s278 + $0x14] sm:$0xf]
      %v285 = vld [vmem:[%s278 + $0x18] sm:$0xf]
      %v286 = vld [vmem:[%s278 + $0x1c] sm:$0xf]
      %v287 = vld [vmem:[%s278 + $0x20] sm:$0xf]
      %v288 = vld [vmem:[%s278 + $0x24] sm:$0xf]
      %v289 = vld [vmem:[%s278 + $0x28] sm:$0xf]
      %v290 = vld [vmem:[%s278 + $0x2c] sm:$0xf]
      %v291 = vld [vmem:[%s278 + $0x30] sm:$0xf]
      %v292 = vld [vmem:[%s278 + $0x34] sm:$0xf]
      %v293 = vld [vmem:[%s278 + $0x38] sm:$0xf]
      %v294 = vld [vmem:[%s278 + $0x3c] sm:$0xf]
      %v295 = vld [vmem:[%s278 + $0x40] sm:$0xf]
      %v296 = vld [vmem:[%s278 + $0x44] sm:$0xf]
      %v297 = vld [vmem:[%s278 + $0x48] sm:$0xf]
      %v298 = vld [vmem:[%s278 + $0x4c] sm:$0xf]
      %v299 = vld [vmem:[%s278 + $0x50] sm:$0xf]
      %v300 = vld [vmem:[%s278 + $0x54] sm:$0xf]
      %v301 = vld [vmem:[%s278 + $0x58] sm:$0xf]
      %v302 = vld [vmem:[%s278 + $0x5c] sm:$0xf]
      %v303 = vld [vmem:[%s278 + $0x60] sm:$0xf]
      %v304 = vld [vmem:[%s278 + $0x64] sm:$0xf]
      %v305 = vld [vmem:[%s278 + $0x68] sm:$0xf]
      %v306 = vld [vmem:[%s278 + $0x6c] sm:$0xf]
      %v307 = vld [vmem:[%s278 + $0x70] sm:$0xf]
      %v308 = vld [vmem:[%s278 + $0x74] sm:$0xf]
      %v309 = vld [vmem:[%s278 + $0x78] sm:$0xf]
      %v310 = vld [vmem:[%s278 + $0x7c] sm:$0xf]
      %v311 = vld [vmem:[%s278 + $0x80] sm:$0xf]
      %v312 = vld [vmem:[%s278 + $0x84] sm:$0xf]
      %v313 = vld [vmem:[%s278 + $0x88] sm:$0xf]
      %v314 = vld [vmem:[%s278 + $0x8c] sm:$0xf]
      %v315 = vld [vmem:[%s278 + $0x90] sm:$0xf]
      %v316 = vld [vmem:[%s278 + $0x94] sm:$0xf]
      %v317 = vld [vmem:[%s278 + $0x98] sm:$0xf]
      %v318 = vld [vmem:[%s278 + $0x9c] sm:$0xf]
      %v319 = vld [vmem:[%s278 + $0xa0] sm:$0xf]
      %v320 = vld [vmem:[%s278 + $0xa4] sm:$0xf]
      %v321 = vld [vmem:[%s278 + $0xa8] sm:$0xf]
      %v322 = vld [vmem:[%s278 + $0xac] sm:$0xf]
      %v323 = vld [vmem:[%s278 + $0xb0] sm:$0xf]
      %v324 = vld [vmem:[%s278 + $0xb4] sm:$0xf]
      %v325 = vld [vmem:[%s278 + $0xb8] sm:$0xf]
      %v326 = vld [vmem:[%s278 + $0xbc] sm:$0xf]
      %v343 = vunpack.c.l.b16 %v214
      %v344 = vunpack.c.h.b16 %v214
      %v345 = vunpack.c.l.b16 %v215
      %v346 = vunpack.c.l.b16 %v216
      %v347 = vunpack.c.h.b16 %v216
      %v348 = vunpack.c.l.b16 %v217
      %v349 = vunpack.c.l.b16 %v218
      %v350 = vunpack.c.h.b16 %v218
      %v351 = vunpack.c.l.b16 %v219
      %v352 = vunpack.c.l.b16 %v220
      %v353 = vunpack.c.h.b16 %v220
      %v354 = vunpack.c.l.b16 %v221
      %v355 = vunpack.c.l.b16 %v222
      %v356 = vunpack.c.h.b16 %v222
      %v357 = vunpack.c.l.b16 %v223
      %v358 = vunpack.c.l.b16 %v224
      %v359 = vunpack.c.h.b16 %v224
      %v360 = vunpack.c.l.b16 %v225
      %v361 = vunpack.c.l.b16 %v226
      %v362 = vunpack.c.h.b16 %v226
      %v363 = vunpack.c.l.b16 %v227
      %v364 = vunpack.c.l.b16 %v276
      %v365 = vunpack.c.h.b16 %v276
      %v366 = vunpack.c.l.b16 %v277
      %v367 = vpack.c.b16 %v346, %v343
      %v368 = vpack.c.b16 %v347, %v344
      %v369 = vpack.c.b16 %v348, %v345
      %v370 = vpack.c.b16 %v352, %v349
      %v371 = vpack.c.b16 %v353, %v350
      %v372 = vpack.c.b16 %v354, %v351
      %v373 = vpack.c.b16 %v358, %v355
      %v374 = vpack.c.b16 %v359, %v356
      %v375 = vpack.c.b16 %v360, %v357
      %v376 = vpack.c.b16 %v364, %v361
      %v377 = vpack.c.b16 %v365, %v362
      %v378 = vpack.c.b16 %v366, %v363
      %v439 = vunpack.c.l.b16 %v279
      %v440 = vunpack.c.l.b16 %v280
      %v441 = vunpack.c.l.b16 %v281
      %v442 = vunpack.c.l.b16 %v282
      %v443 = vunpack.c.l.b16 %v283
      %v444 = vunpack.c.l.b16 %v284
      %v445 = vunpack.c.l.b16 %v285
      %v446 = vunpack.c.l.b16 %v286
      %v447 = vunpack.c.l.b16 %v287
      %v448 = vunpack.c.l.b16 %v288
      %v449 = vunpack.c.l.b16 %v289
      %v450 = vunpack.c.l.b16 %v290
      %v451 = vunpack.c.l.b16 %v291
      %v452 = vunpack.c.l.b16 %v292
      %v453 = vunpack.c.l.b16 %v293
      %v454 = vunpack.c.l.b16 %v294
      %v455 = vunpack.c.l.b16 %v295
      %v456 = vunpack.c.l.b16 %v296
      %v457 = vunpack.c.l.b16 %v297
      %v458 = vunpack.c.l.b16 %v298
      %v459 = vunpack.c.l.b16 %v299
      %v460 = vunpack.c.l.b16 %v300
      %v461 = vunpack.c.l.b16 %v301
      %v462 = vunpack.c.l.b16 %v302
      %v463 = vunpack.c.l.b16 %v303
      %v464 = vunpack.c.l.b16 %v304
      %v465 = vunpack.c.l.b16 %v305
      %v466 = vunpack.c.l.b16 %v306
      %v467 = vunpack.c.l.b16 %v307
      %v468 = vunpack.c.l.b16 %v308
      %v469 = vunpack.c.l.b16 %v309
      %v470 = vunpack.c.l.b16 %v310
      %v471 = vunpack.c.l.b16 %v311
      %v472 = vunpack.c.l.b16 %v312
      %v473 = vunpack.c.l.b16 %v313
      %v474 = vunpack.c.l.b16 %v314
      %v475 = vunpack.c.l.b16 %v315
      %v476 = vunpack.c.l.b16 %v316
      %v477 = vunpack.c.l.b16 %v317
      %v478 = vunpack.c.l.b16 %v318
      %v479 = vunpack.c.l.b16 %v319
      %v480 = vunpack.c.l.b16 %v320
      %v481 = vunpack.c.l.b16 %v321
      %v482 = vunpack.c.l.b16 %v322
      %v483 = vunpack.c.l.b16 %v323
      %v484 = vunpack.c.l.b16 %v324
      %v485 = vunpack.c.l.b16 %v325
      %v486 = vunpack.c.l.b16 %v326
      %v487 = vpack.c.b16 %v440, %v439
      %v488 = vpack.c.b16 %v442, %v441
      %v489 = vpack.c.b16 %v444, %v443
      %v490 = vpack.c.b16 %v446, %v445
      %v491 = vpack.c.b16 %v448, %v447
      %v492 = vpack.c.b16 %v450, %v449
      %v493 = vpack.c.b16 %v452, %v451
      %v494 = vpack.c.b16 %v454, %v453
      %v495 = vpack.c.b16 %v456, %v455
      %v496 = vpack.c.b16 %v458, %v457
      %v497 = vpack.c.b16 %v460, %v459
      %v498 = vpack.c.b16 %v462, %v461
      %v499 = vpack.c.b16 %v464, %v463
      %v500 = vpack.c.b16 %v466, %v465
      %v501 = vpack.c.b16 %v468, %v467
      %v502 = vpack.c.b16 %v470, %v469
      %v503 = vpack.c.b16 %v472, %v471
      %v504 = vpack.c.b16 %v474, %v473
      %v505 = vpack.c.b16 %v476, %v475
      %v506 = vpack.c.b16 %v478, %v477
      %v507 = vpack.c.b16 %v480, %v479
      %v508 = vpack.c.b16 %v482, %v481
      %v509 = vpack.c.b16 %v484, %v483
      %v510 = vpack.c.b16 %v486, %v485
      %535 = vmatprep.subr.bf16.mxu0 0
      %536 = vmatpush1.bf16.msra.mxu0 %v494
      %537 = vmatprep.subr.bf16.mxu0 0
      %538 = vmatpush1.bf16.msra.mxu0 %v493
      %539 = vmatprep.subr.bf16.mxu0 0
      %540 = vmatpush1.bf16.msra.mxu0 %v492
      %541 = vmatprep.subr.bf16.mxu0 0
      %542 = vmatpush1.bf16.msra.mxu0 %v491
      %543 = vmatprep.subr.bf16.mxu0 0
      %544 = vmatpush1.bf16.msra.mxu0 %v490
      %545 = vmatprep.subr.bf16.mxu0 0
      %546 = vmatpush1.bf16.msra.mxu0 %v489
      %547 = vmatprep.subr.bf16.mxu0 0
      %548 = vmatpush1.bf16.msra.mxu0 %v488
      %549 = vmatprep.subr.bf16.mxu0 0
      %550 = vmatpush1.bf16.msra.mxu0 %v487
      %551 = vmatprep.subr.bf16.mxu0 0
      %552 = vmatpush2.bf16.msra.mxu0 %v502
      %553 = vmatprep.subr.bf16.mxu0 0
      %554 = vmatpush2.bf16.msra.mxu0 %v501
      %555 = vmatprep.subr.bf16.mxu0 0
      %556 = vmatpush2.bf16.msra.mxu0 %v500
      %557 = vmatprep.subr.bf16.mxu0 0
      %558 = vmatpush2.bf16.msra.mxu0 %v499
      %559 = vmatprep.subr.bf16.mxu0 0
      %560 = vmatpush2.bf16.msra.mxu0 %v498
      %561 = vmatprep.subr.bf16.mxu0 0
      %562 = vmatpush2.bf16.msra.mxu0 %v497
      %563 = vmatprep.subr.bf16.mxu0 0
      %564 = vmatpush2.bf16.msra.mxu0 %v496
      %565 = vmatprep.subr.bf16.mxu0 0
      %566 = vmatpush2.bf16.msra.mxu0 %v495
      %567 = vmatprep.mubr.bf16.mxu0 %v368
      %568 = vmatmul.mubr.bf16.gmra.mxu0 %v367
      %v569 = vpop.f32.mrf.mxu0
      %v570 = vadd.f32 0.0, %v569
      %v571 = vpop.f32.mrf.mxu0
      %v572 = vpop.f32.mrf.mxu0
      %v573 = vadd.f32 0.0, %v572
      %v574 = vpop.f32.mrf.mxu0
      %575 = vmatprep.mubr.bf16.mxu0 %v371
      %576 = vmatmul.mubr.bf16.gmra.mxu0 %v370
      %v577 = vpop.f32.mrf.mxu0
      %v578 = vadd.f32 0.0, %v577
      %v579 = vpop.f32.mrf.mxu0
      %v580 = vpop.f32.mrf.mxu0
      %v581 = vadd.f32 0.0, %v580
      %v582 = vpop.f32.mrf.mxu0
      %583 = vmatprep.mubr.bf16.mxu0 %v374
      %584 = vmatmul.mubr.bf16.gmra.mxu0 %v373
      %v585 = vpop.f32.mrf.mxu0
      %v586 = vadd.f32 0.0, %v585
      %v587 = vpop.f32.mrf.mxu0
      %v588 = vpop.f32.mrf.mxu0
      %v589 = vadd.f32 0.0, %v588
      %v590 = vpop.f32.mrf.mxu0
      %591 = vmatprep.mubr.bf16.mxu0 %v377
      %592 = vmatmul.mubr.bf16.gmra.mxu0 %v376
      %v593 = vpop.f32.mrf.mxu0
      %v594 = vadd.f32 0.0, %v593
      %v595 = vpop.f32.mrf.mxu0
      %v596 = vpop.f32.mrf.mxu0
      %v597 = vadd.f32 0.0, %v596
      %v598 = vpop.f32.mrf.mxu0
      %599 = vdwg.mxu0
      %600 = vmatprep.subr.bf16.mxu0 0
      %601 = vmatpush1.bf16.msra.mxu0 %v510
      %602 = vmatprep.subr.bf16.mxu0 0
      %603 = vmatpush1.bf16.msra.mxu0 %v509
      %604 = vmatprep.subr.bf16.mxu0 0
      %605 = vmatpush1.bf16.msra.mxu0 %v508
      %606 = vmatprep.subr.bf16.mxu0 0
      %607 = vmatpush1.bf16.msra.mxu0 %v507
      %608 = vmatprep.subr.bf16.mxu0 0
      %609 = vmatpush1.bf16.msra.mxu0 %v506
      %610 = vmatprep.subr.bf16.mxu0 0
      %611 = vmatpush1.bf16.msra.mxu0 %v505
      %612 = vmatprep.subr.bf16.mxu0 0
      %613 = vmatpush1.bf16.msra.mxu0 %v504
      %614 = vmatprep.subr.bf16.mxu0 0
      %615 = vmatpush1.bf16.msra.mxu0 %v503
      %616 = vmatprep.subr.bf16.mxu0 0
      %617 = vmatpush2.bf16.msra.mxu0 0
      %618 = vmatprep.subr.bf16.mxu0 0
      %619 = vmatpush2.bf16.msra.mxu0 0
      %620 = vmatprep.subr.bf16.mxu0 0
      %621 = vmatpush2.bf16.msra.mxu0 0
      %622 = vmatprep.subr.bf16.mxu0 0
      %623 = vmatpush2.bf16.msra.mxu0 0
      %624 = vmatprep.subr.bf16.mxu0 0
      %625 = vmatpush2.bf16.msra.mxu0 0
      %626 = vmatprep.subr.bf16.mxu0 0
      %627 = vmatpush2.bf16.msra.mxu0 0
      %628 = vmatprep.subr.bf16.mxu0 0
      %629 = vmatpush2.bf16.msra.mxu0 0
      %630 = vmatprep.subr.bf16.mxu0 0
      %631 = vmatpush2.bf16.msra.mxu0 0
      %632 = vmatprep.mubr.bf16.mxu0 0
      %633 = vmatmul.mubr.bf16.gmra.mxu0 %v369
      %v634 = vpop.f32.mrf.mxu0
      %v635 = vadd.f32 %v570, %v634
      %v636 = vpop.f32.mrf.mxu0
      %v637 = vpop.f32.mrf.mxu0
      %v638 = vadd.f32 %v573, %v637
      %v639 = vpop.f32.mrf.mxu0
      %640 = vmatprep.mubr.bf16.mxu0 0
      %641 = vmatmul.mubr.bf16.gmra.mxu0 %v372
      %v642 = vpop.f32.mrf.mxu0
      %v643 = vadd.f32 %v578, %v642
      %v644 = vpop.f32.mrf.mxu0
      %v645 = vpop.f32.mrf.mxu0
      %v646 = vadd.f32 %v581, %v645
      %v647 = vpop.f32.mrf.mxu0
      %648 = vmatprep.mubr.bf16.mxu0 0
      %649 = vmatmul.mubr.bf16.gmra.mxu0 %v375
      %v650 = vpop.f32.mrf.mxu0
      %v651 = vadd.f32 %v586, %v650
      %v652 = vpop.f32.mrf.mxu0
      %v653 = vpop.f32.mrf.mxu0
      %v654 = vadd.f32 %v589, %v653
      %v655 = vpop.f32.mrf.mxu0
      %656 = vmatprep.mubr.bf16.mxu0 0
      %657 = vmatmul.mubr.bf16.gmra.mxu0 %v378
      %v658 = vpop.f32.mrf.mxu0
      %v659 = vadd.f32 %v594, %v658
      %v660 = vpop.f32.mrf.mxu0
      %v661 = vpop.f32.mrf.mxu0
      %v662 = vadd.f32 %v597, %v661
      %v663 = vpop.f32.mrf.mxu0
      %664 = vdwg.mxu0
      %v667 = vunpack.c.l.b16 %v212
      %v668 = vunpack.c.h.b16 %v212
      %v669 = vunpack.c.l.b16 %v213
      %v670 = vpack.c.b16 %v343, %v667
      %v671 = vpack.c.b16 %v344, %v668
      %v672 = vpack.c.b16 %v345, %v669
      %v673 = vpack.c.b16 %v349, %v346
      %v674 = vpack.c.b16 %v350, %v347
      %v675 = vpack.c.b16 %v351, %v348
      %v676 = vpack.c.b16 %v355, %v352
      %v677 = vpack.c.b16 %v356, %v353
      %v678 = vpack.c.b16 %v357, %v354
      %v679 = vpack.c.b16 %v361, %v358
      %v680 = vpack.c.b16 %v362, %v359
      %v681 = vpack.c.b16 %v363, %v360
      %v742 = vunpack.c.l.b16 %v228
      %v743 = vunpack.c.l.b16 %v229
      %v744 = vunpack.c.l.b16 %v230
      %v745 = vunpack.c.l.b16 %v231
      %v746 = vunpack.c.l.b16 %v232
      %v747 = vunpack.c.l.b16 %v233
      %v748 = vunpack.c.l.b16 %v234
      %v749 = vunpack.c.l.b16 %v235
      %v750 = vunpack.c.l.b16 %v236
      %v751 = vunpack.c.l.b16 %v237
      %v752 = vunpack.c.l.b16 %v238
      %v753 = vunpack.c.l.b16 %v239
      %v754 = vunpack.c.l.b16 %v240
      %v755 = vunpack.c.l.b16 %v241
      %v756 = vunpack.c.l.b16 %v242
      %v757 = vunpack.c.l.b16 %v243
      %v758 = vunpack.c.l.b16 %v244
      %v759 = vunpack.c.l.b16 %v245
      %v760 = vunpack.c.l.b16 %v246
      %v761 = vunpack.c.l.b16 %v247
      %v762 = vunpack.c.l.b16 %v248
      %v763 = vunpack.c.l.b16 %v249
      %v764 = vunpack.c.l.b16 %v250
      %v765 = vunpack.c.l.b16 %v251
      %v766 = vunpack.c.l.b16 %v252
      %v767 = vunpack.c.l.b16 %v253
      %v768 = vunpack.c.l.b16 %v254
      %v769 = vunpack.c.l.b16 %v255
      %v770 = vunpack.c.l.b16 %v256
      %v771 = vunpack.c.l.b16 %v257
      %v772 = vunpack.c.l.b16 %v258
      %v773 = vunpack.c.l.b16 %v259
      %v774 = vunpack.c.l.b16 %v260
      %v775 = vunpack.c.l.b16 %v261
      %v776 = vunpack.c.l.b16 %v262
      %v777 = vunpack.c.l.b16 %v263
      %v778 = vunpack.c.l.b16 %v264
      %v779 = vunpack.c.l.b16 %v265
      %v780 = vunpack.c.l.b16 %v266
      %v781 = vunpack.c.l.b16 %v267
      %v782 = vunpack.c.l.b16 %v268
      %v783 = vunpack.c.l.b16 %v269
      %v784 = vunpack.c.l.b16 %v270
      %v785 = vunpack.c.l.b16 %v271
      %v786 = vunpack.c.l.b16 %v272
      %v787 = vunpack.c.l.b16 %v273
      %v788 = vunpack.c.l.b16 %v274
      %v789 = vunpack.c.l.b16 %v275
      %v790 = vpack.c.b16 %v743, %v742
      %v791 = vpack.c.b16 %v745, %v744
      %v792 = vpack.c.b16 %v747, %v746
      %v793 = vpack.c.b16 %v749, %v748
      %v794 = vpack.c.b16 %v751, %v750
      %v795 = vpack.c.b16 %v753, %v752
      %v796 = vpack.c.b16 %v755, %v754
      %v797 = vpack.c.b16 %v757, %v756
      %v798 = vpack.c.b16 %v759, %v758
      %v799 = vpack.c.b16 %v761, %v760
      %v800 = vpack.c.b16 %v763, %v762
      %v801 = vpack.c.b16 %v765, %v764
      %v802 = vpack.c.b16 %v767, %v766
      %v803 = vpack.c.b16 %v769, %v768
      %v804 = vpack.c.b16 %v771, %v770
      %v805 = vpack.c.b16 %v773, %v772
      %v806 = vpack.c.b16 %v775, %v774
      %v807 = vpack.c.b16 %v777, %v776
      %v808 = vpack.c.b16 %v779, %v778
      %v809 = vpack.c.b16 %v781, %v780
      %v810 = vpack.c.b16 %v783, %v782
      %v811 = vpack.c.b16 %v785, %v784
      %v812 = vpack.c.b16 %v787, %v786
      %v813 = vpack.c.b16 %v789, %v788
      %838 = vmatprep.subr.bf16.mxu0 0
      %839 = vmatpush1.bf16.msra.mxu0 %v797
      %840 = vmatprep.subr.bf16.mxu0 0
      %841 = vmatpush1.bf16.msra.mxu0 %v796
      %842 = vmatprep.subr.bf16.mxu0 0
      %843 = vmatpush1.bf16.msra.mxu0 %v795
      %844 = vmatprep.subr.bf16.mxu0 0
      %845 = vmatpush1.bf16.msra.mxu0 %v794
      %846 = vmatprep.subr.bf16.mxu0 0
      %847 = vmatpush1.bf16.msra.mxu0 %v793
      %848 = vmatprep.subr.bf16.mxu0 0
      %849 = vmatpush1.bf16.msra.mxu0 %v792
      %850 = vmatprep.subr.bf16.mxu0 0
      %851 = vmatpush1.bf16.msra.mxu0 %v791
      %852 = vmatprep.subr.bf16.mxu0 0
      %853 = vmatpush1.bf16.msra.mxu0 %v790
      %854 = vmatprep.subr.bf16.mxu0 0
      %855 = vmatpush2.bf16.msra.mxu0 %v805
      %856 = vmatprep.subr.bf16.mxu0 0
      %857 = vmatpush2.bf16.msra.mxu0 %v804
      %858 = vmatprep.subr.bf16.mxu0 0
      %859 = vmatpush2.bf16.msra.mxu0 %v803
      %860 = vmatprep.subr.bf16.mxu0 0
      %861 = vmatpush2.bf16.msra.mxu0 %v802
      %862 = vmatprep.subr.bf16.mxu0 0
      %863 = vmatpush2.bf16.msra.mxu0 %v801
      %864 = vmatprep.subr.bf16.mxu0 0
      %865 = vmatpush2.bf16.msra.mxu0 %v800
      %866 = vmatprep.subr.bf16.mxu0 0
      %867 = vmatpush2.bf16.msra.mxu0 %v799
      %868 = vmatprep.subr.bf16.mxu0 0
      %869 = vmatpush2.bf16.msra.mxu0 %v798
      %870 = vmatprep.mubr.bf16.mxu0 %v671
      %871 = vmatmul.mubr.bf16.gmra.mxu0 %v670
      %v872 = vpop.f32.mrf.mxu0
      %v873 = vadd.f32 %v635, %v872
      %v874 = vpop.f32.mrf.mxu0
      %v875 = vpop.f32.mrf.mxu0
      %v876 = vadd.f32 %v638, %v875
      %v877 = vpop.f32.mrf.mxu0
      %878 = vmatprep.mubr.bf16.mxu0 %v674
      %879 = vmatmul.mubr.bf16.gmra.mxu0 %v673
      %v880 = vpop.f32.mrf.mxu0
      %v881 = vadd.f32 %v643, %v880
      %v882 = vpop.f32.mrf.mxu0
      %v883 = vpop.f32.mrf.mxu0
      %v884 = vadd.f32 %v646, %v883
      %v885 = vpop.f32.mrf.mxu0
      %886 = vmatprep.mubr.bf16.mxu0 %v677
      %887 = vmatmul.mubr.bf16.gmra.mxu0 %v676
      %v888 = vpop.f32.mrf.mxu0
      %v889 = vadd.f32 %v651, %v888
      %v890 = vpop.f32.mrf.mxu0
      %v891 = vpop.f32.mrf.mxu0
      %v892 = vadd.f32 %v654, %v891
      %v893 = vpop.f32.mrf.mxu0
      %894 = vmatprep.mubr.bf16.mxu0 %v680
      %895 = vmatmul.mubr.bf16.gmra.mxu0 %v679
      %v896 = vpop.f32.mrf.mxu0
      %v897 = vadd.f32 %v659, %v896
      %v898 = vpop.f32.mrf.mxu0
      %v899 = vpop.f32.mrf.mxu0
      %v900 = vadd.f32 %v662, %v899
      %v901 = vpop.f32.mrf.mxu0
      %902 = vdwg.mxu0
      %903 = vmatprep.subr.bf16.mxu0 0
      %904 = vmatpush1.bf16.msra.mxu0 %v813
      %905 = vmatprep.subr.bf16.mxu0 0
      %906 = vmatpush1.bf16.msra.mxu0 %v812
      %907 = vmatprep.subr.bf16.mxu0 0
      %908 = vmatpush1.bf16.msra.mxu0 %v811
      %909 = vmatprep.subr.bf16.mxu0 0
      %910 = vmatpush1.bf16.msra.mxu0 %v810
      %911 = vmatprep.subr.bf16.mxu0 0
      %912 = vmatpush1.bf16.msra.mxu0 %v809
      %913 = vmatprep.subr.bf16.mxu0 0
      %914 = vmatpush1.bf16.msra.mxu0 %v808
      %915 = vmatprep.subr.bf16.mxu0 0
      %916 = vmatpush1.bf16.msra.mxu0 %v807
      %917 = vmatprep.subr.bf16.mxu0 0
      %918 = vmatpush1.bf16.msra.mxu0 %v806
      %919 = vmatprep.subr.bf16.mxu0 0
      %920 = vmatpush2.bf16.msra.mxu0 0
      %921 = vmatprep.subr.bf16.mxu0 0
      %922 = vmatpush2.bf16.msra.mxu0 0
      %923 = vmatprep.subr.bf16.mxu0 0
      %924 = vmatpush2.bf16.msra.mxu0 0
      %925 = vmatprep.subr.bf16.mxu0 0
      %926 = vmatpush2.bf16.msra.mxu0 0
      %927 = vmatprep.subr.bf16.mxu0 0
      %928 = vmatpush2.bf16.msra.mxu0 0
      %929 = vmatprep.subr.bf16.mxu0 0
      %930 = vmatpush2.bf16.msra.mxu0 0
      %931 = vmatprep.subr.bf16.mxu0 0
      %932 = vmatpush2.bf16.msra.mxu0 0
      %933 = vmatprep.subr.bf16.mxu0 0
      %934 = vmatpush2.bf16.msra.mxu0 0
      %935 = vmatprep.mubr.bf16.mxu0 0
      %936 = vmatmul.mubr.bf16.gmra.mxu0 %v672
      %v937 = vpop.f32.mrf.mxu0
      %v938 = vadd.f32 %v873, %v937
      %v939 = vpop.f32.mrf.mxu0
      %v940 = vpop.f32.mrf.mxu0
      %v941 = vadd.f32 %v876, %v940
      %v942 = vpop.f32.mrf.mxu0
      %943 = vmatprep.mubr.bf16.mxu0 0
      %944 = vmatmul.mubr.bf16.gmra.mxu0 %v675
      %v945 = vpop.f32.mrf.mxu0
      %v946 = vadd.f32 %v881, %v945
      %v947 = vpop.f32.mrf.mxu0
      %v948 = vpop.f32.mrf.mxu0
      %v949 = vadd.f32 %v884, %v948
      %v950 = vpop.f32.mrf.mxu0
      %951 = vmatprep.mubr.bf16.mxu0 0
      %952 = vmatmul.mubr.bf16.gmra.mxu0 %v678
      %v953 = vpop.f32.mrf.mxu0
      %v954 = vadd.f32 %v889, %v953
      %v955 = vpop.f32.mrf.mxu0
      %v956 = vpop.f32.mrf.mxu0
      %v957 = vadd.f32 %v892, %v956
      %v958 = vpop.f32.mrf.mxu0
      %959 = vmatprep.mubr.bf16.mxu0 0
      %960 = vmatmul.mubr.bf16.gmra.mxu0 %v681
      %v961 = vpop.f32.mrf.mxu0
      %v962 = vadd.f32 %v897, %v961
      %v963 = vpop.f32.mrf.mxu0
      %v964 = vpop.f32.mrf.mxu0
      %v965 = vadd.f32 %v900, %v964
      %v966 = vpop.f32.mrf.mxu0
      %967 = vdwg.mxu0
      %v968 = vld [vmem:[%s200 + $0x18] sm:$0xff]
      %v969 = vld [vmem:[%s200 + $0x20] sm:$0xf]
      %v970 = vld [vmem:[%s200 + $0x24] sm:$0xff]
      %v971 = vld [vmem:[%s200 + $0x2c] sm:$0xf]
      %v972 = vld [vmem:[%s200 + $0x30] sm:$0xff]
      %v973 = vld [vmem:[%s200 + $0x38] sm:$0xf]
      %v974 = vld [vmem:[%s200 + $0x3c] sm:$0xff]
      %v975 = vld [vmem:[%s200 + $0x44] sm:$0xf]
      %v976 = vld [vmem:[%s200 + $0x48] sm:$0xff]
      %v977 = vld [vmem:[%s200 + $0x50] sm:$0xf]
      %v978 = vld [vmem:[%s200 + $0x54] sm:$0xff]
      %v979 = vld [vmem:[%s200 + $0x5c] sm:$0xf]
      %v980 = vld [vmem:[%s200 + $0x60] sm:$0xff]
      %v981 = vld [vmem:[%s200 + $0x68] sm:$0xf]
      %v982 = vld [vmem:[%s200 + $0x6c] sm:$0xff]
      %v983 = vld [vmem:[%s200 + $0x74] sm:$0xf]
      %s984 = scalar_lea.vmem %s1, 384
      %v985 = vld [vmem:[%s984] sm:$0xf]
      %v986 = vld [vmem:[%s984 + $0x4] sm:$0xf]
      %v987 = vld [vmem:[%s984 + $0x8] sm:$0xf]
      %v988 = vld [vmem:[%s984 + $0xc] sm:$0xf]
      %v989 = vld [vmem:[%s984 + $0x10] sm:$0xf]
      %v990 = vld [vmem:[%s984 + $0x14] sm:$0xf]
      %v991 = vld [vmem:[%s984 + $0x18] sm:$0xf]
      %v992 = vld [vmem:[%s984 + $0x1c] sm:$0xf]
      %v993 = vld [vmem:[%s984 + $0x20] sm:$0xf]
      %v994 = vld [vmem:[%s984 + $0x24] sm:$0xf]
      %v995 = vld [vmem:[%s984 + $0x28] sm:$0xf]
      %v996 = vld [vmem:[%s984 + $0x2c] sm:$0xf]
      %v997 = vld [vmem:[%s984 + $0x30] sm:$0xf]
      %v998 = vld [vmem:[%s984 + $0x34] sm:$0xf]
      %v999 = vld [vmem:[%s984 + $0x38] sm:$0xf]
      %v1000 = vld [vmem:[%s984 + $0x3c] sm:$0xf]
      %v1001 = vld [vmem:[%s984 + $0x40] sm:$0xf]
      %v1002 = vld [vmem:[%s984 + $0x44] sm:$0xf]
      %v1003 = vld [vmem:[%s984 + $0x48] sm:$0xf]
      %v1004 = vld [vmem:[%s984 + $0x4c] sm:$0xf]
      %v1005 = vld [vmem:[%s984 + $0x50] sm:$0xf]
      %v1006 = vld [vmem:[%s984 + $0x54] sm:$0xf]
      %v1007 = vld [vmem:[%s984 + $0x58] sm:$0xf]
      %v1008 = vld [vmem:[%s984 + $0x5c] sm:$0xf]
      %v1009 = vld [vmem:[%s984 + $0x60] sm:$0xf]
      %v1010 = vld [vmem:[%s984 + $0x64] sm:$0xf]
      %v1011 = vld [vmem:[%s984 + $0x68] sm:$0xf]
      %v1012 = vld [vmem:[%s984 + $0x6c] sm:$0xf]
      %v1013 = vld [vmem:[%s984 + $0x70] sm:$0xf]
      %v1014 = vld [vmem:[%s984 + $0x74] sm:$0xf]
      %v1015 = vld [vmem:[%s984 + $0x78] sm:$0xf]
      %v1016 = vld [vmem:[%s984 + $0x7c] sm:$0xf]
      %v1017 = vld [vmem:[%s984 + $0x80] sm:$0xf]
      %v1018 = vld [vmem:[%s984 + $0x84] sm:$0xf]
      %v1019 = vld [vmem:[%s984 + $0x88] sm:$0xf]
      %v1020 = vld [vmem:[%s984 + $0x8c] sm:$0xf]
      %v1021 = vld [vmem:[%s984 + $0x90] sm:$0xf]
      %v1022 = vld [vmem:[%s984 + $0x94] sm:$0xf]
      %v1023 = vld [vmem:[%s984 + $0x98] sm:$0xf]
      %v1024 = vld [vmem:[%s984 + $0x9c] sm:$0xf]
      %v1025 = vld [vmem:[%s984 + $0xa0] sm:$0xf]
      %v1026 = vld [vmem:[%s984 + $0xa4] sm:$0xf]
      %v1027 = vld [vmem:[%s984 + $0xa8] sm:$0xf]
      %v1028 = vld [vmem:[%s984 + $0xac] sm:$0xf]
      %v1029 = vld [vmem:[%s984 + $0xb0] sm:$0xf]
      %v1030 = vld [vmem:[%s984 + $0xb4] sm:$0xf]
      %v1031 = vld [vmem:[%s984 + $0xb8] sm:$0xf]
      %v1032 = vld [vmem:[%s984 + $0xbc] sm:$0xf]
      %v1049 = vunpack.c.l.b16 %v968
      %v1050 = vunpack.c.h.b16 %v968
      %v1051 = vunpack.c.l.b16 %v969
      %v1052 = vunpack.c.l.b16 %v970
      %v1053 = vunpack.c.h.b16 %v970
      %v1054 = vunpack.c.l.b16 %v971
      %v1055 = vunpack.c.l.b16 %v972
      %v1056 = vunpack.c.h.b16 %v972
      %v1057 = vunpack.c.l.b16 %v973
      %v1058 = vunpack.c.l.b16 %v974
      %v1059 = vunpack.c.h.b16 %v974
      %v1060 = vunpack.c.l.b16 %v975
      %v1061 = vunpack.c.l.b16 %v976
      %v1062 = vunpack.c.h.b16 %v976
      %v1063 = vunpack.c.l.b16 %v977
      %v1064 = vunpack.c.l.b16 %v978
      %v1065 = vunpack.c.h.b16 %v978
      %v1066 = vunpack.c.l.b16 %v979
      %v1067 = vunpack.c.l.b16 %v980
      %v1068 = vunpack.c.h.b16 %v980
      %v1069 = vunpack.c.l.b16 %v981
      %v1070 = vunpack.c.l.b16 %v982
      %v1071 = vunpack.c.h.b16 %v982
      %v1072 = vunpack.c.l.b16 %v983
      %v1073 = vpack.c.b16 %v1052, %v1049
      %v1074 = vpack.c.b16 %v1053, %v1050
      %v1075 = vpack.c.b16 %v1054, %v1051
      %v1076 = vpack.c.b16 %v1058, %v1055
      %v1077 = vpack.c.b16 %v1059, %v1056
      %v1078 = vpack.c.b16 %v1060, %v1057
      %v1079 = vpack.c.b16 %v1064, %v1061
      %v1080 = vpack.c.b16 %v1065, %v1062
      %v1081 = vpack.c.b16 %v1066, %v1063
      %v1082 = vpack.c.b16 %v1070, %v1067
      %v1083 = vpack.c.b16 %v1071, %v1068
      %v1084 = vpack.c.b16 %v1072, %v1069
      %v1145 = vunpack.c.l.b16 %v985
      %v1146 = vunpack.c.l.b16 %v986
      %v1147 = vunpack.c.l.b16 %v987
      %v1148 = vunpack.c.l.b16 %v988
      %v1149 = vunpack.c.l.b16 %v989
      %v1150 = vunpack.c.l.b16 %v990
      %v1151 = vunpack.c.l.b16 %v991
      %v1152 = vunpack.c.l.b16 %v992
      %v1153 = vunpack.c.l.b16 %v993
      %v1154 = vunpack.c.l.b16 %v994
      %v1155 = vunpack.c.l.b16 %v995
      %v1156 = vunpack.c.l.b16 %v996
      %v1157 = vunpack.c.l.b16 %v997
      %v1158 = vunpack.c.l.b16 %v998
      %v1159 = vunpack.c.l.b16 %v999
      %v1160 = vunpack.c.l.b16 %v1000
      %v1161 = vunpack.c.l.b16 %v1001
      %v1162 = vunpack.c.l.b16 %v1002
      %v1163 = vunpack.c.l.b16 %v1003
      %v1164 = vunpack.c.l.b16 %v1004
      %v1165 = vunpack.c.l.b16 %v1005
      %v1166 = vunpack.c.l.b16 %v1006
      %v1167 = vunpack.c.l.b16 %v1007
      %v1168 = vunpack.c.l.b16 %v1008
      %v1169 = vunpack.c.l.b16 %v1009
      %v1170 = vunpack.c.l.b16 %v1010
      %v1171 = vunpack.c.l.b16 %v1011
      %v1172 = vunpack.c.l.b16 %v1012
      %v1173 = vunpack.c.l.b16 %v1013
      %v1174 = vunpack.c.l.b16 %v1014
      %v1175 = vunpack.c.l.b16 %v1015
      %v1176 = vunpack.c.l.b16 %v1016
      %v1177 = vunpack.c.l.b16 %v1017
      %v1178 = vunpack.c.l.b16 %v1018
      %v1179 = vunpack.c.l.b16 %v1019
      %v1180 = vunpack.c.l.b16 %v1020
      %v1181 = vunpack.c.l.b16 %v1021
      %v1182 = vunpack.c.l.b16 %v1022
      %v1183 = vunpack.c.l.b16 %v1023
      %v1184 = vunpack.c.l.b16 %v1024
      %v1185 = vunpack.c.l.b16 %v1025
      %v1186 = vunpack.c.l.b16 %v1026
      %v1187 = vunpack.c.l.b16 %v1027
      %v1188 = vunpack.c.l.b16 %v1028
      %v1189 = vunpack.c.l.b16 %v1029
      %v1190 = vunpack.c.l.b16 %v1030
      %v1191 = vunpack.c.l.b16 %v1031
      %v1192 = vunpack.c.l.b16 %v1032
      %v1193 = vpack.c.b16 %v1146, %v1145
      %v1194 = vpack.c.b16 %v1148, %v1147
      %v1195 = vpack.c.b16 %v1150, %v1149
      %v1196 = vpack.c.b16 %v1152, %v1151
      %v1197 = vpack.c.b16 %v1154, %v1153
      %v1198 = vpack.c.b16 %v1156, %v1155
      %v1199 = vpack.c.b16 %v1158, %v1157
      %v1200 = vpack.c.b16 %v1160, %v1159
      %v1201 = vpack.c.b16 %v1162, %v1161
      %v1202 = vpack.c.b16 %v1164, %v1163
      %v1203 = vpack.c.b16 %v1166, %v1165
      %v1204 = vpack.c.b16 %v1168, %v1167
      %v1205 = vpack.c.b16 %v1170, %v1169
      %v1206 = vpack.c.b16 %v1172, %v1171
      %v1207 = vpack.c.b16 %v1174, %v1173
      %v1208 = vpack.c.b16 %v1176, %v1175
      %v1209 = vpack.c.b16 %v1178, %v1177
      %v1210 = vpack.c.b16 %v1180, %v1179
      %v1211 = vpack.c.b16 %v1182, %v1181
      %v1212 = vpack.c.b16 %v1184, %v1183
      %v1213 = vpack.c.b16 %v1186, %v1185
      %v1214 = vpack.c.b16 %v1188, %v1187
      %v1215 = vpack.c.b16 %v1190, %v1189
      %v1216 = vpack.c.b16 %v1192, %v1191
      %1241 = vmatprep.subr.bf16.mxu0 0
      %1242 = vmatpush1.bf16.msra.mxu0 %v1200
      %1243 = vmatprep.subr.bf16.mxu0 0
      %1244 = vmatpush1.bf16.msra.mxu0 %v1199
      %1245 = vmatprep.subr.bf16.mxu0 0
      %1246 = vmatpush1.bf16.msra.mxu0 %v1198
      %1247 = vmatprep.subr.bf16.mxu0 0
      %1248 = vmatpush1.bf16.msra.mxu0 %v1197
      %1249 = vmatprep.subr.bf16.mxu0 0
      %1250 = vmatpush1.bf16.msra.mxu0 %v1196
      %1251 = vmatprep.subr.bf16.mxu0 0
      %1252 = vmatpush1.bf16.msra.mxu0 %v1195
      %1253 = vmatprep.subr.bf16.mxu0 0
      %1254 = vmatpush1.bf16.msra.mxu0 %v1194
      %1255 = vmatprep.subr.bf16.mxu0 0
      %1256 = vmatpush1.bf16.msra.mxu0 %v1193
      %1257 = vmatprep.subr.bf16.mxu0 0
      %1258 = vmatpush2.bf16.msra.mxu0 %v1208
      %1259 = vmatprep.subr.bf16.mxu0 0
      %1260 = vmatpush2.bf16.msra.mxu0 %v1207
      %1261 = vmatprep.subr.bf16.mxu0 0
      %1262 = vmatpush2.bf16.msra.mxu0 %v1206
      %1263 = vmatprep.subr.bf16.mxu0 0
      %1264 = vmatpush2.bf16.msra.mxu0 %v1205
      %1265 = vmatprep.subr.bf16.mxu0 0
      %1266 = vmatpush2.bf16.msra.mxu0 %v1204
      %1267 = vmatprep.subr.bf16.mxu0 0
      %1268 = vmatpush2.bf16.msra.mxu0 %v1203
      %1269 = vmatprep.subr.bf16.mxu0 0
      %1270 = vmatpush2.bf16.msra.mxu0 %v1202
      %1271 = vmatprep.subr.bf16.mxu0 0
      %1272 = vmatpush2.bf16.msra.mxu0 %v1201
      %1273 = vmatprep.mubr.bf16.mxu0 %v1074
      %1274 = vmatmul.mubr.bf16.gmra.mxu0 %v1073
      %v1275 = vpop.f32.mrf.mxu0
      %v1276 = vadd.f32 0.0, %v1275
      %v1277 = vpop.f32.mrf.mxu0
      %v1278 = vpop.f32.mrf.mxu0
      %v1279 = vadd.f32 0.0, %v1278
      %v1280 = vpop.f32.mrf.mxu0
      %1281 = vmatprep.mubr.bf16.mxu0 %v1077
      %1282 = vmatmul.mubr.bf16.gmra.mxu0 %v1076
      %v1283 = vpop.f32.mrf.mxu0
      %v1284 = vadd.f32 0.0, %v1283
      %v1285 = vpop.f32.mrf.mxu0
      %v1286 = vpop.f32.mrf.mxu0
      %v1287 = vadd.f32 0.0, %v1286
      %v1288 = vpop.f32.mrf.mxu0
      %1289 = vmatprep.mubr.bf16.mxu0 %v1080
      %1290 = vmatmul.mubr.bf16.gmra.mxu0 %v1079
      %v1291 = vpop.f32.mrf.mxu0
      %v1292 = vadd.f32 0.0, %v1291
      %v1293 = vpop.f32.mrf.mxu0
      %v1294 = vpop.f32.mrf.mxu0
      %v1295 = vadd.f32 0.0, %v1294
      %v1296 = vpop.f32.mrf.mxu0
      %1297 = vmatprep.mubr.bf16.mxu0 %v1083
      %1298 = vmatmul.mubr.bf16.gmra.mxu0 %v1082
      %v1299 = vpop.f32.mrf.mxu0
      %v1300 = vadd.f32 0.0, %v1299
      %v1301 = vpop.f32.mrf.mxu0
      %v1302 = vpop.f32.mrf.mxu0
      %v1303 = vadd.f32 0.0, %v1302
      %v1304 = vpop.f32.mrf.mxu0
      %1305 = vdwg.mxu0
      %1306 = vmatprep.subr.bf16.mxu0 0
      %1307 = vmatpush1.bf16.msra.mxu0 %v1216
      %1308 = vmatprep.subr.bf16.mxu0 0
      %1309 = vmatpush1.bf16.msra.mxu0 %v1215
      %1310 = vmatprep.subr.bf16.mxu0 0
      %1311 = vmatpush1.bf16.msra.mxu0 %v1214
      %1312 = vmatprep.subr.bf16.mxu0 0
      %1313 = vmatpush1.bf16.msra.mxu0 %v1213
      %1314 = vmatprep.subr.bf16.mxu0 0
      %1315 = vmatpush1.bf16.msra.mxu0 %v1212
      %1316 = vmatprep.subr.bf16.mxu0 0
      %1317 = vmatpush1.bf16.msra.mxu0 %v1211
      %1318 = vmatprep.subr.bf16.mxu0 0
      %1319 = vmatpush1.bf16.msra.mxu0 %v1210
      %1320 = vmatprep.subr.bf16.mxu0 0
      %1321 = vmatpush1.bf16.msra.mxu0 %v1209
      %1322 = vmatprep.subr.bf16.mxu0 0
      %1323 = vmatpush2.bf16.msra.mxu0 0
      %1324 = vmatprep.subr.bf16.mxu0 0
      %1325 = vmatpush2.bf16.msra.mxu0 0
      %1326 = vmatprep.subr.bf16.mxu0 0
      %1327 = vmatpush2.bf16.msra.mxu0 0
      %1328 = vmatprep.subr.bf16.mxu0 0
      %1329 = vmatpush2.bf16.msra.mxu0 0
      %1330 = vmatprep.subr.bf16.mxu0 0
      %1331 = vmatpush2.bf16.msra.mxu0 0
      %1332 = vmatprep.subr.bf16.mxu0 0
      %1333 = vmatpush2.bf16.msra.mxu0 0
      %1334 = vmatprep.subr.bf16.mxu0 0
      %1335 = vmatpush2.bf16.msra.mxu0 0
      %1336 = vmatprep.subr.bf16.mxu0 0
      %1337 = vmatpush2.bf16.msra.mxu0 0
      %1338 = vmatprep.mubr.bf16.mxu0 0
      %1339 = vmatmul.mubr.bf16.gmra.mxu0 %v1075
      %v1340 = vpop.f32.mrf.mxu0
      %v1341 = vadd.f32 %v1276, %v1340
      %v1342 = vpop.f32.mrf.mxu0
      %v1343 = vpop.f32.mrf.mxu0
      %v1344 = vadd.f32 %v1279, %v1343
      %v1345 = vpop.f32.mrf.mxu0
      %1346 = vmatprep.mubr.bf16.mxu0 0
      %1347 = vmatmul.mubr.bf16.gmra.mxu0 %v1078
      %v1348 = vpop.f32.mrf.mxu0
      %v1349 = vadd.f32 %v1284, %v1348
      %v1350 = vpop.f32.mrf.mxu0
      %v1351 = vpop.f32.mrf.mxu0
      %v1352 = vadd.f32 %v1287, %v1351
      %v1353 = vpop.f32.mrf.mxu0
      %1354 = vmatprep.mubr.bf16.mxu0 0
      %1355 = vmatmul.mubr.bf16.gmra.mxu0 %v1081
      %v1356 = vpop.f32.mrf.mxu0
      %v1357 = vadd.f32 %v1292, %v1356
      %v1358 = vpop.f32.mrf.mxu0
      %v1359 = vpop.f32.mrf.mxu0
      %v1360 = vadd.f32 %v1295, %v1359
      %v1361 = vpop.f32.mrf.mxu0
      %1362 = vmatprep.mubr.bf16.mxu0 0
      %1363 = vmatmul.mubr.bf16.gmra.mxu0 %v1084
      %v1364 = vpop.f32.mrf.mxu0
      %v1365 = vadd.f32 %v1300, %v1364
      %v1366 = vpop.f32.mrf.mxu0
      %v1367 = vpop.f32.mrf.mxu0
      %v1368 = vadd.f32 %v1303, %v1367
      %v1369 = vpop.f32.mrf.mxu0
      %1370 = vdwg.mxu0
      %v1371 = vadd.f32 %v938, %v1341
      %v1372 = vadd.f32 %v941, %v1344
      %v1373 = vadd.f32 %v946, %v1349
      %v1374 = vadd.f32 %v949, %v1352
      %v1375 = vadd.f32 %v954, %v1357
      %v1376 = vadd.f32 %v957, %v1360
      %v1377 = vadd.f32 %v962, %v1365
      %v1378 = vadd.f32 %v965, %v1368
      %v1379 = vld [vmem:[%s2] sm:$0x1]
      %v1381 = vlaneseq
      %v1382 = vshrl.u32 %v1381, 7
      %v1383 = vsub.s32 0, %v1382
      %v1384 = vrot.slane %v1379, %v1383
      %v1386 = vadd.f32 %v1371, %v1384
      %v1387 = vadd.f32 %v1372, %v1384
      %v1388 = vadd.f32 %v1373, %v1384
      %v1389 = vadd.f32 %v1374, %v1384
      %v1390 = vadd.f32 %v1375, %v1384
      %v1391 = vadd.f32 %v1376, %v1384
      %v1392 = vadd.f32 %v1377, %v1384
      %v1393 = vadd.f32 %v1378, %v1384
      %v1394 = vmax.f32 %v1386, 0.0
      %v1395 = vmax.f32 %v1387, 0.0
      %v1396 = vmax.f32 %v1388, 0.0
      %v1397 = vmax.f32 %v1389, 0.0
      %v1398 = vmax.f32 %v1390, 0.0
      %v1399 = vmax.f32 %v1391, 0.0
      %v1400 = vmax.f32 %v1392, 0.0
      %v1401 = vmax.f32 %v1393, 0.0
      %v1402 = vpack.c.bf16 %v1394, %v1394
      %v1403 = vpack.c.bf16 %v1395, %v1395
      %v1404 = vpack.c.bf16 %v1396, %v1396
      %v1405 = vpack.c.bf16 %v1397, %v1397
      %v1406 = vpack.c.bf16 %v1398, %v1398
      %v1407 = vpack.c.bf16 %v1399, %v1399
      %v1408 = vpack.c.bf16 %v1400, %v1400
      %v1409 = vpack.c.bf16 %v1401, %v1401
      %1410 = vst [vmem:[%s205] sm:$0xf] %v1402
      %1411 = vst [vmem:[%s205 + $0x4] sm:$0xf] %v1403
      %1412 = vst [vmem:[%s205 + $0x8] sm:$0xf] %v1404
      %1413 = vst [vmem:[%s205 + $0xc] sm:$0xf] %v1405
      %1414 = vst [vmem:[%s205 + $0x10] sm:$0xf] %v1406
      %1415 = vst [vmem:[%s205 + $0x14] sm:$0xf] %v1407
      %1416 = vst [vmem:[%s205 + $0x18] sm:$0xf] %v1408
      %1417 = vst [vmem:[%s205 + $0x1c] sm:$0xf] %v1409
      %v1426 = vcombine.high %v1394, %v1394
      %v1428 = vunpack.c.l.s4 1983009808
      %v1429 = vunpack.c.0.s8 %v1428
      %v1430 = vlaneseq
      %v1431 = vshrl.u32 %v1430, 7
      %v1432 = vsub.s32 %v1429, %v1431
      %v1433 = vrot.slane %v1394, %v1432
      %v1435 = vunpack.c.l.s4 1983009808
      %v1436 = vunpack.c.0.s8 %v1435
      %v1437 = vlaneseq
      %v1438 = vshrl.u32 %v1437, 7
      %v1439 = vsub.s32 %v1436, %v1438
      %v1440 = vrot.slane %v1426, %v1439
      %v1441 = vcombine.high %v1433, %v1433
      %v1442 = vcombine.high %v1440, %v1440
      %v1443 = vcombine.high %v1395, %v1395
      %v1445 = vunpack.c.l.s4 1983009808
      %v1446 = vunpack.c.0.s8 %v1445
      %v1447 = vlaneseq
      %v1448 = vshrl.u32 %v1447, 7
      %v1449 = vsub.s32 %v1446, %v1448
      %v1450 = vrot.slane %v1395, %v1449
      %v1452 = vunpack.c.l.s4 1983009808
      %v1453 = vunpack.c.0.s8 %v1452
      %v1454 = vlaneseq
      %v1455 = vshrl.u32 %v1454, 7
      %v1456 = vsub.s32 %v1453, %v1455
      %v1457 = vrot.slane %v1443, %v1456
      %v1458 = vcombine.high %v1450, %v1450
      %v1459 = vcombine.high %v1457, %v1457
      %v1460 = vcombine.high %v1396, %v1396
      %v1462 = vunpack.c.l.s4 1983009808
      %v1463 = vunpack.c.0.s8 %v1462
      %v1464 = vlaneseq
      %v1465 = vshrl.u32 %v1464, 7
      %v1466 = vsub.s32 %v1463, %v1465
      %v1467 = vrot.slane %v1396, %v1466
      %v1469 = vunpack.c.l.s4 1983009808
      %v1470 = vunpack.c.0.s8 %v1469
      %v1471 = vlaneseq
      %v1472 = vshrl.u32 %v1471, 7
      %v1473 = vsub.s32 %v1470, %v1472
      %v1474 = vrot.slane %v1460, %v1473
      %v1475 = vcombine.high %v1467, %v1467
      %v1476 = vcombine.high %v1474, %v1474
      %v1477 = vcombine.high %v1397, %v1397
      %v1479 = vunpack.c.l.s4 1983009808
      %v1480 = vunpack.c.0.s8 %v1479
      %v1481 = vlaneseq
      %v1482 = vshrl.u32 %v1481, 7
      %v1483 = vsub.s32 %v1480, %v1482
      %v1484 = vrot.slane %v1397, %v1483
      %v1486 = vunpack.c.l.s4 1983009808
      %v1487 = vunpack.c.0.s8 %v1486
      %v1488 = vlaneseq
      %v1489 = vshrl.u32 %v1488, 7
      %v1490 = vsub.s32 %v1487, %v1489
      %v1491 = vrot.slane %v1477, %v1490
      %v1492 = vcombine.high %v1484, %v1484
      %v1493 = vcombine.high %v1491, %v1491
      %v1494 = vcombine.high %v1398, %v1398
      %v1496 = vunpack.c.l.s4 1983009808
      %v1497 = vunpack.c.0.s8 %v1496
      %v1498 = vlaneseq
      %v1499 = vshrl.u32 %v1498, 7
      %v1500 = vsub.s32 %v1497, %v1499
      %v1501 = vrot.slane %v1398, %v1500
      %v1503 = vunpack.c.l.s4 1983009808
      %v1504 = vunpack.c.0.s8 %v1503
      %v1505 = vlaneseq
      %v1506 = vshrl.u32 %v1505, 7
      %v1507 = vsub.s32 %v1504, %v1506
      %v1508 = vrot.slane %v1494, %v1507
      %v1509 = vcombine.high %v1501, %v1501
      %v1510 = vcombine.high %v1508, %v1508
      %v1511 = vcombine.high %v1399, %v1399
      %v1513 = vunpack.c.l.s4 1983009808
      %v1514 = vunpack.c.0.s8 %v1513
      %v1515 = vlaneseq
      %v1516 = vshrl.u32 %v1515, 7
      %v1517 = vsub.s32 %v1514, %v1516
      %v1518 = vrot.slane %v1399, %v1517
      %v1520 = vunpack.c.l.s4 1983009808
      %v1521 = vunpack.c.0.s8 %v1520
      %v1522 = vlaneseq
      %v1523 = vshrl.u32 %v1522, 7
      %v1524 = vsub.s32 %v1521, %v1523
      %v1525 = vrot.slane %v1511, %v1524
      %v1526 = vcombine.high %v1518, %v1518
      %v1527 = vcombine.high %v1525, %v1525
      %v1528 = vcombine.high %v1400, %v1400
      %v1530 = vunpack.c.l.s4 1983009808
      %v1531 = vunpack.c.0.s8 %v1530
      %v1532 = vlaneseq
      %v1533 = vshrl.u32 %v1532, 7
      %v1534 = vsub.s32 %v1531, %v1533
      %v1535 = vrot.slane %v1400, %v1534
      %v1537 = vunpack.c.l.s4 1983009808
      %v1538 = vunpack.c.0.s8 %v1537
      %v1539 = vlaneseq
      %v1540 = vshrl.u32 %v1539, 7
      %v1541 = vsub.s32 %v1538, %v1540
      %v1542 = vrot.slane %v1528, %v1541
      %v1543 = vcombine.high %v1535, %v1535
      %v1544 = vcombine.high %v1542, %v1542
      %v1545 = vcombine.high %v1401, %v1401
      %v1547 = vunpack.c.l.s4 1983009808
      %v1548 = vunpack.c.0.s8 %v1547
      %v1549 = vlaneseq
      %v1550 = vshrl.u32 %v1549, 7
      %v1551 = vsub.s32 %v1548, %v1550
      %v1552 = vrot.slane %v1401, %v1551
      %v1554 = vunpack.c.l.s4 1983009808
      %v1555 = vunpack.c.0.s8 %v1554
      %v1556 = vlaneseq
      %v1557 = vshrl.u32 %v1556, 7
      %v1558 = vsub.s32 %v1555, %v1557
      %v1559 = vrot.slane %v1545, %v1558
      %v1560 = vcombine.high %v1552, %v1552
      %v1561 = vcombine.high %v1559, %v1559
      %v1594 = vmax.f32 %v1433, %v1450
      %v1595 = vmax.f32 %v1441, %v1458
      %v1596 = vmax.f32 %v1440, %v1457
      %v1597 = vmax.f32 %v1442, %v1459
      %v1598 = vmax.f32 %v1467, %v1484
      %v1599 = vmax.f32 %v1475, %v1492
      %v1600 = vmax.f32 %v1474, %v1491
      %v1601 = vmax.f32 %v1476, %v1493
      %v1602 = vmax.f32 %v1501, %v1518
      %v1603 = vmax.f32 %v1509, %v1526
      %v1604 = vmax.f32 %v1508, %v1525
      %v1605 = vmax.f32 %v1510, %v1527
      %v1606 = vmax.f32 %v1535, %v1552
      %v1607 = vmax.f32 %v1543, %v1560
      %v1608 = vmax.f32 %v1542, %v1559
      %v1609 = vmax.f32 %v1544, %v1561
      %v1626 = vrot.slane %v1594, 7
      %v1627 = vrot.slane %v1626, 2
      %v1628 = vrot.slane %v1595, 7
      %v1629 = vrot.slane %v1628, 2
      %v1630 = vrot.slane %v1596, 7
      %v1631 = vrot.slane %v1630, 2
      %v1632 = vrot.slane %v1597, 7
      %v1633 = vrot.slane %v1632, 2
      %v1634 = vrot.slane %v1598, 7
      %v1635 = vrot.slane %v1634, 2
      %v1636 = vrot.slane %v1599, 7
      %v1637 = vrot.slane %v1636, 2
      %v1638 = vrot.slane %v1600, 7
      %v1639 = vrot.slane %v1638, 2
      %v1640 = vrot.slane %v1601, 7
      %v1641 = vrot.slane %v1640, 2
      %v1642 = vrot.slane %v1602, 7
      %v1643 = vrot.slane %v1642, 2
      %v1644 = vrot.slane %v1603, 7
      %v1645 = vrot.slane %v1644, 2
      %v1646 = vrot.slane %v1604, 7
      %v1647 = vrot.slane %v1646, 2
      %v1648 = vrot.slane %v1605, 7
      %v1649 = vrot.slane %v1648, 2
      %v1650 = vrot.slane %v1606, 7
      %v1651 = vrot.slane %v1650, 2
      %v1652 = vrot.slane %v1607, 7
      %v1653 = vrot.slane %v1652, 2
      %v1654 = vrot.slane %v1608, 7
      %v1655 = vrot.slane %v1654, 2
      %v1656 = vrot.slane %v1609, 7
      %v1657 = vrot.slane %v1656, 2
      %v1674 = vmax.f32 %v1594, %v1627
      %v1675 = vmax.f32 %v1595, %v1629
      %v1676 = vmax.f32 %v1596, %v1631
      %v1677 = vmax.f32 %v1597, %v1633
      %v1678 = vmax.f32 %v1598, %v1635
      %v1679 = vmax.f32 %v1599, %v1637
      %v1680 = vmax.f32 %v1600, %v1639
      %v1681 = vmax.f32 %v1601, %v1641
      %v1682 = vmax.f32 %v1602, %v1643
      %v1683 = vmax.f32 %v1603, %v1645
      %v1684 = vmax.f32 %v1604, %v1647
      %v1685 = vmax.f32 %v1605, %v1649
      %v1686 = vmax.f32 %v1606, %v1651
      %v1687 = vmax.f32 %v1607, %v1653
      %v1688 = vmax.f32 %v1608, %v1655
      %v1689 = vmax.f32 %v1609, %v1657
      %v1690 = vpack.c.bf16 %v1674, %v1674
      %v1691 = vpack.c.bf16 %v1675, %v1675
      %v1692 = vpack.c.bf16 %v1676, %v1676
      %v1693 = vpack.c.bf16 %v1677, %v1677
      %v1694 = vpack.c.bf16 %v1678, %v1678
      %v1695 = vpack.c.bf16 %v1679, %v1679
      %v1696 = vpack.c.bf16 %v1680, %v1680
      %v1697 = vpack.c.bf16 %v1681, %v1681
      %v1698 = vpack.c.bf16 %v1682, %v1682
      %v1699 = vpack.c.bf16 %v1683, %v1683
      %v1700 = vpack.c.bf16 %v1684, %v1684
      %v1701 = vpack.c.bf16 %v1685, %v1685
      %v1702 = vpack.c.bf16 %v1686, %v1686
      %v1703 = vpack.c.bf16 %v1687, %v1687
      %v1704 = vpack.c.bf16 %v1688, %v1688
      %v1705 = vpack.c.bf16 %v1689, %v1689
      %v1723 = vunpack.c.l.s4 1983009808
      %v1724 = vunpack.c.0.s8 %v1723
      %v1725 = vlaneseq
      %v1726 = vshrl.u32 %v1725, 7
      %v1727 = vsub.s32 %v1724, %v1726
      %v1728 = vrot.slane %v1690, %v1727
      %v1730 = vunpack.c.l.s4 1983009808
      %v1731 = vunpack.c.0.s8 %v1730
      %v1732 = vlaneseq
      %v1733 = vshrl.u32 %v1732, 7
      %v1734 = vsub.s32 %v1731, %v1733
      %v1735 = vrot.slane %v1691, %v1734
      %v1737 = vunpack.c.l.s4 1983009808
      %v1738 = vunpack.c.0.s8 %v1737
      %v1739 = vlaneseq
      %v1740 = vshrl.u32 %v1739, 7
      %v1741 = vsub.s32 %v1738, %v1740
      %v1742 = vrot.slane %v1692, %v1741
      %v1744 = vunpack.c.l.s4 1983009808
      %v1745 = vunpack.c.0.s8 %v1744
      %v1746 = vlaneseq
      %v1747 = vshrl.u32 %v1746, 7
      %v1748 = vsub.s32 %v1745, %v1747
      %v1749 = vrot.slane %v1693, %v1748
      %v1751 = vunpack.c.l.s4 1983009808
      %v1752 = vunpack.c.0.s8 %v1751
      %v1753 = vlaneseq
      %v1754 = vshrl.u32 %v1753, 7
      %v1755 = vsub.s32 %v1752, %v1754
      %v1756 = vrot.slane %v1694, %v1755
      %v1758 = vunpack.c.l.s4 1983009808
      %v1759 = vunpack.c.0.s8 %v1758
      %v1760 = vlaneseq
      %v1761 = vshrl.u32 %v1760, 7
      %v1762 = vsub.s32 %v1759, %v1761
      %v1763 = vrot.slane %v1695, %v1762
      %v1765 = vunpack.c.l.s4 1983009808
      %v1766 = vunpack.c.0.s8 %v1765
      %v1767 = vlaneseq
      %v1768 = vshrl.u32 %v1767, 7
      %v1769 = vsub.s32 %v1766, %v1768
      %v1770 = vrot.slane %v1696, %v1769
      %v1772 = vunpack.c.l.s4 1983009808
      %v1773 = vunpack.c.0.s8 %v1772
      %v1774 = vlaneseq
      %v1775 = vshrl.u32 %v1774, 7
      %v1776 = vsub.s32 %v1773, %v1775
      %v1777 = vrot.slane %v1697, %v1776
      %v1779 = vunpack.c.l.s4 1983009808
      %v1780 = vunpack.c.0.s8 %v1779
      %v1781 = vlaneseq
      %v1782 = vshrl.u32 %v1781, 7
      %v1783 = vsub.s32 %v1780, %v1782
      %v1784 = vrot.slane %v1698, %v1783
      %v1786 = vunpack.c.l.s4 1983009808
      %v1787 = vunpack.c.0.s8 %v1786
      %v1788 = vlaneseq
      %v1789 = vshrl.u32 %v1788, 7
      %v1790 = vsub.s32 %v1787, %v1789
      %v1791 = vrot.slane %v1699, %v1790
      %v1793 = vunpack.c.l.s4 1983009808
      %v1794 = vunpack.c.0.s8 %v1793
      %v1795 = vlaneseq
      %v1796 = vshrl.u32 %v1795, 7
      %v1797 = vsub.s32 %v1794, %v1796
      %v1798 = vrot.slane %v1700, %v1797
      %v1800 = vunpack.c.l.s4 1983009808
      %v1801 = vunpack.c.0.s8 %v1800
      %v1802 = vlaneseq
      %v1803 = vshrl.u32 %v1802, 7
      %v1804 = vsub.s32 %v1801, %v1803
      %v1805 = vrot.slane %v1701, %v1804
      %v1807 = vunpack.c.l.s4 1983009808
      %v1808 = vunpack.c.0.s8 %v1807
      %v1809 = vlaneseq
      %v1810 = vshrl.u32 %v1809, 7
      %v1811 = vsub.s32 %v1808, %v1810
      %v1812 = vrot.slane %v1702, %v1811
      %v1814 = vunpack.c.l.s4 1983009808
      %v1815 = vunpack.c.0.s8 %v1814
      %v1816 = vlaneseq
      %v1817 = vshrl.u32 %v1816, 7
      %v1818 = vsub.s32 %v1815, %v1817
      %v1819 = vrot.slane %v1703, %v1818
      %v1821 = vunpack.c.l.s4 1983009808
      %v1822 = vunpack.c.0.s8 %v1821
      %v1823 = vlaneseq
      %v1824 = vshrl.u32 %v1823, 7
      %v1825 = vsub.s32 %v1822, %v1824
      %v1826 = vrot.slane %v1704, %v1825
      %v1828 = vunpack.c.l.s4 1983009808
      %v1829 = vunpack.c.0.s8 %v1828
      %v1830 = vlaneseq
      %v1831 = vshrl.u32 %v1830, 7
      %v1832 = vsub.s32 %v1829, %v1831
      %v1833 = vrot.slane %v1705, %v1832
      %v1835 = vunpack.c.l.s4 1983009808
      %v1836 = vunpack.c.0.s8 %v1835
      %v1837 = vlaneseq
      %v1838 = vshrl.u32 %v1837, 7
      %v1839 = vsub.s32 %v1836, %v1838
      %v1840 = vrot.slane %v1728, %v1839
      %v1842 = vunpack.c.l.s4 1983009808
      %v1843 = vunpack.c.0.s8 %v1842
      %v1844 = vlaneseq
      %v1845 = vshrl.u32 %v1844, 7
      %v1846 = vsub.s32 %v1843, %v1845
      %v1847 = vrot.slane %v1735, %v1846
      %v1849 = vunpack.c.l.s4 1983009808
      %v1850 = vunpack.c.0.s8 %v1849
      %v1851 = vlaneseq
      %v1852 = vshrl.u32 %v1851, 7
      %v1853 = vsub.s32 %v1850, %v1852
      %v1854 = vrot.slane %v1742, %v1853
      %v1856 = vunpack.c.l.s4 1983009808
      %v1857 = vunpack.c.0.s8 %v1856
      %v1858 = vlaneseq
      %v1859 = vshrl.u32 %v1858, 7
      %v1860 = vsub.s32 %v1857, %v1859
      %v1861 = vrot.slane %v1749, %v1860
      %v1863 = vunpack.c.l.s4 1983009808
      %v1864 = vunpack.c.0.s8 %v1863
      %v1865 = vlaneseq
      %v1866 = vshrl.u32 %v1865, 7
      %v1867 = vsub.s32 %v1864, %v1866
      %v1868 = vrot.slane %v1756, %v1867
      %v1870 = vunpack.c.l.s4 1983009808
      %v1871 = vunpack.c.0.s8 %v1870
      %v1872 = vlaneseq
      %v1873 = vshrl.u32 %v1872, 7
      %v1874 = vsub.s32 %v1871, %v1873
      %v1875 = vrot.slane %v1763, %v1874
      %v1877 = vunpack.c.l.s4 1983009808
      %v1878 = vunpack.c.0.s8 %v1877
      %v1879 = vlaneseq
      %v1880 = vshrl.u32 %v1879, 7
      %v1881 = vsub.s32 %v1878, %v1880
      %v1882 = vrot.slane %v1770, %v1881
      %v1884 = vunpack.c.l.s4 1983009808
      %v1885 = vunpack.c.0.s8 %v1884
      %v1886 = vlaneseq
      %v1887 = vshrl.u32 %v1886, 7
      %v1888 = vsub.s32 %v1885, %v1887
      %v1889 = vrot.slane %v1777, %v1888
      %v1891 = vunpack.c.l.s4 1983009808
      %v1892 = vunpack.c.0.s8 %v1891
      %v1893 = vlaneseq
      %v1894 = vshrl.u32 %v1893, 7
      %v1895 = vsub.s32 %v1892, %v1894
      %v1896 = vrot.slane %v1784, %v1895
      %v1898 = vunpack.c.l.s4 1983009808
      %v1899 = vunpack.c.0.s8 %v1898
      %v1900 = vlaneseq
      %v1901 = vshrl.u32 %v1900, 7
      %v1902 = vsub.s32 %v1899, %v1901
      %v1903 = vrot.slane %v1791, %v1902
      %v1905 = vunpack.c.l.s4 1983009808
      %v1906 = vunpack.c.0.s8 %v1905
      %v1907 = vlaneseq
      %v1908 = vshrl.u32 %v1907, 7
      %v1909 = vsub.s32 %v1906, %v1908
      %v1910 = vrot.slane %v1798, %v1909
      %v1912 = vunpack.c.l.s4 1983009808
      %v1913 = vunpack.c.0.s8 %v1912
      %v1914 = vlaneseq
      %v1915 = vshrl.u32 %v1914, 7
      %v1916 = vsub.s32 %v1913, %v1915
      %v1917 = vrot.slane %v1805, %v1916
      %v1919 = vunpack.c.l.s4 1983009808
      %v1920 = vunpack.c.0.s8 %v1919
      %v1921 = vlaneseq
      %v1922 = vshrl.u32 %v1921, 7
      %v1923 = vsub.s32 %v1920, %v1922
      %v1924 = vrot.slane %v1812, %v1923
      %v1926 = vunpack.c.l.s4 1983009808
      %v1927 = vunpack.c.0.s8 %v1926
      %v1928 = vlaneseq
      %v1929 = vshrl.u32 %v1928, 7
      %v1930 = vsub.s32 %v1927, %v1929
      %v1931 = vrot.slane %v1819, %v1930
      %v1933 = vunpack.c.l.s4 1983009808
      %v1934 = vunpack.c.0.s8 %v1933
      %v1935 = vlaneseq
      %v1936 = vshrl.u32 %v1935, 7
      %v1937 = vsub.s32 %v1934, %v1936
      %v1938 = vrot.slane %v1826, %v1937
      %v1940 = vunpack.c.l.s4 1983009808
      %v1941 = vunpack.c.0.s8 %v1940
      %v1942 = vlaneseq
      %v1943 = vshrl.u32 %v1942, 7
      %v1944 = vsub.s32 %v1941, %v1943
      %v1945 = vrot.slane %v1833, %v1944
      %v1946 = vunpack.c.l.b16 %v1840
      %v1947 = vunpack.c.l.b16 %v1847
      %v1948 = vunpack.c.l.b16 %v1854
      %v1949 = vunpack.c.l.b16 %v1861
      %v1950 = vunpack.c.l.b16 %v1868
      %v1951 = vunpack.c.l.b16 %v1875
      %v1952 = vunpack.c.l.b16 %v1882
      %v1953 = vunpack.c.l.b16 %v1889
      %v1954 = vunpack.c.l.b16 %v1896
      %v1955 = vunpack.c.l.b16 %v1903
      %v1956 = vunpack.c.l.b16 %v1910
      %v1957 = vunpack.c.l.b16 %v1917
      %v1958 = vunpack.c.l.b16 %v1924
      %v1959 = vunpack.c.l.b16 %v1931
      %v1960 = vunpack.c.l.b16 %v1938
      %v1961 = vunpack.c.l.b16 %v1945
      %v1962 = vrot.slane %v1947, 7
      %vm1963 = vcmask 1041409
      %v1964 = vsel %vm1963, %v1962, %v1946
      %v1965 = vrot.slane %v1948, 6
      %vm1966 = vcmask 1042434
      %v1967 = vsel %vm1966, %v1965, %v1964
      %v1968 = vrot.slane %v1949, 5
      %vm1969 = vcmask 1043459
      %v1970 = vsel %vm1969, %v1968, %v1967
      %v1971 = vrot.slane %v1951, 7
      %v1972 = vsel %vm1963, %v1971, %v1950
      %v1973 = vrot.slane %v1952, 6
      %v1974 = vsel %vm1966, %v1973, %v1972
      %v1975 = vrot.slane %v1953, 5
      %v1976 = vsel %vm1969, %v1975, %v1974
      %v1977 = vrot.slane %v1955, 7
      %v1978 = vsel %vm1963, %v1977, %v1954
      %v1979 = vrot.slane %v1956, 6
      %v1980 = vsel %vm1966, %v1979, %v1978
      %v1981 = vrot.slane %v1957, 5
      %v1982 = vsel %vm1969, %v1981, %v1980
      %v1983 = vrot.slane %v1959, 7
      %v1984 = vsel %vm1963, %v1983, %v1958
      %v1985 = vrot.slane %v1960, 6
      %v1986 = vsel %vm1966, %v1985, %v1984
      %v1987 = vrot.slane %v1961, 5
      %v1988 = vsel %vm1969, %v1987, %v1986
      %v1989 = vpack.c.b16 %v1970, %v1970
      %v1990 = vpack.c.b16 %v1976, %v1976
      %v1991 = vpack.c.b16 %v1982, %v1982
      %v1992 = vpack.c.b16 %v1988, %v1988
      %v1994 = vunpack.c.l.s4 1983009808
      %v1995 = vunpack.c.0.s8 %v1994
      %v1996 = vlaneseq
      %v1997 = vshrl.u32 %v1996, 7
      %v1998 = vsub.s32 %v1995, %v1997
      %v1999 = vrot.slane %v1989, %v1998
      %v2001 = vunpack.c.l.s4 1983009808
      %v2002 = vunpack.c.0.s8 %v2001
      %v2003 = vlaneseq
      %v2004 = vshrl.u32 %v2003, 7
      %v2005 = vsub.s32 %v2002, %v2004
      %v2006 = vrot.slane %v1990, %v2005
      %v2008 = vunpack.c.l.s4 1983009808
      %v2009 = vunpack.c.0.s8 %v2008
      %v2010 = vlaneseq
      %v2011 = vshrl.u32 %v2010, 7
      %v2012 = vsub.s32 %v2009, %v2011
      %v2013 = vrot.slane %v1991, %v2012
      %v2015 = vunpack.c.l.s4 1983009808
      %v2016 = vunpack.c.0.s8 %v2015
      %v2017 = vlaneseq
      %v2018 = vshrl.u32 %v2017, 7
      %v2019 = vsub.s32 %v2016, %v2018
      %v2020 = vrot.slane %v1992, %v2019
      %2025 = vst [vmem:[%s210] sm:$0x3] %v1999
      %2026 = vst [vmem:[%s210 + $0x2] sm:$0x3] %v2006
      %2027 = vst [vmem:[%s210 + $0x4] sm:$0x3] %v2013
      %2028 = vst [vmem:[%s210 + $0x6] sm:$0x3] %v2020
      %p2029 = scmp.lt.s32.totalorder %s16, 1
      %s2030 = scalar_select %p2029, %s16, 1
      %s2031 = smul.addr %s2030, 8
      %s2032 = smul.addr %s2031, 4
      %s2033 = scalar_lea.vmem %s3, %s2032
      %p2034 = scmp.lt.s32.totalorder %s16, 1
      %s2035 = scalar_select %p2034, %s16, 1
      %s2036 = smul.addr %s2035, 4
      %s2037 = smul.addr %s2036, 2
      %s2038 = scalar_lea.vmem %s4, %s2037
      // Predicated region
      $region33: #{unet_forward.5} parent=31 // pred_check
        %p2039 = pneg %p102
      $region34: #{unet_forward.5} parent=31 // pred_check_branch
        %2041 = sbr.rel (%p2039) target = $region36
      $region35: #{unet_forward.5} parent=31 // pred_region
        _
      $region36: #{unet_forward.5} parent=31 // pred_fallthru
        _
      // Predicated region
      $region37: #{unet_forward.5} parent=31 // pred_check
        %p2042 = pneg %p128
      $region38: #{unet_forward.5} parent=31 // pred_check_branch
        %2044 = sbr.rel (%p2042) target = $region40
      $region39: #{unet_forward.5} parent=31 // pred_region
        _
      $region40: #{unet_forward.5} parent=31 // pred_fallthru
        _
    $region32: #{unet_forward.5} parent=5 // pred_fallthru
      _
    %p2045 = scmp.le.s32.totalorder 2, %s11
    // Predicated region
    $region41: #{unet_forward.5} parent=5 // pred_check
      %p2046 = pneg %p2045
    $region42: #{unet_forward.5} parent=5 // pred_check_branch
      %2048 = sbr.rel (%p2046) target = $region44
    $region43: #{unet_forward.5} parent=5 // pred_region
      %s2049 = ssub.s32 %s11, 2
      // Predicated region
      $region45: #{unet_forward.5} parent=43 // pred_check
        %p2050 = pneg %p108
      $region46: #{unet_forward.5} parent=43 // pred_check_branch
        %2052 = sbr.rel (%p2050) target = $region48
      $region47: #{unet_forward.5} parent=43 // pred_region
        %p2053 = scmp.lt.s32.totalorder %s17, 1
        %s2054 = scalar_select %p2053, %s17, 1
        %s2055 = smul.addr %s2054, 8
        %s2056 = smul.addr %s2055, 4
        %s2057 = scalar_lea.vmem %s3, %s2056
      $region48: #{unet_forward.5} parent=43 // pred_fallthru
        _
      // Predicated region
      $region49: #{unet_forward.5} parent=43 // pred_check
        %p2058 = pneg %p134
      $region50: #{unet_forward.5} parent=43 // pred_check_branch
        %2060 = sbr.rel (%p2058) target = $region52
      $region51: #{unet_forward.5} parent=43 // pred_region
        %p2061 = scmp.lt.s32.totalorder %s17, 1
        %s2062 = scalar_select %p2061, %s17, 1
        %s2063 = smul.addr %s2062, 4
        %s2064 = smul.addr %s2063, 2
        %s2065 = scalar_lea.vmem %s4, %s2064
      $region52: #{unet_forward.5} parent=43 // pred_fallthru
        _
    $region44: #{unet_forward.5} parent=5 // pred_fallthru
      _
  $region6: #{unet_forward.5} parent=0 // loop_footer
    %s15 = sadd.s32 1, %s11
  $region7: #{unet_forward.5} parent=0 // loop_footer_branch
    %10 = sbr.rel target = $region3
  $region8: #{unet_forward.5} parent=0 // loop_exit
    _

// kernel: tile.13
$region0: #{tile.13}
  #allocation0 [shape = 's32[1]{0}', space=sflag, size = 0x4, scoped, tag = 'scoped memory for tile.13']
  %s0 = inlined_call_operand.vmem [shape: f32[128], index: 0, kind: input, shape index: {}]
  %s1 = inlined_call_operand.vmem [shape: f32[4,128], index: 1, kind: output, shape index: {}]
  // Predicated region
  $region2: #{tile.13} parent=0 // pred_check
    _
  $region3: #{tile.13} parent=0 // pred_check_branch
    %3 = sbr.rel (0) target = $region5
  $region4: #{tile.13} parent=0 // pred_region
    _
  $region5: #{tile.13} parent=0 // pred_fallthru
    _
  %v4 = vld [vmem:[%s0] ss:$0 sm:$0xff]
  %5 = vst [vmem:[%s1] sm:$0xf] %v4

// kernel: unet_forward.6
$region0: #{unet_forward.6}
  #allocation0 [shape = 'u32[]', space=smem, size = 0x4, offset = 0x4, fixed_abs, tag = 'smem constant byte address 0x4 - core index']
  #allocation1 [shape = 'u32[144,128]{1,0:T(1,128)}', space=vmem, size = 0x12000, scoped, tag = 'internal scratch']
  %s0 = inlined_call_operand.vmem [shape: bf16[32,1152], index: 0, kind: input, shape index: {}]
  %s1 = inlined_call_operand.vmem [shape: bf16[1152,256], index: 1, kind: input, shape index: {}]
  %s2 = inlined_call_operand.vmem [shape: f32[1,256], index: 2, kind: input, shape index: {}]
  %s3 = inlined_call_operand.vmem [shape: bf16[256,512], index: 3, kind: input, shape index: {}]
  %s4 = inlined_call_operand.vmem [shape: f32[1,512], index: 4, kind: input, shape index: {}]
  %s5 = inlined_call_operand.vmem [shape: bf16[32,512], index: 5, kind: output, shape index: {}]
  %s6 = sld [smem:[#allocation0]]
  $region30: #{unet_forward.6} parent=0
    _
  %s8 = ssub.s32 1, %s6
  %s9 = scalar_select 0, %s8, %s6
  // Predicated region
  $region2: #{unet_forward.6} parent=0 // pred_check
    _
  $region3: #{unet_forward.6} parent=0 // pred_check_branch
    %11 = sbr.rel (0) target = $region5
  $region4: #{unet_forward.6} parent=0 // pred_region
    _
  $region5: #{unet_forward.6} parent=0 // pred_fallthru
    _
  // Predicated region
  $region6: #{unet_forward.6} parent=0 // pred_check
    _
  $region7: #{unet_forward.6} parent=0 // pred_check_branch
    %13 = sbr.rel (0) target = $region9
  $region8: #{unet_forward.6} parent=0 // pred_region
    _
  $region9: #{unet_forward.6} parent=0 // pred_fallthru
    _
  // Predicated region
  $region10: #{unet_forward.6} parent=0 // pred_check
    _
  $region11: #{unet_forward.6} parent=0 // pred_check_branch
    %15 = sbr.rel (0) target = $region13
  $region12: #{unet_forward.6} parent=0 // pred_region
    _
  $region13: #{unet_forward.6} parent=0 // pred_fallthru
    _
  // Predicated region
  $region14: #{unet_forward.6} parent=0 // pred_check
    _
  $region15: #{unet_forward.6} parent=0 // pred_check_branch
    %17 = sbr.rel (0) target = $region17
  $region16: #{unet_forward.6} parent=0 // pred_region
    _
  $region17: #{unet_forward.6} parent=0 // pred_fallthru
    _
  // Predicated region
  $region18: #{unet_forward.6} parent=0 // pred_check
    _
  $region19: #{unet_forward.6} parent=0 // pred_check_branch
    %19 = sbr.rel (0) target = $region21
  $region20: #{unet_forward.6} parent=0 // pred_region
    _
  $region21: #{unet_forward.6} parent=0 // pred_fallthru
    _
  %v21 = vld [vmem:[%s0] sm:$0xff]
  %v22 = vld [vmem:[%s0 + $0x8] sm:$0xff]
  %v23 = vld [vmem:[%s0 + $0x10] sm:$0xff]
  %v24 = vld [vmem:[%s0 + $0x18] sm:$0xff]
  %v25 = vld [vmem:[%s0 + $0x20] sm:$0xf]
  %v26 = vld [vmem:[%s0 + $0x24] sm:$0xff]
  %v27 = vld [vmem:[%s0 + $0x2c] sm:$0xff]
  %v28 = vld [vmem:[%s0 + $0x34] sm:$0xff]
  %v29 = vld [vmem:[%s0 + $0x3c] sm:$0xff]
  %v30 = vld [vmem:[%s0 + $0x44] sm:$0xf]
  %v31 = vld [vmem:[%s0 + $0x48] sm:$0xff]
  %v32 = vld [vmem:[%s0 + $0x50] sm:$0xff]
  %v33 = vld [vmem:[%s0 + $0x58] sm:$0xff]
  %v34 = vld [vmem:[%s0 + $0x60] sm:$0xff]
  %v35 = vld [vmem:[%s0 + $0x68] sm:$0xf]
  %v36 = vld [vmem:[%s0 + $0x6c] sm:$0xff]
  %v37 = vld [vmem:[%s0 + $0x74] sm:$0xff]
  %v38 = vld [vmem:[%s0 + $0x7c] sm:$0xff]
  %v39 = vld [vmem:[%s0 + $0x84] sm:$0xff]
  %v40 = vld [vmem:[%s0 + $0x8c] sm:$0xf]
  %v41 = vld [vmem:[%s1] sm:$0xff]
  %v42 = vld [vmem:[%s1 + $0x8] sm:$0xff]
  %v43 = vld [vmem:[%s1 + $0x10] sm:$0xff]
  %v44 = vld [vmem:[%s1 + $0x18] sm:$0xff]
  %v45 = vld [vmem:[%s1 + $0x20] sm:$0xff]
  %v46 = vld [vmem:[%s1 + $0x28] sm:$0xff]
  %v47 = vld [vmem:[%s1 + $0x30] sm:$0xff]
  %v48 = vld [vmem:[%s1 + $0x38] sm:$0xff]
  %v49 = vld [vmem:[%s1 + $0x40] sm:$0xff]
  %v50 = vld [vmem:[%s1 + $0x48] sm:$0xff]
  %v51 = vld [vmem:[%s1 + $0x50] sm:$0xff]
  %v52 = vld [vmem:[%s1 + $0x58] sm:$0xff]
  %v53 = vld [vmem:[%s1 + $0x60] sm:$0xff]
  %v54 = vld [vmem:[%s1 + $0x68] sm:$0xff]
  %v55 = vld [vmem:[%s1 + $0x70] sm:$0xff]
  %v56 = vld [vmem:[%s1 + $0x78] sm:$0xff]
  %v57 = vld [vmem:[%s1 + $0x80] sm:$0xff]
  %v58 = vld [vmem:[%s1 + $0x88] sm:$0xff]
  %v59 = vld [vmem:[%s1 + $0x90] sm:$0xff]
  %v60 = vld [vmem:[%s1 + $0x98] sm:$0xff]
  %v61 = vld [vmem:[%s1 + $0xa0] sm:$0xff]
  %v62 = vld [vmem:[%s1 + $0xa8] sm:$0xff]
  %v63 = vld [vmem:[%s1 + $0xb0] sm:$0xff]
  %v64 = vld [vmem:[%s1 + $0xb8] sm:$0xff]
  %v65 = vld [vmem:[%s1 + $0xc0] sm:$0xff]
  %v66 = vld [vmem:[%s1 + $0xc8] sm:$0xff]
  %v67 = vld [vmem:[%s1 + $0xd0] sm:$0xff]
  %v68 = vld [vmem:[%s1 + $0xd8] sm:$0xff]
  %v69 = vld [vmem:[%s1 + $0xe0] sm:$0xff]
  %v70 = vld [vmem:[%s1 + $0xe8] sm:$0xff]
  %v71 = vld [vmem:[%s1 + $0xf0] sm:$0xff]
  %v72 = vld [vmem:[%s1 + $0xf8] sm:$0xff]
  %v73 = vld [vmem:[%s1 + $0x100] sm:$0xff]
  %v74 = vld [vmem:[%s1 + $0x108] sm:$0xff]
  %v75 = vld [vmem:[%s1 + $0x110] sm:$0xff]
  %v76 = vld [vmem:[%s1 + $0x118] sm:$0xff]
  %v77 = vld [vmem:[%s1 + $0x120] sm:$0xff]
  %v78 = vld [vmem:[%s1 + $0x128] sm:$0xff]
  %v79 = vld [vmem:[%s1 + $0x130] sm:$0xff]
  %v80 = vld [vmem:[%s1 + $0x138] sm:$0xff]
  %v81 = vld [vmem:[%s1 + $0x140] sm:$0xff]
  %v82 = vld [vmem:[%s1 + $0x148] sm:$0xff]
  %v83 = vld [vmem:[%s1 + $0x150] sm:$0xff]
  %v84 = vld [vmem:[%s1 + $0x158] sm:$0xff]
  %v85 = vld [vmem:[%s1 + $0x160] sm:$0xff]
  %v86 = vld [vmem:[%s1 + $0x168] sm:$0xff]
  %v87 = vld [vmem:[%s1 + $0x170] sm:$0xff]
  %v88 = vld [vmem:[%s1 + $0x178] sm:$0xff]
  %v89 = vld [vmem:[%s1 + $0x180] sm:$0xff]
  %v90 = vld [vmem:[%s1 + $0x188] sm:$0xff]
  %v91 = vld [vmem:[%s1 + $0x190] sm:$0xff]
  %v92 = vld [vmem:[%s1 + $0x198] sm:$0xff]
  %v93 = vld [vmem:[%s1 + $0x1a0] sm:$0xff]
  %v94 = vld [vmem:[%s1 + $0x1a8] sm:$0xff]
  %v95 = vld [vmem:[%s1 + $0x1b0] sm:$0xff]
  %v96 = vld [vmem:[%s1 + $0x1b8] sm:$0xff]
  %v97 = vld [vmem:[%s1 + $0x1c0] sm:$0xff]
  %v98 = vld [vmem:[%s1 + $0x1c8] sm:$0xff]
  %v99 = vld [vmem:[%s1 + $0x1d0] sm:$0xff]
  %v100 = vld [vmem:[%s1 + $0x1d8] sm:$0xff]
  %v101 = vld [vmem:[%s1 + $0x1e0] sm:$0xff]
  %v102 = vld [vmem:[%s1 + $0x1e8] sm:$0xff]
  %v103 = vld [vmem:[%s1 + $0x1f0] sm:$0xff]
  %v104 = vld [vmem:[%s1 + $0x1f8] sm:$0xff]
  %v105 = vld [vmem:[%s1 + $0x200] sm:$0xff]
  %v106 = vld [vmem:[%s1 + $0x208] sm:$0xff]
  %v107 = vld [vmem:[%s1 + $0x210] sm:$0xff]
  %v108 = vld [vmem:[%s1 + $0x218] sm:$0xff]
  %v109 = vld [vmem:[%s1 + $0x220] sm:$0xff]
  %v110 = vld [vmem:[%s1 + $0x228] sm:$0xff]
  %v111 = vld [vmem:[%s1 + $0x230] sm:$0xff]
  %v112 = vld [vmem:[%s1 + $0x238] sm:$0xff]
  %v113 = vld [vmem:[%s1 + $0x240] sm:$0xff]
  %v114 = vld [vmem:[%s1 + $0x248] sm:$0xff]
  %v115 = vld [vmem:[%s1 + $0x250] sm:$0xff]
  %v116 = vld [vmem:[%s1 + $0x258] sm:$0xff]
  %v117 = vld [vmem:[%s1 + $0x260] sm:$0xff]
  %v118 = vld [vmem:[%s1 + $0x268] sm:$0xff]
  %v119 = vld [vmem:[%s1 + $0x270] sm:$0xff]
  %v120 = vld [vmem:[%s1 + $0x278] sm:$0xff]
  %v121 = vld [vmem:[%s1 + $0x280] sm:$0xff]
  %v122 = vld [vmem:[%s1 + $0x288] sm:$0xff]
  %v123 = vld [vmem:[%s1 + $0x290] sm:$0xff]
  %v124 = vld [vmem:[%s1 + $0x298] sm:$0xff]
  %v125 = vld [vmem:[%s1 + $0x2a0] sm:$0xff]
  %v126 = vld [vmem:[%s1 + $0x2a8] sm:$0xff]
  %v127 = vld [vmem:[%s1 + $0x2b0] sm:$0xff]
  %v128 = vld [vmem:[%s1 + $0x2b8] sm:$0xff]
  %v129 = vld [vmem:[%s1 + $0x2c0] sm:$0xff]
  %v130 = vld [vmem:[%s1 + $0x2c8] sm:$0xff]
  %v131 = vld [vmem:[%s1 + $0x2d0] sm:$0xff]
  %v132 = vld [vmem:[%s1 + $0x2d8] sm:$0xff]
  %v133 = vld [vmem:[%s1 + $0x2e0] sm:$0xff]
  %v134 = vld [vmem:[%s1 + $0x2e8] sm:$0xff]
  %v135 = vld [vmem:[%s1 + $0x2f0] sm:$0xff]
  %v136 = vld [vmem:[%s1 + $0x2f8] sm:$0xff]
  %v137 = vld [vmem:[%s1 + $0x300] sm:$0xff]
  %v138 = vld [vmem:[%s1 + $0x308] sm:$0xff]
  %v139 = vld [vmem:[%s1 + $0x310] sm:$0xff]
  %v140 = vld [vmem:[%s1 + $0x318] sm:$0xff]
  %v141 = vld [vmem:[%s1 + $0x320] sm:$0xff]
  %v142 = vld [vmem:[%s1 + $0x328] sm:$0xff]
  %v143 = vld [vmem:[%s1 + $0x330] sm:$0xff]
  %v144 = vld [vmem:[%s1 + $0x338] sm:$0xff]
  %v145 = vld [vmem:[%s1 + $0x340] sm:$0xff]
  %v146 = vld [vmem:[%s1 + $0x348] sm:$0xff]
  %v147 = vld [vmem:[%s1 + $0x350] sm:$0xff]
  %v148 = vld [vmem:[%s1 + $0x358] sm:$0xff]
  %v149 = vld [vmem:[%s1 + $0x360] sm:$0xff]
  %v150 = vld [vmem:[%s1 + $0x368] sm:$0xff]
  %v151 = vld [vmem:[%s1 + $0x370] sm:$0xff]
  %v152 = vld [vmem:[%s1 + $0x378] sm:$0xff]
  %v153 = vld [vmem:[%s1 + $0x380] sm:$0xff]
  %v154 = vld [vmem:[%s1 + $0x388] sm:$0xff]
  %v155 = vld [vmem:[%s1 + $0x390] sm:$0xff]
  %v156 = vld [vmem:[%s1 + $0x398] sm:$0xff]
  %v157 = vld [vmem:[%s1 + $0x3a0] sm:$0xff]
  %v158 = vld [vmem:[%s1 + $0x3a8] sm:$0xff]
  %v159 = vld [vmem:[%s1 + $0x3b0] sm:$0xff]
  %v160 = vld [vmem:[%s1 + $0x3b8] sm:$0xff]
  %v161 = vld [vmem:[%s1 + $0x3c0] sm:$0xff]
  %v162 = vld [vmem:[%s1 + $0x3c8] sm:$0xff]
  %v163 = vld [vmem:[%s1 + $0x3d0] sm:$0xff]
  %v164 = vld [vmem:[%s1 + $0x3d8] sm:$0xff]
  %v165 = vld [vmem:[%s1 + $0x3e0] sm:$0xff]
  %v166 = vld [vmem:[%s1 + $0x3e8] sm:$0xff]
  %v167 = vld [vmem:[%s1 + $0x3f0] sm:$0xff]
  %v168 = vld [vmem:[%s1 + $0x3f8] sm:$0xff]
  %v169 = vld [vmem:[%s1 + $0x400] sm:$0xff]
  %v170 = vld [vmem:[%s1 + $0x408] sm:$0xff]
  %v171 = vld [vmem:[%s1 + $0x410] sm:$0xff]
  %v172 = vld [vmem:[%s1 + $0x418] sm:$0xff]
  %v173 = vld [vmem:[%s1 + $0x420] sm:$0xff]
  %v174 = vld [vmem:[%s1 + $0x428] sm:$0xff]
  %v175 = vld [vmem:[%s1 + $0x430] sm:$0xff]
  %v176 = vld [vmem:[%s1 + $0x438] sm:$0xff]
  %v177 = vld [vmem:[%s1 + $0x440] sm:$0xff]
  %v178 = vld [vmem:[%s1 + $0x448] sm:$0xff]
  %v179 = vld [vmem:[%s1 + $0x450] sm:$0xff]
  %v180 = vld [vmem:[%s1 + $0x458] sm:$0xff]
  %v181 = vld [vmem:[%s1 + $0x460] sm:$0xff]
  %v182 = vld [vmem:[%s1 + $0x468] sm:$0xff]
  %v183 = vld [vmem:[%s1 + $0x470] sm:$0xff]
  %v184 = vld [vmem:[%s1 + $0x478] sm:$0xff]
  %v185 = vld [vmem:[%s2] sm:$0x3]
  %v187 = vlaneseq
  %v188 = vshrl.u32 %v187, 7
  %v189 = vsub.s32 0, %v188
  %v190 = vrot.slane %v185, %v189
  %v191 = vlaneseq
  %v192 = vshrl.u32 %v191, 7
  %v193 = vsub.s32 1, %v192
  %v194 = vrot.slane %v185, %v193
  %v217 = vunpack.c.l.b16 %v21
  %v218 = vunpack.c.h.b16 %v21
  %v219 = vunpack.c.l.b16 %v22
  %v220 = vunpack.c.h.b16 %v22
  %v221 = vunpack.c.l.b16 %v23
  %v222 = vunpack.c.h.b16 %v23
  %v223 = vunpack.c.l.b16 %v24
  %v224 = vunpack.c.h.b16 %v24
  %v225 = vunpack.c.l.b16 %v25
  %v226 = vunpack.c.l.b16 %v26
  %v227 = vunpack.c.h.b16 %v26
  %v228 = vunpack.c.l.b16 %v27
  %v229 = vunpack.c.h.b16 %v27
  %v230 = vunpack.c.l.b16 %v28
  %v231 = vunpack.c.h.b16 %v28
  %v232 = vunpack.c.l.b16 %v29
  %v233 = vunpack.c.h.b16 %v29
  %v234 = vunpack.c.l.b16 %v30
  %v235 = vunpack.c.l.b16 %v31
  %v236 = vunpack.c.h.b16 %v31
  %v237 = vunpack.c.l.b16 %v32
  %v238 = vunpack.c.h.b16 %v32
  %v239 = vunpack.c.l.b16 %v33
  %v240 = vunpack.c.h.b16 %v33
  %v241 = vunpack.c.l.b16 %v34
  %v242 = vunpack.c.h.b16 %v34
  %v243 = vunpack.c.l.b16 %v35
  %v244 = vunpack.c.l.b16 %v36
  %v245 = vunpack.c.h.b16 %v36
  %v246 = vunpack.c.l.b16 %v37
  %v247 = vunpack.c.h.b16 %v37
  %v248 = vunpack.c.l.b16 %v38
  %v249 = vunpack.c.h.b16 %v38
  %v250 = vunpack.c.l.b16 %v39
  %v251 = vunpack.c.h.b16 %v39
  %v252 = vunpack.c.l.b16 %v40
  %v253 = vpack.c.b16 %v226, %v217
  %v254 = vpack.c.b16 %v227, %v218
  %v255 = vpack.c.b16 %v228, %v219
  %v256 = vpack.c.b16 %v229, %v220
  %v257 = vpack.c.b16 %v230, %v221
  %v258 = vpack.c.b16 %v231, %v222
  %v259 = vpack.c.b16 %v232, %v223
  %v260 = vpack.c.b16 %v233, %v224
  %v261 = vpack.c.b16 %v234, %v225
  %v262 = vpack.c.b16 %v244, %v235
  %v263 = vpack.c.b16 %v245, %v236
  %v264 = vpack.c.b16 %v246, %v237
  %v265 = vpack.c.b16 %v247, %v238
  %v266 = vpack.c.b16 %v248, %v239
  %v267 = vpack.c.b16 %v249, %v240
  %v268 = vpack.c.b16 %v250, %v241
  %v269 = vpack.c.b16 %v251, %v242
  %v270 = vpack.c.b16 %v252, %v243
  %v433 = vunpack.c.l.b16 %v41
  %v434 = vunpack.c.h.b16 %v41
  %v435 = vunpack.c.l.b16 %v42
  %v436 = vunpack.c.h.b16 %v42
  %v437 = vunpack.c.l.b16 %v43
  %v438 = vunpack.c.h.b16 %v43
  %v439 = vunpack.c.l.b16 %v44
  %v440 = vunpack.c.h.b16 %v44
  %v441 = vunpack.c.l.b16 %v45
  %v442 = vunpack.c.h.b16 %v45
  %v443 = vunpack.c.l.b16 %v46
  %v444 = vunpack.c.h.b16 %v46
  %v445 = vunpack.c.l.b16 %v47
  %v446 = vunpack.c.h.b16 %v47
  %v447 = vunpack.c.l.b16 %v48
  %v448 = vunpack.c.h.b16 %v48
  %v449 = vunpack.c.l.b16 %v49
  %v450 = vunpack.c.h.b16 %v49
  %v451 = vunpack.c.l.b16 %v50
  %v452 = vunpack.c.h.b16 %v50
  %v453 = vunpack.c.l.b16 %v51
  %v454 = vunpack.c.h.b16 %v51
  %v455 = vunpack.c.l.b16 %v52
  %v456 = vunpack.c.h.b16 %v52
  %v457 = vunpack.c.l.b16 %v53
  %v458 = vunpack.c.h.b16 %v53
  %v459 = vunpack.c.l.b16 %v54
  %v460 = vunpack.c.h.b16 %v54
  %v461 = vunpack.c.l.b16 %v55
  %v462 = vunpack.c.h.b16 %v55
  %v463 = vunpack.c.l.b16 %v56
  %v464 = vunpack.c.h.b16 %v56
  %v465 = vunpack.c.l.b16 %v57
  %v466 = vunpack.c.h.b16 %v57
  %v467 = vunpack.c.l.b16 %v58
  %v468 = vunpack.c.h.b16 %v58
  %v469 = vunpack.c.l.b16 %v59
  %v470 = vunpack.c.h.b16 %v59
  %v471 = vunpack.c.l.b16 %v60
  %v472 = vunpack.c.h.b16 %v60
  %v473 = vunpack.c.l.b16 %v61
  %v474 = vunpack.c.h.b16 %v61
  %v475 = vunpack.c.l.b16 %v62
  %v476 = vunpack.c.h.b16 %v62
  %v477 = vunpack.c.l.b16 %v63
  %v478 = vunpack.c.h.b16 %v63
  %v479 = vunpack.c.l.b16 %v64
  %v480 = vunpack.c.h.b16 %v64
  %v481 = vunpack.c.l.b16 %v65
  %v482 = vunpack.c.h.b16 %v65
  %v483 = vunpack.c.l.b16 %v66
  %v484 = vunpack.c.h.b16 %v66
  %v485 = vunpack.c.l.b16 %v67
  %v486 = vunpack.c.h.b16 %v67
  %v487 = vunpack.c.l.b16 %v68
  %v488 = vunpack.c.h.b16 %v68
  %v489 = vunpack.c.l.b16 %v69
  %v490 = vunpack.c.h.b16 %v69
  %v491 = vunpack.c.l.b16 %v70
  %v492 = vunpack.c.h.b16 %v70
  %v493 = vunpack.c.l.b16 %v71
  %v494 = vunpack.c.h.b16 %v71
  %v495 = vunpack.c.l.b16 %v72
  %v496 = vunpack.c.h.b16 %v72
  %v497 = vunpack.c.l.b16 %v73
  %v498 = vunpack.c.h.b16 %v73
  %v499 = vunpack.c.l.b16 %v74
  %v500 = vunpack.c.h.b16 %v74
  %v501 = vunpack.c.l.b16 %v75
  %v502 = vunpack.c.h.b16 %v75
  %v503 = vunpack.c.l.b16 %v76
  %v504 = vunpack.c.h.b16 %v76
  %v505 = vunpack.c.l.b16 %v77
  %v506 = vunpack.c.h.b16 %v77
  %v507 = vunpack.c.l.b16 %v78
  %v508 = vunpack.c.h.b16 %v78
  %v509 = vunpack.c.l.b16 %v79
  %v510 = vunpack.c.h.b16 %v79
  %v511 = vunpack.c.l.b16 %v80
  %v512 = vunpack.c.h.b16 %v80
  %v513 = vunpack.c.l.b16 %v81
  %v514 = vunpack.c.h.b16 %v81
  %v515 = vunpack.c.l.b16 %v82
  %v516 = vunpack.c.h.b16 %v82
  %v517 = vunpack.c.l.b16 %v83
  %v518 = vunpack.c.h.b16 %v83
  %v519 = vunpack.c.l.b16 %v84
  %v520 = vunpack.c.h.b16 %v84
  %v521 = vunpack.c.l.b16 %v85
  %v522 = vunpack.c.h.b16 %v85
  %v523 = vunpack.c.l.b16 %v86
  %v524 = vunpack.c.h.b16 %v86
  %v525 = vunpack.c.l.b16 %v87
  %v526 = vunpack.c.h.b16 %v87
  %v527 = vunpack.c.l.b16 %v88
  %v528 = vunpack.c.h.b16 %v88
  %v529 = vunpack.c.l.b16 %v89
  %v530 = vunpack.c.h.b16 %v89
  %v531 = vunpack.c.l.b16 %v90
  %v532 = vunpack.c.h.b16 %v90
  %v533 = vunpack.c.l.b16 %v91
  %v534 = vunpack.c.h.b16 %v91
  %v535 = vunpack.c.l.b16 %v92
  %v536 = vunpack.c.h.b16 %v92
  %v537 = vunpack.c.l.b16 %v93
  %v538 = vunpack.c.h.b16 %v93
  %v539 = vunpack.c.l.b16 %v94
  %v540 = vunpack.c.h.b16 %v94
  %v541 = vunpack.c.l.b16 %v95
  %v542 = vunpack.c.h.b16 %v95
  %v543 = vunpack.c.l.b16 %v96
  %v544 = vunpack.c.h.b16 %v96
  %v545 = vunpack.c.l.b16 %v97
  %v546 = vunpack.c.h.b16 %v97
  %v547 = vunpack.c.l.b16 %v98
  %v548 = vunpack.c.h.b16 %v98
  %v549 = vunpack.c.l.b16 %v99
  %v550 = vunpack.c.h.b16 %v99
  %v551 = vunpack.c.l.b16 %v100
  %v552 = vunpack.c.h.b16 %v100
  %v553 = vunpack.c.l.b16 %v101
  %v554 = vunpack.c.h.b16 %v101
  %v555 = vunpack.c.l.b16 %v102
  %v556 = vunpack.c.h.b16 %v102
  %v557 = vunpack.c.l.b16 %v103
  %v558 = vunpack.c.h.b16 %v103
  %v559 = vunpack.c.l.b16 %v104
  %v560 = vunpack.c.h.b16 %v104
  %v561 = vunpack.c.l.b16 %v105
  %v562 = vunpack.c.h.b16 %v105
  %v563 = vunpack.c.l.b16 %v106
  %v564 = vunpack.c.h.b16 %v106
  %v565 = vunpack.c.l.b16 %v107
  %v566 = vunpack.c.h.b16 %v107
  %v567 = vunpack.c.l.b16 %v108
  %v568 = vunpack.c.h.b16 %v108
  %v569 = vunpack.c.l.b16 %v109
  %v570 = vunpack.c.h.b16 %v109
  %v571 = vunpack.c.l.b16 %v110
  %v572 = vunpack.c.h.b16 %v110
  %v573 = vunpack.c.l.b16 %v111
  %v574 = vunpack.c.h.b16 %v111
  %v575 = vunpack.c.l.b16 %v112
  %v576 = vunpack.c.h.b16 %v112
  %v577 = vunpack.c.l.b16 %v113
  %v578 = vunpack.c.h.b16 %v113
  %v579 = vunpack.c.l.b16 %v114
  %v580 = vunpack.c.h.b16 %v114
  %v581 = vunpack.c.l.b16 %v115
  %v582 = vunpack.c.h.b16 %v115
  %v583 = vunpack.c.l.b16 %v116
  %v584 = vunpack.c.h.b16 %v116
  %v585 = vunpack.c.l.b16 %v117
  %v586 = vunpack.c.h.b16 %v117
  %v587 = vunpack.c.l.b16 %v118
  %v588 = vunpack.c.h.b16 %v118
  %v589 = vunpack.c.l.b16 %v119
  %v590 = vunpack.c.h.b16 %v119
  %v591 = vunpack.c.l.b16 %v120
  %v592 = vunpack.c.h.b16 %v120
  %v593 = vunpack.c.l.b16 %v121
  %v594 = vunpack.c.h.b16 %v121
  %v595 = vunpack.c.l.b16 %v122
  %v596 = vunpack.c.h.b16 %v122
  %v597 = vunpack.c.l.b16 %v123
  %v598 = vunpack.c.h.b16 %v123
  %v599 = vunpack.c.l.b16 %v124
  %v600 = vunpack.c.h.b16 %v124
  %v601 = vunpack.c.l.b16 %v125
  %v602 = vunpack.c.h.b16 %v125
  %v603 = vunpack.c.l.b16 %v126
  %v604 = vunpack.c.h.b16 %v126
  %v605 = vunpack.c.l.b16 %v127
  %v606 = vunpack.c.h.b16 %v127
  %v607 = vunpack.c.l.b16 %v128
  %v608 = vunpack.c.h.b16 %v128
  %v609 = vunpack.c.l.b16 %v129
  %v610 = vunpack.c.h.b16 %v129
  %v611 = vunpack.c.l.b16 %v130
  %v612 = vunpack.c.h.b16 %v130
  %v613 = vunpack.c.l.b16 %v131
  %v614 = vunpack.c.h.b16 %v131
  %v615 = vunpack.c.l.b16 %v132
  %v616 = vunpack.c.h.b16 %v132
  %v617 = vunpack.c.l.b16 %v133
  %v618 = vunpack.c.h.b16 %v133
  %v619 = vunpack.c.l.b16 %v134
  %v620 = vunpack.c.h.b16 %v134
  %v621 = vunpack.c.l.b16 %v135
  %v622 = vunpack.c.h.b16 %v135
  %v623 = vunpack.c.l.b16 %v136
  %v624 = vunpack.c.h.b16 %v136
  %v625 = vunpack.c.l.b16 %v137
  %v626 = vunpack.c.h.b16 %v137
  %v627 = vunpack.c.l.b16 %v138
  %v628 = vunpack.c.h.b16 %v138
  %v629 = vunpack.c.l.b16 %v139
  %v630 = vunpack.c.h.b16 %v139
  %v631 = vunpack.c.l.b16 %v140
  %v632 = vunpack.c.h.b16 %v140
  %v633 = vunpack.c.l.b16 %v141
  %v634 = vunpack.c.h.b16 %v141
  %v635 = vunpack.c.l.b16 %v142
  %v636 = vunpack.c.h.b16 %v142
  %v637 = vunpack.c.l.b16 %v143
  %v638 = vunpack.c.h.b16 %v143
  %v639 = vunpack.c.l.b16 %v144
  %v640 = vunpack.c.h.b16 %v144
  %v641 = vunpack.c.l.b16 %v145
  %v642 = vunpack.c.h.b16 %v145
  %v643 = vunpack.c.l.b16 %v146
  %v644 = vunpack.c.h.b16 %v146
  %v645 = vunpack.c.l.b16 %v147
  %v646 = vunpack.c.h.b16 %v147
  %v647 = vunpack.c.l.b16 %v148
  %v648 = vunpack.c.h.b16 %v148
  %v649 = vunpack.c.l.b16 %v149
  %v650 = vunpack.c.h.b16 %v149
  %v651 = vunpack.c.l.b16 %v150
  %v652 = vunpack.c.h.b16 %v150
  %v653 = vunpack.c.l.b16 %v151
  %v654 = vunpack.c.h.b16 %v151
  %v655 = vunpack.c.l.b16 %v152
  %v656 = vunpack.c.h.b16 %v152
  %v657 = vunpack.c.l.b16 %v153
  %v658 = vunpack.c.h.b16 %v153
  %v659 = vunpack.c.l.b16 %v154
  %v660 = vunpack.c.h.b16 %v154
  %v661 = vunpack.c.l.b16 %v155
  %v662 = vunpack.c.h.b16 %v155
  %v663 = vunpack.c.l.b16 %v156
  %v664 = vunpack.c.h.b16 %v156
  %v665 = vunpack.c.l.b16 %v157
  %v666 = vunpack.c.h.b16 %v157
  %v667 = vunpack.c.l.b16 %v158
  %v668 = vunpack.c.h.b16 %v158
  %v669 = vunpack.c.l.b16 %v159
  %v670 = vunpack.c.h.b16 %v159
  %v671 = vunpack.c.l.b16 %v160
  %v672 = vunpack.c.h.b16 %v160
  %v673 = vunpack.c.l.b16 %v161
  %v674 = vunpack.c.h.b16 %v161
  %v675 = vunpack.c.l.b16 %v162
  %v676 = vunpack.c.h.b16 %v162
  %v677 = vunpack.c.l.b16 %v163
  %v678 = vunpack.c.h.b16 %v163
  %v679 = vunpack.c.l.b16 %v164
  %v680 = vunpack.c.h.b16 %v164
  %v681 = vunpack.c.l.b16 %v165
  %v682 = vunpack.c.h.b16 %v165
  %v683 = vunpack.c.l.b16 %v166
  %v684 = vunpack.c.h.b16 %v166
  %v685 = vunpack.c.l.b16 %v167
  %v686 = vunpack.c.h.b16 %v167
  %v687 = vunpack.c.l.b16 %v168
  %v688 = vunpack.c.h.b16 %v168
  %v689 = vunpack.c.l.b16 %v169
  %v690 = vunpack.c.h.b16 %v169
  %v691 = vunpack.c.l.b16 %v170
  %v692 = vunpack.c.h.b16 %v170
  %v693 = vunpack.c.l.b16 %v171
  %v694 = vunpack.c.h.b16 %v171
  %v695 = vunpack.c.l.b16 %v172
  %v696 = vunpack.c.h.b16 %v172
  %v697 = vunpack.c.l.b16 %v173
  %v698 = vunpack.c.h.b16 %v173
  %v699 = vunpack.c.l.b16 %v174
  %v700 = vunpack.c.h.b16 %v174
  %v701 = vunpack.c.l.b16 %v175
  %v702 = vunpack.c.h.b16 %v175
  %v703 = vunpack.c.l.b16 %v176
  %v704 = vunpack.c.h.b16 %v176
  %v705 = vunpack.c.l.b16 %v177
  %v706 = vunpack.c.h.b16 %v177
  %v707 = vunpack.c.l.b16 %v178
  %v708 = vunpack.c.h.b16 %v178
  %v709 = vunpack.c.l.b16 %v179
  %v710 = vunpack.c.h.b16 %v179
  %v711 = vunpack.c.l.b16 %v180
  %v712 = vunpack.c.h.b16 %v180
  %v713 = vunpack.c.l.b16 %v181
  %v714 = vunpack.c.h.b16 %v181
  %v715 = vunpack.c.l.b16 %v182
  %v716 = vunpack.c.h.b16 %v182
  %v717 = vunpack.c.l.b16 %v183
  %v718 = vunpack.c.h.b16 %v183
  %v719 = vunpack.c.l.b16 %v184
  %v720 = vunpack.c.h.b16 %v184
  %v721 = vpack.c.b16 %v435, %v433
  %v722 = vpack.c.b16 %v436, %v434
  %v723 = vpack.c.b16 %v439, %v437
  %v724 = vpack.c.b16 %v440, %v438
  %v725 = vpack.c.b16 %v443, %v441
  %v726 = vpack.c.b16 %v444, %v442
  %v727 = vpack.c.b16 %v447, %v445
  %v728 = vpack.c.b16 %v448, %v446
  %v729 = vpack.c.b16 %v451, %v449
  %v730 = vpack.c.b16 %v452, %v450
  %v731 = vpack.c.b16 %v455, %v453
  %v732 = vpack.c.b16 %v456, %v454
  %v733 = vpack.c.b16 %v459, %v457
  %v734 = vpack.c.b16 %v460, %v458
  %v735 = vpack.c.b16 %v463, %v461
  %v736 = vpack.c.b16 %v464, %v462
  %v737 = vpack.c.b16 %v467, %v465
  %v738 = vpack.c.b16 %v468, %v466
  %v739 = vpack.c.b16 %v471, %v469
  %v740 = vpack.c.b16 %v472, %v470
  %v741 = vpack.c.b16 %v475, %v473
  %v742 = vpack.c.b16 %v476, %v474
  %v743 = vpack.c.b16 %v479, %v477
  %v744 = vpack.c.b16 %v480, %v478
  %v745 = vpack.c.b16 %v483, %v481
  %v746 = vpack.c.b16 %v484, %v482
  %v747 = vpack.c.b16 %v487, %v485
  %v748 = vpack.c.b16 %v488, %v486
  %v749 = vpack.c.b16 %v491, %v489
  %v750 = vpack.c.b16 %v492, %v490
  %v751 = vpack.c.b16 %v495, %v493
  %v752 = vpack.c.b16 %v496, %v494
  %v753 = vpack.c.b16 %v499, %v497
  %v754 = vpack.c.b16 %v500, %v498
  %v755 = vpack.c.b16 %v503, %v501
  %v756 = vpack.c.b16 %v504, %v502
  %v757 = vpack.c.b16 %v507, %v505
  %v758 = vpack.c.b16 %v508, %v506
  %v759 = vpack.c.b16 %v511, %v509
  %v760 = vpack.c.b16 %v512, %v510
  %v761 = vpack.c.b16 %v515, %v513
  %v762 = vpack.c.b16 %v516, %v514
  %v763 = vpack.c.b16 %v519, %v517
  %v764 = vpack.c.b16 %v520, %v518
  %v765 = vpack.c.b16 %v523, %v521
  %v766 = vpack.c.b16 %v524, %v522
  %v767 = vpack.c.b16 %v527, %v525
  %v768 = vpack.c.b16 %v528, %v526
  %v769 = vpack.c.b16 %v531, %v529
  %v770 = vpack.c.b16 %v532, %v530
  %v771 = vpack.c.b16 %v535, %v533
  %v772 = vpack.c.b16 %v536, %v534
  %v773 = vpack.c.b16 %v539, %v537
  %v774 = vpack.c.b16 %v540, %v538
  %v775 = vpack.c.b16 %v543, %v541
  %v776 = vpack.c.b16 %v544, %v542
  %v777 = vpack.c.b16 %v547, %v545
  %v778 = vpack.c.b16 %v548, %v546
  %v779 = vpack.c.b16 %v551, %v549
  %v780 = vpack.c.b16 %v552, %v550
  %v781 = vpack.c.b16 %v555, %v553
  %v782 = vpack.c.b16 %v556, %v554
  %v783 = vpack.c.b16 %v559, %v557
  %v784 = vpack.c.b16 %v560, %v558
  %v785 = vpack.c.b16 %v563, %v561
  %v786 = vpack.c.b16 %v564, %v562
  %v787 = vpack.c.b16 %v567, %v565
  %v788 = vpack.c.b16 %v568, %v566
  %v789 = vpack.c.b16 %v571, %v569
  %v790 = vpack.c.b16 %v572, %v570
  %v791 = vpack.c.b16 %v575, %v573
  %v792 = vpack.c.b16 %v576, %v574
  %v793 = vpack.c.b16 %v579, %v577
  %v794 = vpack.c.b16 %v580, %v578
  %v795 = vpack.c.b16 %v583, %v581
  %v796 = vpack.c.b16 %v584, %v582
  %v797 = vpack.c.b16 %v587, %v585
  %v798 = vpack.c.b16 %v588, %v586
  %v799 = vpack.c.b16 %v591, %v589
  %v800 = vpack.c.b16 %v592, %v590
  %v801 = vpack.c.b16 %v595, %v593
  %v802 = vpack.c.b16 %v596, %v594
  %v803 = vpack.c.b16 %v599, %v597
  %v804 = vpack.c.b16 %v600, %v598
  %v805 = vpack.c.b16 %v603, %v601
  %v806 = vpack.c.b16 %v604, %v602
  %v807 = vpack.c.b16 %v607, %v605
  %v808 = vpack.c.b16 %v608, %v606
  %v809 = vpack.c.b16 %v611, %v609
  %v810 = vpack.c.b16 %v612, %v610
  %v811 = vpack.c.b16 %v615, %v613
  %v812 = vpack.c.b16 %v616, %v614
  %v813 = vpack.c.b16 %v619, %v617
  %v814 = vpack.c.b16 %v620, %v618
  %v815 = vpack.c.b16 %v623, %v621
  %v816 = vpack.c.b16 %v624, %v622
  %v817 = vpack.c.b16 %v627, %v625
  %v818 = vpack.c.b16 %v628, %v626
  %v819 = vpack.c.b16 %v631, %v629
  %v820 = vpack.c.b16 %v632, %v630
  %v821 = vpack.c.b16 %v635, %v633
  %v822 = vpack.c.b16 %v636, %v634
  %v823 = vpack.c.b16 %v639, %v637
  %v824 = vpack.c.b16 %v640, %v638
  %v825 = vpack.c.b16 %v643, %v641
  %v826 = vpack.c.b16 %v644, %v642
  %v827 = vpack.c.b16 %v647, %v645
  %v828 = vpack.c.b16 %v648, %v646
  %v829 = vpack.c.b16 %v651, %v649
  %v830 = vpack.c.b16 %v652, %v650
  %v831 = vpack.c.b16 %v655, %v653
  %v832 = vpack.c.b16 %v656, %v654
  %v833 = vpack.c.b16 %v659, %v657
  %v834 = vpack.c.b16 %v660, %v658
  %v835 = vpack.c.b16 %v663, %v661
  %v836 = vpack.c.b16 %v664, %v662
  %v837 = vpack.c.b16 %v667, %v665
  %v838 = vpack.c.b16 %v668, %v666
  %v839 = vpack.c.b16 %v671, %v669
  %v840 = vpack.c.b16 %v672, %v670
  %v841 = vpack.c.b16 %v675, %v673
  %v842 = vpack.c.b16 %v676, %v674
  %v843 = vpack.c.b16 %v679, %v677
  %v844 = vpack.c.b16 %v680, %v678
  %v845 = vpack.c.b16 %v683, %v681
  %v846 = vpack.c.b16 %v684, %v682
  %v847 = vpack.c.b16 %v687, %v685
  %v848 = vpack.c.b16 %v688, %v686
  %v849 = vpack.c.b16 %v691, %v689
  %v850 = vpack.c.b16 %v692, %v690
  %v851 = vpack.c.b16 %v695, %v693
  %v852 = vpack.c.b16 %v696, %v694
  %v853 = vpack.c.b16 %v699, %v697
  %v854 = vpack.c.b16 %v700, %v698
  %v855 = vpack.c.b16 %v703, %v701
  %v856 = vpack.c.b16 %v704, %v702
  %v857 = vpack.c.b16 %v707, %v705
  %v858 = vpack.c.b16 %v708, %v706
  %v859 = vpack.c.b16 %v711, %v709
  %v860 = vpack.c.b16 %v712, %v710
  %v861 = vpack.c.b16 %v715, %v713
  %v862 = vpack.c.b16 %v716, %v714
  %v863 = vpack.c.b16 %v719, %v717
  %v864 = vpack.c.b16 %v720, %v718
  %1009 = vmatprep.subr.bf16.mxu0 %v736
  %1010 = vmatpush1.bf16.msra.mxu0 %v735
  %1011 = vmatprep.subr.bf16.mxu0 %v734
  %1012 = vmatpush1.bf16.msra.mxu0 %v733
  %1013 = vmatprep.subr.bf16.mxu0 %v732
  %1014 = vmatpush1.bf16.msra.mxu0 %v731
  %1015 = vmatprep.subr.bf16.mxu0 %v730
  %1016 = vmatpush1.bf16.msra.mxu0 %v729
  %1017 = vmatprep.subr.bf16.mxu0 %v728
  %1018 = vmatpush1.bf16.msra.mxu0 %v727
  %1019 = vmatprep.subr.bf16.mxu0 %v726
  %1020 = vmatpush1.bf16.msra.mxu0 %v725
  %1021 = vmatprep.subr.bf16.mxu0 %v724
  %1022 = vmatpush1.bf16.msra.mxu0 %v723
  %1023 = vmatprep.subr.bf16.mxu0 %v722
  %1024 = vmatpush1.bf16.msra.mxu0 %v721
  %1025 = vmatprep.subr.bf16.mxu0 %v752
  %1026 = vmatpush2.bf16.msra.mxu0 %v751
  %1027 = vmatprep.subr.bf16.mxu0 %v750
  %1028 = vmatpush2.bf16.msra.mxu0 %v749
  %1029 = vmatprep.subr.bf16.mxu0 %v748
  %1030 = vmatpush2.bf16.msra.mxu0 %v747
  %1031 = vmatprep.subr.bf16.mxu0 %v746
  %1032 = vmatpush2.bf16.msra.mxu0 %v745
  %1033 = vmatprep.subr.bf16.mxu0 %v744
  %1034 = vmatpush2.bf16.msra.mxu0 %v743
  %1035 = vmatprep.subr.bf16.mxu0 %v742
  %1036 = vmatpush2.bf16.msra.mxu0 %v741
  %1037 = vmatprep.subr.bf16.mxu0 %v740
  %1038 = vmatpush2.bf16.msra.mxu0 %v739
  %1039 = vmatprep.subr.bf16.mxu0 %v738
  %1040 = vmatpush2.bf16.msra.mxu0 %v737
  %1041 = vmatprep.mubr.bf16.mxu0 %v254
  %1042 = vmatmul.mubr.bf16.gmra.mxu0 %v253
  %v1043 = vpop.f32.mrf.mxu0
  %v1044 = vadd.f32 %v190, %v1043
  %v1045 = vpop.f32.mrf.mxu0
  %v1046 = vadd.f32 %v194, %v1045
  %v1047 = vpop.f32.mrf.mxu0
  %v1048 = vadd.f32 %v190, %v1047
  %v1049 = vpop.f32.mrf.mxu0
  %v1050 = vadd.f32 %v194, %v1049
  %1051 = vmatprep.mubr.bf16.mxu0 %v263
  %1052 = vmatmul.mubr.bf16.gmra.mxu0 %v262
  %v1053 = vpop.f32.mrf.mxu0
  %v1054 = vadd.f32 %v190, %v1053
  %v1055 = vpop.f32.mrf.mxu0
  %v1056 = vadd.f32 %v194, %v1055
  %v1057 = vpop.f32.mrf.mxu0
  %v1058 = vadd.f32 %v190, %v1057
  %v1059 = vpop.f32.mrf.mxu0
  %v1060 = vadd.f32 %v194, %v1059
  %1061 = vdwg.mxu0
  %1062 = vmatprep.subr.bf16.mxu0 %v768
  %1063 = vmatpush1.bf16.msra.mxu0 %v767
  %1064 = vmatprep.subr.bf16.mxu0 %v766
  %1065 = vmatpush1.bf16.msra.mxu0 %v765
  %1066 = vmatprep.subr.bf16.mxu0 %v764
  %1067 = vmatpush1.bf16.msra.mxu0 %v763
  %1068 = vmatprep.subr.bf16.mxu0 %v762
  %1069 = vmatpush1.bf16.msra.mxu0 %v761
  %1070 = vmatprep.subr.bf16.mxu0 %v760
  %1071 = vmatpush1.bf16.msra.mxu0 %v759
  %1072 = vmatprep.subr.bf16.mxu0 %v758
  %1073 = vmatpush1.bf16.msra.mxu0 %v757
  %1074 = vmatprep.subr.bf16.mxu0 %v756
  %1075 = vmatpush1.bf16.msra.mxu0 %v755
  %1076 = vmatprep.subr.bf16.mxu0 %v754
  %1077 = vmatpush1.bf16.msra.mxu0 %v753
  %1078 = vmatprep.subr.bf16.mxu0 %v784
  %1079 = vmatpush2.bf16.msra.mxu0 %v783
  %1080 = vmatprep.subr.bf16.mxu0 %v782
  %1081 = vmatpush2.bf16.msra.mxu0 %v781
  %1082 = vmatprep.subr.bf16.mxu0 %v780
  %1083 = vmatpush2.bf16.msra.mxu0 %v779
  %1084 = vmatprep.subr.bf16.mxu0 %v778
  %1085 = vmatpush2.bf16.msra.mxu0 %v777
  %1086 = vmatprep.subr.bf16.mxu0 %v776
  %1087 = vmatpush2.bf16.msra.mxu0 %v775
  %1088 = vmatprep.subr.bf16.mxu0 %v774
  %1089 = vmatpush2.bf16.msra.mxu0 %v773
  %1090 = vmatprep.subr.bf16.mxu0 %v772
  %1091 = vmatpush2.bf16.msra.mxu0 %v771
  %1092 = vmatprep.subr.bf16.mxu0 %v770
  %1093 = vmatpush2.bf16.msra.mxu0 %v769
  %1094 = vmatprep.mubr.bf16.mxu0 %v256
  %1095 = vmatmul.mubr.bf16.gmra.mxu0 %v255
  %v1096 = vpop.f32.mrf.mxu0
  %v1097 = vadd.f32 %v1044, %v1096
  %v1098 = vpop.f32.mrf.mxu0
  %v1099 = vadd.f32 %v1046, %v1098
  %v1100 = vpop.f32.mrf.mxu0
  %v1101 = vadd.f32 %v1048, %v1100
  %v1102 = vpop.f32.mrf.mxu0
  %v1103 = vadd.f32 %v1050, %v1102
  %1104 = vmatprep.mubr.bf16.mxu0 %v265
  %1105 = vmatmul.mubr.bf16.gmra.mxu0 %v264
  %v1106 = vpop.f32.mrf.mxu0
  %v1107 = vadd.f32 %v1054, %v1106
  %v1108 = vpop.f32.mrf.mxu0
  %v1109 = vadd.f32 %v1056, %v1108
  %v1110 = vpop.f32.mrf.mxu0
  %v1111 = vadd.f32 %v1058, %v1110
  %v1112 = vpop.f32.mrf.mxu0
  %v1113 = vadd.f32 %v1060, %v1112
  %1114 = vdwg.mxu0
  %1115 = vmatprep.subr.bf16.mxu0 %v800
  %1116 = vmatpush1.bf16.msra.mxu0 %v799
  %1117 = vmatprep.subr.bf16.mxu0 %v798
  %1118 = vmatpush1.bf16.msra.mxu0 %v797
  %1119 = vmatprep.subr.bf16.mxu0 %v796
  %1120 = vmatpush1.bf16.msra.mxu0 %v795
  %1121 = vmatprep.subr.bf16.mxu0 %v794
  %1122 = vmatpush1.bf16.msra.mxu0 %v793
  %1123 = vmatprep.subr.bf16.mxu0 %v792
  %1124 = vmatpush1.bf16.msra.mxu0 %v791
  %1125 = vmatprep.subr.bf16.mxu0 %v790
  %1126 = vmatpush1.bf16.msra.mxu0 %v789
  %1127 = vmatprep.subr.bf16.mxu0 %v788
  %1128 = vmatpush1.bf16.msra.mxu0 %v787
  %1129 = vmatprep.subr.bf16.mxu0 %v786
  %1130 = vmatpush1.bf16.msra.mxu0 %v785
  %1131 = vmatprep.subr.bf16.mxu0 %v816
  %1132 = vmatpush2.bf16.msra.mxu0 %v815
  %1133 = vmatprep.subr.bf16.mxu0 %v814
  %1134 = vmatpush2.bf16.msra.mxu0 %v813
  %1135 = vmatprep.subr.bf16.mxu0 %v812
  %1136 = vmatpush2.bf16.msra.mxu0 %v811
  %1137 = vmatprep.subr.bf16.mxu0 %v810
  %1138 = vmatpush2.bf16.msra.mxu0 %v809
  %1139 = vmatprep.subr.bf16.mxu0 %v808
  %1140 = vmatpush2.bf16.msra.mxu0 %v807
  %1141 = vmatprep.subr.bf16.mxu0 %v806
  %1142 = vmatpush2.bf16.msra.mxu0 %v805
  %1143 = vmatprep.subr.bf16.mxu0 %v804
  %1144 = vmatpush2.bf16.msra.mxu0 %v803
  %1145 = vmatprep.subr.bf16.mxu0 %v802
  %1146 = vmatpush2.bf16.msra.mxu0 %v801
  %1147 = vmatprep.mubr.bf16.mxu0 %v258
  %1148 = vmatmul.mubr.bf16.gmra.mxu0 %v257
  %v1149 = vpop.f32.mrf.mxu0
  %v1150 = vadd.f32 %v1097, %v1149
  %v1151 = vpop.f32.mrf.mxu0
  %v1152 = vadd.f32 %v1099, %v1151
  %v1153 = vpop.f32.mrf.mxu0
  %v1154 = vadd.f32 %v1101, %v1153
  %v1155 = vpop.f32.mrf.mxu0
  %v1156 = vadd.f32 %v1103, %v1155
  %1157 = vmatprep.mubr.bf16.mxu0 %v267
  %1158 = vmatmul.mubr.bf16.gmra.mxu0 %v266
  %v1159 = vpop.f32.mrf.mxu0
  %v1160 = vadd.f32 %v1107, %v1159
  %v1161 = vpop.f32.mrf.mxu0
  %v1162 = vadd.f32 %v1109, %v1161
  %v1163 = vpop.f32.mrf.mxu0
  %v1164 = vadd.f32 %v1111, %v1163
  %v1165 = vpop.f32.mrf.mxu0
  %v1166 = vadd.f32 %v1113, %v1165
  %1167 = vdwg.mxu0
  %1168 = vmatprep.subr.bf16.mxu0 %v832
  %1169 = vmatpush1.bf16.msra.mxu0 %v831
  %1170 = vmatprep.subr.bf16.mxu0 %v830
  %1171 = vmatpush1.bf16.msra.mxu0 %v829
  %1172 = vmatprep.subr.bf16.mxu0 %v828
  %1173 = vmatpush1.bf16.msra.mxu0 %v827
  %1174 = vmatprep.subr.bf16.mxu0 %v826
  %1175 = vmatpush1.bf16.msra.mxu0 %v825
  %1176 = vmatprep.subr.bf16.mxu0 %v824
  %1177 = vmatpush1.bf16.msra.mxu0 %v823
  %1178 = vmatprep.subr.bf16.mxu0 %v822
  %1179 = vmatpush1.bf16.msra.mxu0 %v821
  %1180 = vmatprep.subr.bf16.mxu0 %v820
  %1181 = vmatpush1.bf16.msra.mxu0 %v819
  %1182 = vmatprep.subr.bf16.mxu0 %v818
  %1183 = vmatpush1.bf16.msra.mxu0 %v817
  %1184 = vmatprep.subr.bf16.mxu0 %v848
  %1185 = vmatpush2.bf16.msra.mxu0 %v847
  %1186 = vmatprep.subr.bf16.mxu0 %v846
  %1187 = vmatpush2.bf16.msra.mxu0 %v845
  %1188 = vmatprep.subr.bf16.mxu0 %v844
  %1189 = vmatpush2.bf16.msra.mxu0 %v843
  %1190 = vmatprep.subr.bf16.mxu0 %v842
  %1191 = vmatpush2.bf16.msra.mxu0 %v841
  %1192 = vmatprep.subr.bf16.mxu0 %v840
  %1193 = vmatpush2.bf16.msra.mxu0 %v839
  %1194 = vmatprep.subr.bf16.mxu0 %v838
  %1195 = vmatpush2.bf16.msra.mxu0 %v837
  %1196 = vmatprep.subr.bf16.mxu0 %v836
  %1197 = vmatpush2.bf16.msra.mxu0 %v835
  %1198 = vmatprep.subr.bf16.mxu0 %v834
  %1199 = vmatpush2.bf16.msra.mxu0 %v833
  %1200 = vmatprep.mubr.bf16.mxu0 %v260
  %1201 = vmatmul.mubr.bf16.gmra.mxu0 %v259
  %v1202 = vpop.f32.mrf.mxu0
  %v1203 = vadd.f32 %v1150, %v1202
  %v1204 = vpop.f32.mrf.mxu0
  %v1205 = vadd.f32 %v1152, %v1204
  %v1206 = vpop.f32.mrf.mxu0
  %v1207 = vadd.f32 %v1154, %v1206
  %v1208 = vpop.f32.mrf.mxu0
  %v1209 = vadd.f32 %v1156, %v1208
  %1210 = vmatprep.mubr.bf16.mxu0 %v269
  %1211 = vmatmul.mubr.bf16.gmra.mxu0 %v268
  %v1212 = vpop.f32.mrf.mxu0
  %v1213 = vadd.f32 %v1160, %v1212
  %v1214 = vpop.f32.mrf.mxu0
  %v1215 = vadd.f32 %v1162, %v1214
  %v1216 = vpop.f32.mrf.mxu0
  %v1217 = vadd.f32 %v1164, %v1216
  %v1218 = vpop.f32.mrf.mxu0
  %v1219 = vadd.f32 %v1166, %v1218
  %1220 = vdwg.mxu0
  %1221 = vmatprep.subr.bf16.mxu0 %v864
  %1222 = vmatpush1.bf16.msra.mxu0 %v863
  %1223 = vmatprep.subr.bf16.mxu0 %v862
  %1224 = vmatpush1.bf16.msra.mxu0 %v861
  %1225 = vmatprep.subr.bf16.mxu0 %v860
  %1226 = vmatpush1.bf16.msra.mxu0 %v859
  %1227 = vmatprep.subr.bf16.mxu0 %v858
  %1228 = vmatpush1.bf16.msra.mxu0 %v857
  %1229 = vmatprep.subr.bf16.mxu0 %v856
  %1230 = vmatpush1.bf16.msra.mxu0 %v855
  %1231 = vmatprep.subr.bf16.mxu0 %v854
  %1232 = vmatpush1.bf16.msra.mxu0 %v853
  %1233 = vmatprep.subr.bf16.mxu0 %v852
  %1234 = vmatpush1.bf16.msra.mxu0 %v851
  %1235 = vmatprep.subr.bf16.mxu0 %v850
  %1236 = vmatpush1.bf16.msra.mxu0 %v849
  %1237 = vmatprep.subr.bf16.mxu0 0
  %1238 = vmatpush2.bf16.msra.mxu0 0
  %1239 = vmatprep.subr.bf16.mxu0 0
  %1240 = vmatpush2.bf16.msra.mxu0 0
  %1241 = vmatprep.subr.bf16.mxu0 0
  %1242 = vmatpush2.bf16.msra.mxu0 0
  %1243 = vmatprep.subr.bf16.mxu0 0
  %1244 = vmatpush2.bf16.msra.mxu0 0
  %1245 = vmatprep.subr.bf16.mxu0 0
  %1246 = vmatpush2.bf16.msra.mxu0 0
  %1247 = vmatprep.subr.bf16.mxu0 0
  %1248 = vmatpush2.bf16.msra.mxu0 0
  %1249 = vmatprep.subr.bf16.mxu0 0
  %1250 = vmatpush2.bf16.msra.mxu0 0
  %1251 = vmatprep.subr.bf16.mxu0 0
  %1252 = vmatpush2.bf16.msra.mxu0 0
  %1253 = vmatprep.mubr.bf16.mxu0 0
  %1254 = vmatmul.mubr.bf16.gmra.mxu0 %v261
  %v1255 = vpop.f32.mrf.mxu0
  %v1256 = vadd.f32 %v1203, %v1255
  %v1257 = vpop.f32.mrf.mxu0
  %v1258 = vadd.f32 %v1205, %v1257
  %v1259 = vpop.f32.mrf.mxu0
  %v1260 = vadd.f32 %v1207, %v1259
  %v1261 = vpop.f32.mrf.mxu0
  %v1262 = vadd.f32 %v1209, %v1261
  %1263 = vmatprep.mubr.bf16.mxu0 0
  %1264 = vmatmul.mubr.bf16.gmra.mxu0 %v270
  %v1265 = vpop.f32.mrf.mxu0
  %v1266 = vadd.f32 %v1213, %v1265
  %v1267 = vpop.f32.mrf.mxu0
  %v1268 = vadd.f32 %v1215, %v1267
  %v1269 = vpop.f32.mrf.mxu0
  %v1270 = vadd.f32 %v1217, %v1269
  %v1271 = vpop.f32.mrf.mxu0
  %v1272 = vadd.f32 %v1219, %v1271
  %1273 = vdwg.mxu0
  %v1274 = vmax.f32 %v1256, 0.0
  %v1275 = vmax.f32 %v1258, 0.0
  %v1276 = vmax.f32 %v1260, 0.0
  %v1277 = vmax.f32 %v1262, 0.0
  %v1278 = vmax.f32 %v1266, 0.0
  %v1279 = vmax.f32 %v1268, 0.0
  %v1280 = vmax.f32 %v1270, 0.0
  %v1281 = vmax.f32 %v1272, 0.0
  %v1282 = vpack.c.bf16 %v1276, %v1274
  %v1283 = vpack.c.bf16 %v1277, %v1275
  %v1284 = vpack.c.bf16 %v1280, %v1278
  %v1285 = vpack.c.bf16 %v1281, %v1279
  %v1286 = vld [vmem:[%s3] sm:$0xff]
  %v1287 = vld [vmem:[%s3 + $0x8] sm:$0xff]
  %v1288 = vld [vmem:[%s3 + $0x10] sm:$0xff]
  %v1289 = vld [vmem:[%s3 + $0x18] sm:$0xff]
  %v1290 = vld [vmem:[%s3 + $0x20] sm:$0xff]
  %v1291 = vld [vmem:[%s3 + $0x28] sm:$0xff]
  %v1292 = vld [vmem:[%s3 + $0x30] sm:$0xff]
  %v1293 = vld [vmem:[%s3 + $0x38] sm:$0xff]
  %v1294 = vld [vmem:[%s3 + $0x40] sm:$0xff]
  %v1295 = vld [vmem:[%s3 + $0x48] sm:$0xff]
  %v1296 = vld [vmem:[%s3 + $0x50] sm:$0xff]
  %v1297 = vld [vmem:[%s3 + $0x58] sm:$0xff]
  %v1298 = vld [vmem:[%s3 + $0x60] sm:$0xff]
  %v1299 = vld [vmem:[%s3 + $0x68] sm:$0xff]
  %v1300 = vld [vmem:[%s3 + $0x70] sm:$0xff]
  %v1301 = vld [vmem:[%s3 + $0x78] sm:$0xff]
  %v1302 = vld [vmem:[%s3 + $0x80] sm:$0xff]
  %v1303 = vld [vmem:[%s3 + $0x88] sm:$0xff]
  %v1304 = vld [vmem:[%s3 + $0x90] sm:$0xff]
  %v1305 = vld [vmem:[%s3 + $0x98] sm:$0xff]
  %v1306 = vld [vmem:[%s3 + $0xa0] sm:$0xff]
  %v1307 = vld [vmem:[%s3 + $0xa8] sm:$0xff]
  %v1308 = vld [vmem:[%s3 + $0xb0] sm:$0xff]
  %v1309 = vld [vmem:[%s3 + $0xb8] sm:$0xff]
  %v1310 = vld [vmem:[%s3 + $0xc0] sm:$0xff]
  %v1311 = vld [vmem:[%s3 + $0xc8] sm:$0xff]
  %v1312 = vld [vmem:[%s3 + $0xd0] sm:$0xff]
  %v1313 = vld [vmem:[%s3 + $0xd8] sm:$0xff]
  %v1314 = vld [vmem:[%s3 + $0xe0] sm:$0xff]
  %v1315 = vld [vmem:[%s3 + $0xe8] sm:$0xff]
  %v1316 = vld [vmem:[%s3 + $0xf0] sm:$0xff]
  %v1317 = vld [vmem:[%s3 + $0xf8] sm:$0xff]
  %v1318 = vld [vmem:[%s3 + $0x100] sm:$0xff]
  %v1319 = vld [vmem:[%s3 + $0x108] sm:$0xff]
  %v1320 = vld [vmem:[%s3 + $0x110] sm:$0xff]
  %v1321 = vld [vmem:[%s3 + $0x118] sm:$0xff]
  %v1322 = vld [vmem:[%s3 + $0x120] sm:$0xff]
  %v1323 = vld [vmem:[%s3 + $0x128] sm:$0xff]
  %v1324 = vld [vmem:[%s3 + $0x130] sm:$0xff]
  %v1325 = vld [vmem:[%s3 + $0x138] sm:$0xff]
  %v1326 = vld [vmem:[%s3 + $0x140] sm:$0xff]
  %v1327 = vld [vmem:[%s3 + $0x148] sm:$0xff]
  %v1328 = vld [vmem:[%s3 + $0x150] sm:$0xff]
  %v1329 = vld [vmem:[%s3 + $0x158] sm:$0xff]
  %v1330 = vld [vmem:[%s3 + $0x160] sm:$0xff]
  %v1331 = vld [vmem:[%s3 + $0x168] sm:$0xff]
  %v1332 = vld [vmem:[%s3 + $0x170] sm:$0xff]
  %v1333 = vld [vmem:[%s3 + $0x178] sm:$0xff]
  %v1334 = vld [vmem:[%s3 + $0x180] sm:$0xff]
  %v1335 = vld [vmem:[%s3 + $0x188] sm:$0xff]
  %v1336 = vld [vmem:[%s3 + $0x190] sm:$0xff]
  %v1337 = vld [vmem:[%s3 + $0x198] sm:$0xff]
  %v1338 = vld [vmem:[%s3 + $0x1a0] sm:$0xff]
  %v1339 = vld [vmem:[%s3 + $0x1a8] sm:$0xff]
  %v1340 = vld [vmem:[%s3 + $0x1b0] sm:$0xff]
  %v1341 = vld [vmem:[%s3 + $0x1b8] sm:$0xff]
  %v1342 = vld [vmem:[%s3 + $0x1c0] sm:$0xff]
  %v1343 = vld [vmem:[%s3 + $0x1c8] sm:$0xff]
  %v1344 = vld [vmem:[%s3 + $0x1d0] sm:$0xff]
  %v1345 = vld [vmem:[%s3 + $0x1d8] sm:$0xff]
  %v1346 = vld [vmem:[%s3 + $0x1e0] sm:$0xff]
  %v1347 = vld [vmem:[%s3 + $0x1e8] sm:$0xff]
  %v1348 = vld [vmem:[%s3 + $0x1f0] sm:$0xff]
  %v1349 = vld [vmem:[%s3 + $0x1f8] sm:$0xff]
  %v1350 = vld [vmem:[%s4] sm:$0xf]
  %v1352 = vlaneseq
  %v1353 = vshrl.u32 %v1352, 7
  %v1354 = vsub.s32 0, %v1353
  %v1355 = vrot.slane %v1350, %v1354
  %v1356 = vlaneseq
  %v1357 = vshrl.u32 %v1356, 7
  %v1358 = vsub.s32 1, %v1357
  %v1359 = vrot.slane %v1350, %v1358
  %v1360 = vlaneseq
  %v1361 = vshrl.u32 %v1360, 7
  %v1362 = vsub.s32 2, %v1361
  %v1363 = vrot.slane %v1350, %v1362
  %v1364 = vlaneseq
  %v1365 = vshrl.u32 %v1364, 7
  %v1366 = vsub.s32 3, %v1365
  %v1367 = vrot.slane %v1350, %v1366
  %v1436 = vunpack.c.l.b16 %v1286
  %v1437 = vunpack.c.h.b16 %v1286
  %v1438 = vunpack.c.l.b16 %v1287
  %v1439 = vunpack.c.h.b16 %v1287
  %v1440 = vunpack.c.l.b16 %v1288
  %v1441 = vunpack.c.h.b16 %v1288
  %v1442 = vunpack.c.l.b16 %v1289
  %v1443 = vunpack.c.h.b16 %v1289
  %v1444 = vunpack.c.l.b16 %v1290
  %v1445 = vunpack.c.h.b16 %v1290
  %v1446 = vunpack.c.l.b16 %v1291
  %v1447 = vunpack.c.h.b16 %v1291
  %v1448 = vunpack.c.l.b16 %v1292
  %v1449 = vunpack.c.h.b16 %v1292
  %v1450 = vunpack.c.l.b16 %v1293
  %v1451 = vunpack.c.h.b16 %v1293
  %v1452 = vunpack.c.l.b16 %v1294
  %v1453 = vunpack.c.h.b16 %v1294
  %v1454 = vunpack.c.l.b16 %v1295
  %v1455 = vunpack.c.h.b16 %v1295
  %v1456 = vunpack.c.l.b16 %v1296
  %v1457 = vunpack.c.h.b16 %v1296
  %v1458 = vunpack.c.l.b16 %v1297
  %v1459 = vunpack.c.h.b16 %v1297
  %v1460 = vunpack.c.l.b16 %v1298
  %v1461 = vunpack.c.h.b16 %v1298
  %v1462 = vunpack.c.l.b16 %v1299
  %v1463 = vunpack.c.h.b16 %v1299
  %v1464 = vunpack.c.l.b16 %v1300
  %v1465 = vunpack.c.h.b16 %v1300
  %v1466 = vunpack.c.l.b16 %v1301
  %v1467 = vunpack.c.h.b16 %v1301
  %v1468 = vunpack.c.l.b16 %v1302
  %v1469 = vunpack.c.h.b16 %v1302
  %v1470 = vunpack.c.l.b16 %v1303
  %v1471 = vunpack.c.h.b16 %v1303
  %v1472 = vunpack.c.l.b16 %v1304
  %v1473 = vunpack.c.h.b16 %v1304
  %v1474 = vunpack.c.l.b16 %v1305
  %v1475 = vunpack.c.h.b16 %v1305
  %v1476 = vunpack.c.l.b16 %v1306
  %v1477 = vunpack.c.h.b16 %v1306
  %v1478 = vunpack.c.l.b16 %v1307
  %v1479 = vunpack.c.h.b16 %v1307
  %v1480 = vunpack.c.l.b16 %v1308
  %v1481 = vunpack.c.h.b16 %v1308
  %v1482 = vunpack.c.l.b16 %v1309
  %v1483 = vunpack.c.h.b16 %v1309
  %v1484 = vunpack.c.l.b16 %v1310
  %v1485 = vunpack.c.h.b16 %v1310
  %v1486 = vunpack.c.l.b16 %v1311
  %v1487 = vunpack.c.h.b16 %v1311
  %v1488 = vunpack.c.l.b16 %v1312
  %v1489 = vunpack.c.h.b16 %v1312
  %v1490 = vunpack.c.l.b16 %v1313
  %v1491 = vunpack.c.h.b16 %v1313
  %v1492 = vunpack.c.l.b16 %v1314
  %v1493 = vunpack.c.h.b16 %v1314
  %v1494 = vunpack.c.l.b16 %v1315
  %v1495 = vunpack.c.h.b16 %v1315
  %v1496 = vunpack.c.l.b16 %v1316
  %v1497 = vunpack.c.h.b16 %v1316
  %v1498 = vunpack.c.l.b16 %v1317
  %v1499 = vunpack.c.h.b16 %v1317
  %v1500 = vunpack.c.l.b16 %v1318
  %v1501 = vunpack.c.h.b16 %v1318
  %v1502 = vunpack.c.l.b16 %v1319
  %v1503 = vunpack.c.h.b16 %v1319
  %v1504 = vunpack.c.l.b16 %v1320
  %v1505 = vunpack.c.h.b16 %v1320
  %v1506 = vunpack.c.l.b16 %v1321
  %v1507 = vunpack.c.h.b16 %v1321
  %v1508 = vunpack.c.l.b16 %v1322
  %v1509 = vunpack.c.h.b16 %v1322
  %v1510 = vunpack.c.l.b16 %v1323
  %v1511 = vunpack.c.h.b16 %v1323
  %v1512 = vunpack.c.l.b16 %v1324
  %v1513 = vunpack.c.h.b16 %v1324
  %v1514 = vunpack.c.l.b16 %v1325
  %v1515 = vunpack.c.h.b16 %v1325
  %v1516 = vunpack.c.l.b16 %v1326
  %v1517 = vunpack.c.h.b16 %v1326
  %v1518 = vunpack.c.l.b16 %v1327
  %v1519 = vunpack.c.h.b16 %v1327
  %v1520 = vunpack.c.l.b16 %v1328
  %v1521 = vunpack.c.h.b16 %v1328
  %v1522 = vunpack.c.l.b16 %v1329
  %v1523 = vunpack.c.h.b16 %v1329
  %v1524 = vunpack.c.l.b16 %v1330
  %v1525 = vunpack.c.h.b16 %v1330
  %v1526 = vunpack.c.l.b16 %v1331
  %v1527 = vunpack.c.h.b16 %v1331
  %v1528 = vunpack.c.l.b16 %v1332
  %v1529 = vunpack.c.h.b16 %v1332
  %v1530 = vunpack.c.l.b16 %v1333
  %v1531 = vunpack.c.h.b16 %v1333
  %v1532 = vunpack.c.l.b16 %v1334
  %v1533 = vunpack.c.h.b16 %v1334
  %v1534 = vunpack.c.l.b16 %v1335
  %v1535 = vunpack.c.h.b16 %v1335
  %v1536 = vunpack.c.l.b16 %v1336
  %v1537 = vunpack.c.h.b16 %v1336
  %v1538 = vunpack.c.l.b16 %v1337
  %v1539 = vunpack.c.h.b16 %v1337
  %v1540 = vunpack.c.l.b16 %v1338
  %v1541 = vunpack.c.h.b16 %v1338
  %v1542 = vunpack.c.l.b16 %v1339
  %v1543 = vunpack.c.h.b16 %v1339
  %v1544 = vunpack.c.l.b16 %v1340
  %v1545 = vunpack.c.h.b16 %v1340
  %v1546 = vunpack.c.l.b16 %v1341
  %v1547 = vunpack.c.h.b16 %v1341
  %v1548 = vunpack.c.l.b16 %v1342
  %v1549 = vunpack.c.h.b16 %v1342
  %v1550 = vunpack.c.l.b16 %v1343
  %v1551 = vunpack.c.h.b16 %v1343
  %v1552 = vunpack.c.l.b16 %v1344
  %v1553 = vunpack.c.h.b16 %v1344
  %v1554 = vunpack.c.l.b16 %v1345
  %v1555 = vunpack.c.h.b16 %v1345
  %v1556 = vunpack.c.l.b16 %v1346
  %v1557 = vunpack.c.h.b16 %v1346
  %v1558 = vunpack.c.l.b16 %v1347
  %v1559 = vunpack.c.h.b16 %v1347
  %v1560 = vunpack.c.l.b16 %v1348
  %v1561 = vunpack.c.h.b16 %v1348
  %v1562 = vunpack.c.l.b16 %v1349
  %v1563 = vunpack.c.h.b16 %v1349
  %v1564 = vpack.c.b16 %v1440, %v1436
  %v1565 = vpack.c.b16 %v1441, %v1437
  %v1566 = vpack.c.b16 %v1442, %v1438
  %v1567 = vpack.c.b16 %v1443, %v1439
  %v1568 = vpack.c.b16 %v1448, %v1444
  %v1569 = vpack.c.b16 %v1449, %v1445
  %v1570 = vpack.c.b16 %v1450, %v1446
  %v1571 = vpack.c.b16 %v1451, %v1447
  %v1572 = vpack.c.b16 %v1456, %v1452
  %v1573 = vpack.c.b16 %v1457, %v1453
  %v1574 = vpack.c.b16 %v1458, %v1454
  %v1575 = vpack.c.b16 %v1459, %v1455
  %v1576 = vpack.c.b16 %v1464, %v1460
  %v1577 = vpack.c.b16 %v1465, %v1461
  %v1578 = vpack.c.b16 %v1466, %v1462
  %v1579 = vpack.c.b16 %v1467, %v1463
  %v1580 = vpack.c.b16 %v1472, %v1468
  %v1581 = vpack.c.b16 %v1473, %v1469
  %v1582 = vpack.c.b16 %v1474, %v1470
  %v1583 = vpack.c.b16 %v1475, %v1471
  %v1584 = vpack.c.b16 %v1480, %v1476
  %v1585 = vpack.c.b16 %v1481, %v1477
  %v1586 = vpack.c.b16 %v1482, %v1478
  %v1587 = vpack.c.b16 %v1483, %v1479
  %v1588 = vpack.c.b16 %v1488, %v1484
  %v1589 = vpack.c.b16 %v1489, %v1485
  %v1590 = vpack.c.b16 %v1490, %v1486
  %v1591 = vpack.c.b16 %v1491, %v1487
  %v1592 = vpack.c.b16 %v1496, %v1492
  %v1593 = vpack.c.b16 %v1497, %v1493
  %v1594 = vpack.c.b16 %v1498, %v1494
  %v1595 = vpack.c.b16 %v1499, %v1495
  %v1596 = vpack.c.b16 %v1504, %v1500
  %v1597 = vpack.c.b16 %v1505, %v1501
  %v1598 = vpack.c.b16 %v1506, %v1502
  %v1599 = vpack.c.b16 %v1507, %v1503
  %v1600 = vpack.c.b16 %v1512, %v1508
  %v1601 = vpack.c.b16 %v1513, %v1509
  %v1602 = vpack.c.b16 %v1514, %v1510
  %v1603 = vpack.c.b16 %v1515, %v1511
  %v1604 = vpack.c.b16 %v1520, %v1516
  %v1605 = vpack.c.b16 %v1521, %v1517
  %v1606 = vpack.c.b16 %v1522, %v1518
  %v1607 = vpack.c.b16 %v1523, %v1519
  %v1608 = vpack.c.b16 %v1528, %v1524
  %v1609 = vpack.c.b16 %v1529, %v1525
  %v1610 = vpack.c.b16 %v1530, %v1526
  %v1611 = vpack.c.b16 %v1531, %v1527
  %v1612 = vpack.c.b16 %v1536, %v1532
  %v1613 = vpack.c.b16 %v1537, %v1533
  %v1614 = vpack.c.b16 %v1538, %v1534
  %v1615 = vpack.c.b16 %v1539, %v1535
  %v1616 = vpack.c.b16 %v1544, %v1540
  %v1617 = vpack.c.b16 %v1545, %v1541
  %v1618 = vpack.c.b16 %v1546, %v1542
  %v1619 = vpack.c.b16 %v1547, %v1543
  %v1620 = vpack.c.b16 %v1552, %v1548
  %v1621 = vpack.c.b16 %v1553, %v1549
  %v1622 = vpack.c.b16 %v1554, %v1550
  %v1623 = vpack.c.b16 %v1555, %v1551
  %v1624 = vpack.c.b16 %v1560, %v1556
  %v1625 = vpack.c.b16 %v1561, %v1557
  %v1626 = vpack.c.b16 %v1562, %v1558
  %v1627 = vpack.c.b16 %v1563, %v1559
  %1692 = vmatprep.subr.bf16.mxu0 %v1593
  %1693 = vmatpush1.bf16.msra.mxu0 %v1592
  %1694 = vmatprep.subr.bf16.mxu0 %v1589
  %1695 = vmatpush1.bf16.msra.mxu0 %v1588
  %1696 = vmatprep.subr.bf16.mxu0 %v1585
  %1697 = vmatpush1.bf16.msra.mxu0 %v1584
  %1698 = vmatprep.subr.bf16.mxu0 %v1581
  %1699 = vmatpush1.bf16.msra.mxu0 %v1580
  %1700 = vmatprep.subr.bf16.mxu0 %v1577
  %1701 = vmatpush1.bf16.msra.mxu0 %v1576
  %1702 = vmatprep.subr.bf16.mxu0 %v1573
  %1703 = vmatpush1.bf16.msra.mxu0 %v1572
  %1704 = vmatprep.subr.bf16.mxu0 %v1569
  %1705 = vmatpush1.bf16.msra.mxu0 %v1568
  %1706 = vmatprep.subr.bf16.mxu0 %v1565
  %1707 = vmatpush1.bf16.msra.mxu0 %v1564
  %1708 = vmatprep.subr.bf16.mxu0 %v1625
  %1709 = vmatpush2.bf16.msra.mxu0 %v1624
  %1710 = vmatprep.subr.bf16.mxu0 %v1621
  %1711 = vmatpush2.bf16.msra.mxu0 %v1620
  %1712 = vmatprep.subr.bf16.mxu0 %v1617
  %1713 = vmatpush2.bf16.msra.mxu0 %v1616
  %1714 = vmatprep.subr.bf16.mxu0 %v1613
  %1715 = vmatpush2.bf16.msra.mxu0 %v1612
  %1716 = vmatprep.subr.bf16.mxu0 %v1609
  %1717 = vmatpush2.bf16.msra.mxu0 %v1608
  %1718 = vmatprep.subr.bf16.mxu0 %v1605
  %1719 = vmatpush2.bf16.msra.mxu0 %v1604
  %1720 = vmatprep.subr.bf16.mxu0 %v1601
  %1721 = vmatpush2.bf16.msra.mxu0 %v1600
  %1722 = vmatprep.subr.bf16.mxu0 %v1597
  %1723 = vmatpush2.bf16.msra.mxu0 %v1596
  %1724 = vmatprep.mubr.bf16.mxu0 %v1283
  %1725 = vmatmul.mubr.bf16.gmra.mxu0 %v1282
  %v1726 = vpop.f32.mrf.mxu0
  %v1727 = vadd.f32 %v1355, %v1726
  %v1728 = vpop.f32.mrf.mxu0
  %v1729 = vadd.f32 %v1359, %v1728
  %v1730 = vpop.f32.mrf.mxu0
  %v1731 = vadd.f32 %v1355, %v1730
  %v1732 = vpop.f32.mrf.mxu0
  %v1733 = vadd.f32 %v1359, %v1732
  %1734 = vmatprep.mubr.bf16.mxu0 %v1285
  %1735 = vmatmul.mubr.bf16.gmra.mxu0 %v1284
  %v1736 = vpop.f32.mrf.mxu0
  %v1737 = vadd.f32 %v1355, %v1736
  %v1738 = vpop.f32.mrf.mxu0
  %v1739 = vadd.f32 %v1359, %v1738
  %v1740 = vpop.f32.mrf.mxu0
  %v1741 = vadd.f32 %v1355, %v1740
  %v1742 = vpop.f32.mrf.mxu0
  %v1743 = vadd.f32 %v1359, %v1742
  %1744 = vdwg.mxu0
  %1745 = vmatprep.subr.bf16.mxu0 %v1595
  %1746 = vmatpush1.bf16.msra.mxu0 %v1594
  %1747 = vmatprep.subr.bf16.mxu0 %v1591
  %1748 = vmatpush1.bf16.msra.mxu0 %v1590
  %1749 = vmatprep.subr.bf16.mxu0 %v1587
  %1750 = vmatpush1.bf16.msra.mxu0 %v1586
  %1751 = vmatprep.subr.bf16.mxu0 %v1583
  %1752 = vmatpush1.bf16.msra.mxu0 %v1582
  %1753 = vmatprep.subr.bf16.mxu0 %v1579
  %1754 = vmatpush1.bf16.msra.mxu0 %v1578
  %1755 = vmatprep.subr.bf16.mxu0 %v1575
  %1756 = vmatpush1.bf16.msra.mxu0 %v1574
  %1757 = vmatprep.subr.bf16.mxu0 %v1571
  %1758 = vmatpush1.bf16.msra.mxu0 %v1570
  %1759 = vmatprep.subr.bf16.mxu0 %v1567
  %1760 = vmatpush1.bf16.msra.mxu0 %v1566
  %1761 = vmatprep.subr.bf16.mxu0 %v1627
  %1762 = vmatpush2.bf16.msra.mxu0 %v1626
  %1763 = vmatprep.subr.bf16.mxu0 %v1623
  %1764 = vmatpush2.bf16.msra.mxu0 %v1622
  %1765 = vmatprep.subr.bf16.mxu0 %v1619
  %1766 = vmatpush2.bf16.msra.mxu0 %v1618
  %1767 = vmatprep.subr.bf16.mxu0 %v1615
  %1768 = vmatpush2.bf16.msra.mxu0 %v1614
  %1769 = vmatprep.subr.bf16.mxu0 %v1611
  %1770 = vmatpush2.bf16.msra.mxu0 %v1610
  %1771 = vmatprep.subr.bf16.mxu0 %v1607
  %1772 = vmatpush2.bf16.msra.mxu0 %v1606
  %1773 = vmatprep.subr.bf16.mxu0 %v1603
  %1774 = vmatpush2.bf16.msra.mxu0 %v1602
  %1775 = vmatprep.subr.bf16.mxu0 %v1599
  %1776 = vmatpush2.bf16.msra.mxu0 %v1598
  %1777 = vmatprep.mubr.bf16.mxu0 %v1283
  %1778 = vmatmul.mubr.bf16.gmra.mxu0 %v1282
  %v1779 = vpop.f32.mrf.mxu0
  %v1780 = vadd.f32 %v1363, %v1779
  %v1781 = vpop.f32.mrf.mxu0
  %v1782 = vadd.f32 %v1367, %v1781
  %v1783 = vpop.f32.mrf.mxu0
  %v1784 = vadd.f32 %v1363, %v1783
  %v1785 = vpop.f32.mrf.mxu0
  %v1786 = vadd.f32 %v1367, %v1785
  %1787 = vmatprep.mubr.bf16.mxu0 %v1285
  %1788 = vmatmul.mubr.bf16.gmra.mxu0 %v1284
  %v1789 = vpop.f32.mrf.mxu0
  %v1790 = vadd.f32 %v1363, %v1789
  %v1791 = vpop.f32.mrf.mxu0
  %v1792 = vadd.f32 %v1367, %v1791
  %v1793 = vpop.f32.mrf.mxu0
  %v1794 = vadd.f32 %v1363, %v1793
  %v1795 = vpop.f32.mrf.mxu0
  %v1796 = vadd.f32 %v1367, %v1795
  %1797 = vdwg.mxu0
  %v1798 = vpack.c.bf16 %v1731, %v1727
  %v1799 = vpack.c.bf16 %v1733, %v1729
  %v1800 = vpack.c.bf16 %v1784, %v1780
  %v1801 = vpack.c.bf16 %v1786, %v1782
  %v1802 = vpack.c.bf16 %v1741, %v1737
  %v1803 = vpack.c.bf16 %v1743, %v1739
  %v1804 = vpack.c.bf16 %v1794, %v1790
  %v1805 = vpack.c.bf16 %v1796, %v1792
  %v1814 = vunpack.c.l.b16 %v1798
  %v1815 = vunpack.c.l.b16 %v1799
  %v1816 = vunpack.c.l.b16 %v1800
  %v1817 = vunpack.c.l.b16 %v1801
  %v1818 = vunpack.c.h.b16 %v1798
  %v1819 = vunpack.c.h.b16 %v1799
  %v1820 = vunpack.c.h.b16 %v1800
  %v1821 = vunpack.c.h.b16 %v1801
  %v1822 = vunpack.c.l.b16 %v1802
  %v1823 = vunpack.c.l.b16 %v1803
  %v1824 = vunpack.c.l.b16 %v1804
  %v1825 = vunpack.c.l.b16 %v1805
  %v1826 = vunpack.c.h.b16 %v1802
  %v1827 = vunpack.c.h.b16 %v1803
  %v1828 = vunpack.c.h.b16 %v1804
  %v1829 = vunpack.c.h.b16 %v1805
  %v1830 = vpack.c.b16 %v1815, %v1814
  %v1831 = vpack.c.b16 %v1817, %v1816
  %v1832 = vpack.c.b16 %v1819, %v1818
  %v1833 = vpack.c.b16 %v1821, %v1820
  %v1834 = vpack.c.b16 %v1823, %v1822
  %v1835 = vpack.c.b16 %v1825, %v1824
  %v1836 = vpack.c.b16 %v1827, %v1826
  %v1837 = vpack.c.b16 %v1829, %v1828
  %1846 = vst [vmem:[%s5] sm:$0xff] %v1830
  %1847 = vst [vmem:[%s5 + $0x8] sm:$0xff] %v1831
  %1848 = vst [vmem:[%s5 + $0x10] sm:$0xff] %v1832
  %1849 = vst [vmem:[%s5 + $0x18] sm:$0xff] %v1833
  %1850 = vst [vmem:[%s5 + $0x20] sm:$0xff] %v1834
  %1851 = vst [vmem:[%s5 + $0x28] sm:$0xff] %v1835
  %1852 = vst [vmem:[%s5 + $0x30] sm:$0xff] %v1836
  %1853 = vst [vmem:[%s5 + $0x38] sm:$0xff] %v1837
  // Predicated region
  $region22: #{unet_forward.6} parent=0 // pred_check
    _
  $region23: #{unet_forward.6} parent=0 // pred_check_branch
    %1855 = sbr.rel (0) target = $region25
  $region24: #{unet_forward.6} parent=0 // pred_region
    _
  $region25: #{unet_forward.6} parent=0 // pred_fallthru
    _
  // Predicated region
  $region26: #{unet_forward.6} parent=0 // pred_check
    _
  $region27: #{unet_forward.6} parent=0 // pred_check_branch
    %1857 = sbr.rel (0) target = $region29
  $region28: #{unet_forward.6} parent=0 // pred_region
    _
  $region29: #{unet_forward.6} parent=0 // pred_fallthru
    _

// kernel: tile.18
$region0: #{tile.18}
  #allocation0 [shape = 's32[1]{0}', space=sflag, size = 0x4, scoped, tag = 'scoped memory for tile.18']
  %s0 = inlined_call_operand.vmem [shape: f32[3], index: 0, kind: input, shape index: {}]
  %s1 = inlined_call_operand.vmem [shape: f32[4,3], index: 1, kind: output, shape index: {}]
  // Predicated region
  $region2: #{tile.18} parent=0 // pred_check
    _
  $region3: #{tile.18} parent=0 // pred_check_branch
    %3 = sbr.rel (0) target = $region5
  $region4: #{tile.18} parent=0 // pred_region
    _
  $region5: #{tile.18} parent=0 // pred_fallthru
    _
  %v4 = vld [vmem:[%s0] ss:$0 sm:$0xff]
  %5 = vst [vmem:[%s1] sm:$0xf] %v4

// kernel: tile.19
$region0: #{tile.19}
  %s0 = inlined_call_operand.vmem [shape: f32[4,3], index: 0, kind: input, shape index: {}]
  %s1 = inlined_call_operand.vmem [shape: f32[12], index: 1, kind: output, shape index: {}]
  $region1: #{tile.19} parent=0
    #allocation0 [shape = 'u8[4096]{0}', space=vmem, size = 0x1000, scoped, tag = 'scoped mem for output reshape']
    #allocation1 [shape = 'u8[4096]{0}', space=vmem, size = 0x1000, scoped, tag = 'scoped mem for input reshape']
    %s3 = sshll.u32 1, 4
    %s4 = ssub.s32 %s3, 1
    %v5 = vld [vmem:[%s0] sm:%s4]
    %6 = vst [vmem:[#allocation1] sm:%s4] %v5
    %v7 = vld [vmem:[#allocation1] sm:$0x1]
    %vm8 = vcmask 23552
    %9 = vst.msk [vmem:[#allocation0] sm:$0x1] %vm8, %v7
    %s10 = scalar_lea.vmem [#allocation1], 3
    %v11 = vld [vmem:[%s10] sm:$0x1]
    %12 = vrot.lane.b32.xlu0 %v11, 9
    %v13 = vpop.permute.xlu0 %12
    %vm14 = vcmask 97352
    %15 = vst.msk [vmem:[#allocation0] sm:$0x1] %vm14, %v13
    %s16 = scalar_lea.vmem [#allocation1], 2
    %v17 = vld [vmem:[%s16] sm:$0x1]
    %18 = vrot.lane.b32.xlu0 %v17, 6
    %v19 = vpop.permute.xlu0 %18
    %vm20 = vcmask 72752
    %21 = vst.msk [vmem:[#allocation0] sm:$0x1] %vm20, %v19
    %s22 = scalar_lea.vmem [#allocation1], 1
    %v23 = vld [vmem:[%s22] sm:$0x1]
    %24 = vrot.lane.b32.xlu0 %v23, 3
    %v25 = vpop.permute.xlu0 %24
    %vm26 = vcmask 48152
    %27 = vst.msk [vmem:[#allocation0] sm:$0x1] %vm26, %v25
    %s29 = sshll.u32 1, 1
    %s30 = ssub.s32 %s29, 1
    %v32 = vld [vmem:[#allocation0] sm:%s30]
    %s33 = sshll.u32 1, 1
    %s34 = ssub.s32 %s33, 1
    %35 = vst [vmem:[%s1] sm:%s34] %v32

// kernel: unet_forward.7
$region0: #{unet_forward.7}
  #allocation0 [shape = 'u32[]', space=smem, size = 0x4, offset = 0x4, fixed_abs, tag = 'smem constant byte address 0x4 - core index']
  #allocation1 [shape = 'u32[144,128]{1,0:T(1,128)}', space=vmem, size = 0x12000, scoped, tag = 'internal scratch']
  %s0 = inlined_call_operand.vmem [shape: bf16[128,384], index: 0, kind: input, shape index: {}]
  %s1 = inlined_call_operand.vmem [shape: bf16[384,256], index: 1, kind: input, shape index: {}]
  %s2 = inlined_call_operand.vmem [shape: f32[1,256], index: 2, kind: input, shape index: {}]
  %s3 = inlined_call_operand.vmem [shape: bf16[256,128], index: 3, kind: input, shape index: {}]
  %s4 = inlined_call_operand.vmem [shape: f32[1,128], index: 4, kind: input, shape index: {}]
  %s5 = inlined_call_operand.vmem [shape: f32[128,128], index: 5, kind: output, shape index: {}]
  %s6 = sld [smem:[#allocation0]]
  $region30: #{unet_forward.7} parent=0
    _
  %s8 = ssub.s32 1, %s6
  %s9 = scalar_select 0, %s8, %s6
  // Predicated region
  $region2: #{unet_forward.7} parent=0 // pred_check
    _
  $region3: #{unet_forward.7} parent=0 // pred_check_branch
    %11 = sbr.rel (0) target = $region5
  $region4: #{unet_forward.7} parent=0 // pred_region
    _
  $region5: #{unet_forward.7} parent=0 // pred_fallthru
    _
  // Predicated region
  $region6: #{unet_forward.7} parent=0 // pred_check
    _
  $region7: #{unet_forward.7} parent=0 // pred_check_branch
    %13 = sbr.rel (0) target = $region9
  $region8: #{unet_forward.7} parent=0 // pred_region
    _
  $region9: #{unet_forward.7} parent=0 // pred_fallthru
    _
  // Predicated region
  $region10: #{unet_forward.7} parent=0 // pred_check
    _
  $region11: #{unet_forward.7} parent=0 // pred_check_branch
    %15 = sbr.rel (0) target = $region13
  $region12: #{unet_forward.7} parent=0 // pred_region
    _
  $region13: #{unet_forward.7} parent=0 // pred_fallthru
    _
  // Predicated region
  $region14: #{unet_forward.7} parent=0 // pred_check
    _
  $region15: #{unet_forward.7} parent=0 // pred_check_branch
    %17 = sbr.rel (0) target = $region17
  $region16: #{unet_forward.7} parent=0 // pred_region
    _
  $region17: #{unet_forward.7} parent=0 // pred_fallthru
    _
  // Predicated region
  $region18: #{unet_forward.7} parent=0 // pred_check
    _
  $region19: #{unet_forward.7} parent=0 // pred_check_branch
    %19 = sbr.rel (0) target = $region21
  $region20: #{unet_forward.7} parent=0 // pred_region
    _
  $region21: #{unet_forward.7} parent=0 // pred_fallthru
    _
  %v21 = vld [vmem:[%s0] sm:$0xff]
  %v22 = vld [vmem:[%s0 + $0x8] sm:$0xf]
  %v23 = vld [vmem:[%s0 + $0xc] sm:$0xff]
  %v24 = vld [vmem:[%s0 + $0x14] sm:$0xf]
  %v25 = vld [vmem:[%s0 + $0x18] sm:$0xff]
  %v26 = vld [vmem:[%s0 + $0x20] sm:$0xf]
  %v27 = vld [vmem:[%s0 + $0x24] sm:$0xff]
  %v28 = vld [vmem:[%s0 + $0x2c] sm:$0xf]
  %v29 = vld [vmem:[%s0 + $0x30] sm:$0xff]
  %v30 = vld [vmem:[%s0 + $0x38] sm:$0xf]
  %v31 = vld [vmem:[%s0 + $0x3c] sm:$0xff]
  %v32 = vld [vmem:[%s0 + $0x44] sm:$0xf]
  %v33 = vld [vmem:[%s0 + $0x48] sm:$0xff]
  %v34 = vld [vmem:[%s0 + $0x50] sm:$0xf]
  %v35 = vld [vmem:[%s0 + $0x54] sm:$0xff]
  %v36 = vld [vmem:[%s0 + $0x5c] sm:$0xf]
  %v37 = vld [vmem:[%s0 + $0x60] sm:$0xff]
  %v38 = vld [vmem:[%s0 + $0x68] sm:$0xf]
  %v39 = vld [vmem:[%s0 + $0x6c] sm:$0xff]
  %v40 = vld [vmem:[%s0 + $0x74] sm:$0xf]
  %v41 = vld [vmem:[%s0 + $0x78] sm:$0xff]
  %v42 = vld [vmem:[%s0 + $0x80] sm:$0xf]
  %v43 = vld [vmem:[%s0 + $0x84] sm:$0xff]
  %v44 = vld [vmem:[%s0 + $0x8c] sm:$0xf]
  %v45 = vld [vmem:[%s0 + $0x90] sm:$0xff]
  %v46 = vld [vmem:[%s0 + $0x98] sm:$0xf]
  %v47 = vld [vmem:[%s0 + $0x9c] sm:$0xff]
  %v48 = vld [vmem:[%s0 + $0xa4] sm:$0xf]
  %v49 = vld [vmem:[%s0 + $0xa8] sm:$0xff]
  %v50 = vld [vmem:[%s0 + $0xb0] sm:$0xf]
  %v51 = vld [vmem:[%s0 + $0xb4] sm:$0xff]
  %v52 = vld [vmem:[%s0 + $0xbc] sm:$0xf]
  %v53 = vld [vmem:[%s1] sm:$0xff]
  %v54 = vld [vmem:[%s1 + $0x8] sm:$0xff]
  %v55 = vld [vmem:[%s1 + $0x10] sm:$0xff]
  %v56 = vld [vmem:[%s1 + $0x18] sm:$0xff]
  %v57 = vld [vmem:[%s1 + $0x20] sm:$0xff]
  %v58 = vld [vmem:[%s1 + $0x28] sm:$0xff]
  %v59 = vld [vmem:[%s1 + $0x30] sm:$0xff]
  %v60 = vld [vmem:[%s1 + $0x38] sm:$0xff]
  %v61 = vld [vmem:[%s1 + $0x40] sm:$0xff]
  %v62 = vld [vmem:[%s1 + $0x48] sm:$0xff]
  %v63 = vld [vmem:[%s1 + $0x50] sm:$0xff]
  %v64 = vld [vmem:[%s1 + $0x58] sm:$0xff]
  %v65 = vld [vmem:[%s1 + $0x60] sm:$0xff]
  %v66 = vld [vmem:[%s1 + $0x68] sm:$0xff]
  %v67 = vld [vmem:[%s1 + $0x70] sm:$0xff]
  %v68 = vld [vmem:[%s1 + $0x78] sm:$0xff]
  %v69 = vld [vmem:[%s1 + $0x80] sm:$0xff]
  %v70 = vld [vmem:[%s1 + $0x88] sm:$0xff]
  %v71 = vld [vmem:[%s1 + $0x90] sm:$0xff]
  %v72 = vld [vmem:[%s1 + $0x98] sm:$0xff]
  %v73 = vld [vmem:[%s1 + $0xa0] sm:$0xff]
  %v74 = vld [vmem:[%s1 + $0xa8] sm:$0xff]
  %v75 = vld [vmem:[%s1 + $0xb0] sm:$0xff]
  %v76 = vld [vmem:[%s1 + $0xb8] sm:$0xff]
  %v77 = vld [vmem:[%s1 + $0xc0] sm:$0xff]
  %v78 = vld [vmem:[%s1 + $0xc8] sm:$0xff]
  %v79 = vld [vmem:[%s1 + $0xd0] sm:$0xff]
  %v80 = vld [vmem:[%s1 + $0xd8] sm:$0xff]
  %v81 = vld [vmem:[%s1 + $0xe0] sm:$0xff]
  %v82 = vld [vmem:[%s1 + $0xe8] sm:$0xff]
  %v83 = vld [vmem:[%s1 + $0xf0] sm:$0xff]
  %v84 = vld [vmem:[%s1 + $0xf8] sm:$0xff]
  %v85 = vld [vmem:[%s1 + $0x100] sm:$0xff]
  %v86 = vld [vmem:[%s1 + $0x108] sm:$0xff]
  %v87 = vld [vmem:[%s1 + $0x110] sm:$0xff]
  %v88 = vld [vmem:[%s1 + $0x118] sm:$0xff]
  %v89 = vld [vmem:[%s1 + $0x120] sm:$0xff]
  %v90 = vld [vmem:[%s1 + $0x128] sm:$0xff]
  %v91 = vld [vmem:[%s1 + $0x130] sm:$0xff]
  %v92 = vld [vmem:[%s1 + $0x138] sm:$0xff]
  %v93 = vld [vmem:[%s1 + $0x140] sm:$0xff]
  %v94 = vld [vmem:[%s1 + $0x148] sm:$0xff]
  %v95 = vld [vmem:[%s1 + $0x150] sm:$0xff]
  %v96 = vld [vmem:[%s1 + $0x158] sm:$0xff]
  %v97 = vld [vmem:[%s1 + $0x160] sm:$0xff]
  %v98 = vld [vmem:[%s1 + $0x168] sm:$0xff]
  %v99 = vld [vmem:[%s1 + $0x170] sm:$0xff]
  %v100 = vld [vmem:[%s1 + $0x178] sm:$0xff]
  %v101 = vld [vmem:[%s2] sm:$0x3]
  %v103 = vlaneseq
  %v104 = vshrl.u32 %v103, 7
  %v105 = vsub.s32 0, %v104
  %v106 = vrot.slane %v101, %v105
  %v107 = vlaneseq
  %v108 = vshrl.u32 %v107, 7
  %v109 = vsub.s32 1, %v108
  %v110 = vrot.slane %v101, %v109
  %v145 = vunpack.c.l.b16 %v21
  %v146 = vunpack.c.h.b16 %v21
  %v147 = vunpack.c.l.b16 %v22
  %v148 = vunpack.c.l.b16 %v23
  %v149 = vunpack.c.h.b16 %v23
  %v150 = vunpack.c.l.b16 %v24
  %v151 = vunpack.c.l.b16 %v25
  %v152 = vunpack.c.h.b16 %v25
  %v153 = vunpack.c.l.b16 %v26
  %v154 = vunpack.c.l.b16 %v27
  %v155 = vunpack.c.h.b16 %v27
  %v156 = vunpack.c.l.b16 %v28
  %v157 = vunpack.c.l.b16 %v29
  %v158 = vunpack.c.h.b16 %v29
  %v159 = vunpack.c.l.b16 %v30
  %v160 = vunpack.c.l.b16 %v31
  %v161 = vunpack.c.h.b16 %v31
  %v162 = vunpack.c.l.b16 %v32
  %v163 = vunpack.c.l.b16 %v33
  %v164 = vunpack.c.h.b16 %v33
  %v165 = vunpack.c.l.b16 %v34
  %v166 = vunpack.c.l.b16 %v35
  %v167 = vunpack.c.h.b16 %v35
  %v168 = vunpack.c.l.b16 %v36
  %v169 = vunpack.c.l.b16 %v37
  %v170 = vunpack.c.h.b16 %v37
  %v171 = vunpack.c.l.b16 %v38
  %v172 = vunpack.c.l.b16 %v39
  %v173 = vunpack.c.h.b16 %v39
  %v174 = vunpack.c.l.b16 %v40
  %v175 = vunpack.c.l.b16 %v41
  %v176 = vunpack.c.h.b16 %v41
  %v177 = vunpack.c.l.b16 %v42
  %v178 = vunpack.c.l.b16 %v43
  %v179 = vunpack.c.h.b16 %v43
  %v180 = vunpack.c.l.b16 %v44
  %v181 = vunpack.c.l.b16 %v45
  %v182 = vunpack.c.h.b16 %v45
  %v183 = vunpack.c.l.b16 %v46
  %v184 = vunpack.c.l.b16 %v47
  %v185 = vunpack.c.h.b16 %v47
  %v186 = vunpack.c.l.b16 %v48
  %v187 = vunpack.c.l.b16 %v49
  %v188 = vunpack.c.h.b16 %v49
  %v189 = vunpack.c.l.b16 %v50
  %v190 = vunpack.c.l.b16 %v51
  %v191 = vunpack.c.h.b16 %v51
  %v192 = vunpack.c.l.b16 %v52
  %v193 = vpack.c.b16 %v148, %v145
  %v194 = vpack.c.b16 %v149, %v146
  %v195 = vpack.c.b16 %v150, %v147
  %v196 = vpack.c.b16 %v154, %v151
  %v197 = vpack.c.b16 %v155, %v152
  %v198 = vpack.c.b16 %v156, %v153
  %v199 = vpack.c.b16 %v160, %v157
  %v200 = vpack.c.b16 %v161, %v158
  %v201 = vpack.c.b16 %v162, %v159
  %v202 = vpack.c.b16 %v166, %v163
  %v203 = vpack.c.b16 %v167, %v164
  %v204 = vpack.c.b16 %v168, %v165
  %v205 = vpack.c.b16 %v172, %v169
  %v206 = vpack.c.b16 %v173, %v170
  %v207 = vpack.c.b16 %v174, %v171
  %v208 = vpack.c.b16 %v178, %v175
  %v209 = vpack.c.b16 %v179, %v176
  %v210 = vpack.c.b16 %v180, %v177
  %v211 = vpack.c.b16 %v184, %v181
  %v212 = vpack.c.b16 %v185, %v182
  %v213 = vpack.c.b16 %v186, %v183
  %v214 = vpack.c.b16 %v190, %v187
  %v215 = vpack.c.b16 %v191, %v188
  %v216 = vpack.c.b16 %v192, %v189
  %v289 = vunpack.c.l.b16 %v53
  %v290 = vunpack.c.h.b16 %v53
  %v291 = vunpack.c.l.b16 %v54
  %v292 = vunpack.c.h.b16 %v54
  %v293 = vunpack.c.l.b16 %v55
  %v294 = vunpack.c.h.b16 %v55
  %v295 = vunpack.c.l.b16 %v56
  %v296 = vunpack.c.h.b16 %v56
  %v297 = vunpack.c.l.b16 %v57
  %v298 = vunpack.c.h.b16 %v57
  %v299 = vunpack.c.l.b16 %v58
  %v300 = vunpack.c.h.b16 %v58
  %v301 = vunpack.c.l.b16 %v59
  %v302 = vunpack.c.h.b16 %v59
  %v303 = vunpack.c.l.b16 %v60
  %v304 = vunpack.c.h.b16 %v60
  %v305 = vunpack.c.l.b16 %v61
  %v306 = vunpack.c.h.b16 %v61
  %v307 = vunpack.c.l.b16 %v62
  %v308 = vunpack.c.h.b16 %v62
  %v309 = vunpack.c.l.b16 %v63
  %v310 = vunpack.c.h.b16 %v63
  %v311 = vunpack.c.l.b16 %v64
  %v312 = vunpack.c.h.b16 %v64
  %v313 = vunpack.c.l.b16 %v65
  %v314 = vunpack.c.h.b16 %v65
  %v315 = vunpack.c.l.b16 %v66
  %v316 = vunpack.c.h.b16 %v66
  %v317 = vunpack.c.l.b16 %v67
  %v318 = vunpack.c.h.b16 %v67
  %v319 = vunpack.c.l.b16 %v68
  %v320 = vunpack.c.h.b16 %v68
  %v321 = vunpack.c.l.b16 %v69
  %v322 = vunpack.c.h.b16 %v69
  %v323 = vunpack.c.l.b16 %v70
  %v324 = vunpack.c.h.b16 %v70
  %v325 = vunpack.c.l.b16 %v71
  %v326 = vunpack.c.h.b16 %v71
  %v327 = vunpack.c.l.b16 %v72
  %v328 = vunpack.c.h.b16 %v72
  %v329 = vunpack.c.l.b16 %v73
  %v330 = vunpack.c.h.b16 %v73
  %v331 = vunpack.c.l.b16 %v74
  %v332 = vunpack.c.h.b16 %v74
  %v333 = vunpack.c.l.b16 %v75
  %v334 = vunpack.c.h.b16 %v75
  %v335 = vunpack.c.l.b16 %v76
  %v336 = vunpack.c.h.b16 %v76
  %v337 = vunpack.c.l.b16 %v77
  %v338 = vunpack.c.h.b16 %v77
  %v339 = vunpack.c.l.b16 %v78
  %v340 = vunpack.c.h.b16 %v78
  %v341 = vunpack.c.l.b16 %v79
  %v342 = vunpack.c.h.b16 %v79
  %v343 = vunpack.c.l.b16 %v80
  %v344 = vunpack.c.h.b16 %v80
  %v345 = vunpack.c.l.b16 %v81
  %v346 = vunpack.c.h.b16 %v81
  %v347 = vunpack.c.l.b16 %v82
  %v348 = vunpack.c.h.b16 %v82
  %v349 = vunpack.c.l.b16 %v83
  %v350 = vunpack.c.h.b16 %v83
  %v351 = vunpack.c.l.b16 %v84
  %v352 = vunpack.c.h.b16 %v84
  %v353 = vunpack.c.l.b16 %v85
  %v354 = vunpack.c.h.b16 %v85
  %v355 = vunpack.c.l.b16 %v86
  %v356 = vunpack.c.h.b16 %v86
  %v357 = vunpack.c.l.b16 %v87
  %v358 = vunpack.c.h.b16 %v87
  %v359 = vunpack.c.l.b16 %v88
  %v360 = vunpack.c.h.b16 %v88
  %v361 = vunpack.c.l.b16 %v89
  %v362 = vunpack.c.h.b16 %v89
  %v363 = vunpack.c.l.b16 %v90
  %v364 = vunpack.c.h.b16 %v90
  %v365 = vunpack.c.l.b16 %v91
  %v366 = vunpack.c.h.b16 %v91
  %v367 = vunpack.c.l.b16 %v92
  %v368 = vunpack.c.h.b16 %v92
  %v369 = vunpack.c.l.b16 %v93
  %v370 = vunpack.c.h.b16 %v93
  %v371 = vunpack.c.l.b16 %v94
  %v372 = vunpack.c.h.b16 %v94
  %v373 = vunpack.c.l.b16 %v95
  %v374 = vunpack.c.h.b16 %v95
  %v375 = vunpack.c.l.b16 %v96
  %v376 = vunpack.c.h.b16 %v96
  %v377 = vunpack.c.l.b16 %v97
  %v378 = vunpack.c.h.b16 %v97
  %v379 = vunpack.c.l.b16 %v98
  %v380 = vunpack.c.h.b16 %v98
  %v381 = vunpack.c.l.b16 %v99
  %v382 = vunpack.c.h.b16 %v99
  %v383 = vunpack.c.l.b16 %v100
  %v384 = vunpack.c.h.b16 %v100
  %v385 = vpack.c.b16 %v291, %v289
  %v386 = vpack.c.b16 %v292, %v290
  %v387 = vpack.c.b16 %v295, %v293
  %v388 = vpack.c.b16 %v296, %v294
  %v389 = vpack.c.b16 %v299, %v297
  %v390 = vpack.c.b16 %v300, %v298
  %v391 = vpack.c.b16 %v303, %v301
  %v392 = vpack.c.b16 %v304, %v302
  %v393 = vpack.c.b16 %v307, %v305
  %v394 = vpack.c.b16 %v308, %v306
  %v395 = vpack.c.b16 %v311, %v309
  %v396 = vpack.c.b16 %v312, %v310
  %v397 = vpack.c.b16 %v315, %v313
  %v398 = vpack.c.b16 %v316, %v314
  %v399 = vpack.c.b16 %v319, %v317
  %v400 = vpack.c.b16 %v320, %v318
  %v401 = vpack.c.b16 %v323, %v321
  %v402 = vpack.c.b16 %v324, %v322
  %v403 = vpack.c.b16 %v327, %v325
  %v404 = vpack.c.b16 %v328, %v326
  %v405 = vpack.c.b16 %v331, %v329
  %v406 = vpack.c.b16 %v332, %v330
  %v407 = vpack.c.b16 %v335, %v333
  %v408 = vpack.c.b16 %v336, %v334
  %v409 = vpack.c.b16 %v339, %v337
  %v410 = vpack.c.b16 %v340, %v338
  %v411 = vpack.c.b16 %v343, %v341
  %v412 = vpack.c.b16 %v344, %v342
  %v413 = vpack.c.b16 %v347, %v345
  %v414 = vpack.c.b16 %v348, %v346
  %v415 = vpack.c.b16 %v351, %v349
  %v416 = vpack.c.b16 %v352, %v350
  %v417 = vpack.c.b16 %v355, %v353
  %v418 = vpack.c.b16 %v356, %v354
  %v419 = vpack.c.b16 %v359, %v357
  %v420 = vpack.c.b16 %v360, %v358
  %v421 = vpack.c.b16 %v363, %v361
  %v422 = vpack.c.b16 %v364, %v362
  %v423 = vpack.c.b16 %v367, %v365
  %v424 = vpack.c.b16 %v368, %v366
  %v425 = vpack.c.b16 %v371, %v369
  %v426 = vpack.c.b16 %v372, %v370
  %v427 = vpack.c.b16 %v375, %v373
  %v428 = vpack.c.b16 %v376, %v374
  %v429 = vpack.c.b16 %v379, %v377
  %v430 = vpack.c.b16 %v380, %v378
  %v431 = vpack.c.b16 %v383, %v381
  %v432 = vpack.c.b16 %v384, %v382
  %481 = vmatprep.subr.bf16.mxu0 %v400
  %482 = vmatpush1.bf16.msra.mxu0 %v399
  %483 = vmatprep.subr.bf16.mxu0 %v398
  %484 = vmatpush1.bf16.msra.mxu0 %v397
  %485 = vmatprep.subr.bf16.mxu0 %v396
  %486 = vmatpush1.bf16.msra.mxu0 %v395
  %487 = vmatprep.subr.bf16.mxu0 %v394
  %488 = vmatpush1.bf16.msra.mxu0 %v393
  %489 = vmatprep.subr.bf16.mxu0 %v392
  %490 = vmatpush1.bf16.msra.mxu0 %v391
  %491 = vmatprep.subr.bf16.mxu0 %v390
  %492 = vmatpush1.bf16.msra.mxu0 %v389
  %493 = vmatprep.subr.bf16.mxu0 %v388
  %494 = vmatpush1.bf16.msra.mxu0 %v387
  %495 = vmatprep.subr.bf16.mxu0 %v386
  %496 = vmatpush1.bf16.msra.mxu0 %v385
  %497 = vmatprep.subr.bf16.mxu0 %v416
  %498 = vmatpush2.bf16.msra.mxu0 %v415
  %499 = vmatprep.subr.bf16.mxu0 %v414
  %500 = vmatpush2.bf16.msra.mxu0 %v413
  %501 = vmatprep.subr.bf16.mxu0 %v412
  %502 = vmatpush2.bf16.msra.mxu0 %v411
  %503 = vmatprep.subr.bf16.mxu0 %v410
  %504 = vmatpush2.bf16.msra.mxu0 %v409
  %505 = vmatprep.subr.bf16.mxu0 %v408
  %506 = vmatpush2.bf16.msra.mxu0 %v407
  %507 = vmatprep.subr.bf16.mxu0 %v406
  %508 = vmatpush2.bf16.msra.mxu0 %v405
  %509 = vmatprep.subr.bf16.mxu0 %v404
  %510 = vmatpush2.bf16.msra.mxu0 %v403
  %511 = vmatprep.subr.bf16.mxu0 %v402
  %512 = vmatpush2.bf16.msra.mxu0 %v401
  %513 = vmatprep.mubr.bf16.mxu0 %v194
  %514 = vmatmul.mubr.bf16.gmra.mxu0 %v193
  %v515 = vpop.f32.mrf.mxu0
  %v516 = vadd.f32 %v106, %v515
  %v517 = vpop.f32.mrf.mxu0
  %v518 = vadd.f32 %v110, %v517
  %v519 = vpop.f32.mrf.mxu0
  %v520 = vadd.f32 %v106, %v519
  %v521 = vpop.f32.mrf.mxu0
  %v522 = vadd.f32 %v110, %v521
  %523 = vmatprep.mubr.bf16.mxu0 %v197
  %524 = vmatmul.mubr.bf16.gmra.mxu0 %v196
  %v525 = vpop.f32.mrf.mxu0
  %v526 = vadd.f32 %v106, %v525
  %v527 = vpop.f32.mrf.mxu0
  %v528 = vadd.f32 %v110, %v527
  %v529 = vpop.f32.mrf.mxu0
  %v530 = vadd.f32 %v106, %v529
  %v531 = vpop.f32.mrf.mxu0
  %v532 = vadd.f32 %v110, %v531
  %533 = vmatprep.mubr.bf16.mxu0 %v200
  %534 = vmatmul.mubr.bf16.gmra.mxu0 %v199
  %v535 = vpop.f32.mrf.mxu0
  %v536 = vadd.f32 %v106, %v535
  %v537 = vpop.f32.mrf.mxu0
  %v538 = vadd.f32 %v110, %v537
  %v539 = vpop.f32.mrf.mxu0
  %v540 = vadd.f32 %v106, %v539
  %v541 = vpop.f32.mrf.mxu0
  %v542 = vadd.f32 %v110, %v541
  %543 = vmatprep.mubr.bf16.mxu0 %v203
  %544 = vmatmul.mubr.bf16.gmra.mxu0 %v202
  %v545 = vpop.f32.mrf.mxu0
  %v546 = vadd.f32 %v106, %v545
  %v547 = vpop.f32.mrf.mxu0
  %v548 = vadd.f32 %v110, %v547
  %v549 = vpop.f32.mrf.mxu0
  %v550 = vadd.f32 %v106, %v549
  %v551 = vpop.f32.mrf.mxu0
  %v552 = vadd.f32 %v110, %v551
  %553 = vmatprep.mubr.bf16.mxu0 %v206
  %554 = vmatmul.mubr.bf16.gmra.mxu0 %v205
  %v555 = vpop.f32.mrf.mxu0
  %v556 = vadd.f32 %v106, %v555
  %v557 = vpop.f32.mrf.mxu0
  %v558 = vadd.f32 %v110, %v557
  %v559 = vpop.f32.mrf.mxu0
  %v560 = vadd.f32 %v106, %v559
  %v561 = vpop.f32.mrf.mxu0
  %v562 = vadd.f32 %v110, %v561
  %563 = vmatprep.mubr.bf16.mxu0 %v209
  %564 = vmatmul.mubr.bf16.gmra.mxu0 %v208
  %v565 = vpop.f32.mrf.mxu0
  %v566 = vadd.f32 %v106, %v565
  %v567 = vpop.f32.mrf.mxu0
  %v568 = vadd.f32 %v110, %v567
  %v569 = vpop.f32.mrf.mxu0
  %v570 = vadd.f32 %v106, %v569
  %v571 = vpop.f32.mrf.mxu0
  %v572 = vadd.f32 %v110, %v571
  %573 = vmatprep.mubr.bf16.mxu0 %v212
  %574 = vmatmul.mubr.bf16.gmra.mxu0 %v211
  %v575 = vpop.f32.mrf.mxu0
  %v576 = vadd.f32 %v106, %v575
  %v577 = vpop.f32.mrf.mxu0
  %v578 = vadd.f32 %v110, %v577
  %v579 = vpop.f32.mrf.mxu0
  %v580 = vadd.f32 %v106, %v579
  %v581 = vpop.f32.mrf.mxu0
  %v582 = vadd.f32 %v110, %v581
  %583 = vmatprep.mubr.bf16.mxu0 %v215
  %584 = vmatmul.mubr.bf16.gmra.mxu0 %v214
  %v585 = vpop.f32.mrf.mxu0
  %v586 = vadd.f32 %v106, %v585
  %v587 = vpop.f32.mrf.mxu0
  %v588 = vadd.f32 %v110, %v587
  %v589 = vpop.f32.mrf.mxu0
  %v590 = vadd.f32 %v106, %v589
  %v591 = vpop.f32.mrf.mxu0
  %v592 = vadd.f32 %v110, %v591
  %593 = vdwg.mxu0
  %594 = vmatprep.subr.bf16.mxu0 %v432
  %595 = vmatpush1.bf16.msra.mxu0 %v431
  %596 = vmatprep.subr.bf16.mxu0 %v430
  %597 = vmatpush1.bf16.msra.mxu0 %v429
  %598 = vmatprep.subr.bf16.mxu0 %v428
  %599 = vmatpush1.bf16.msra.mxu0 %v427
  %600 = vmatprep.subr.bf16.mxu0 %v426
  %601 = vmatpush1.bf16.msra.mxu0 %v425
  %602 = vmatprep.subr.bf16.mxu0 %v424
  %603 = vmatpush1.bf16.msra.mxu0 %v423
  %604 = vmatprep.subr.bf16.mxu0 %v422
  %605 = vmatpush1.bf16.msra.mxu0 %v421
  %606 = vmatprep.subr.bf16.mxu0 %v420
  %607 = vmatpush1.bf16.msra.mxu0 %v419
  %608 = vmatprep.subr.bf16.mxu0 %v418
  %609 = vmatpush1.bf16.msra.mxu0 %v417
  %610 = vmatprep.subr.bf16.mxu0 0
  %611 = vmatpush2.bf16.msra.mxu0 0
  %612 = vmatprep.subr.bf16.mxu0 0
  %613 = vmatpush2.bf16.msra.mxu0 0
  %614 = vmatprep.subr.bf16.mxu0 0
  %615 = vmatpush2.bf16.msra.mxu0 0
  %616 = vmatprep.subr.bf16.mxu0 0
  %617 = vmatpush2.bf16.msra.mxu0 0
  %618 = vmatprep.subr.bf16.mxu0 0
  %619 = vmatpush2.bf16.msra.mxu0 0
  %620 = vmatprep.subr.bf16.mxu0 0
  %621 = vmatpush2.bf16.msra.mxu0 0
  %622 = vmatprep.subr.bf16.mxu0 0
  %623 = vmatpush2.bf16.msra.mxu0 0
  %624 = vmatprep.subr.bf16.mxu0 0
  %625 = vmatpush2.bf16.msra.mxu0 0
  %626 = vmatprep.mubr.bf16.mxu0 0
  %627 = vmatmul.mubr.bf16.gmra.mxu0 %v195
  %v628 = vpop.f32.mrf.mxu0
  %v629 = vadd.f32 %v516, %v628
  %v630 = vpop.f32.mrf.mxu0
  %v631 = vadd.f32 %v518, %v630
  %v632 = vpop.f32.mrf.mxu0
  %v633 = vadd.f32 %v520, %v632
  %v634 = vpop.f32.mrf.mxu0
  %v635 = vadd.f32 %v522, %v634
  %636 = vmatprep.mubr.bf16.mxu0 0
  %637 = vmatmul.mubr.bf16.gmra.mxu0 %v198
  %v638 = vpop.f32.mrf.mxu0
  %v639 = vadd.f32 %v526, %v638
  %v640 = vpop.f32.mrf.mxu0
  %v641 = vadd.f32 %v528, %v640
  %v642 = vpop.f32.mrf.mxu0
  %v643 = vadd.f32 %v530, %v642
  %v644 = vpop.f32.mrf.mxu0
  %v645 = vadd.f32 %v532, %v644
  %646 = vmatprep.mubr.bf16.mxu0 0
  %647 = vmatmul.mubr.bf16.gmra.mxu0 %v201
  %v648 = vpop.f32.mrf.mxu0
  %v649 = vadd.f32 %v536, %v648
  %v650 = vpop.f32.mrf.mxu0
  %v651 = vadd.f32 %v538, %v650
  %v652 = vpop.f32.mrf.mxu0
  %v653 = vadd.f32 %v540, %v652
  %v654 = vpop.f32.mrf.mxu0
  %v655 = vadd.f32 %v542, %v654
  %656 = vmatprep.mubr.bf16.mxu0 0
  %657 = vmatmul.mubr.bf16.gmra.mxu0 %v204
  %v658 = vpop.f32.mrf.mxu0
  %v659 = vadd.f32 %v546, %v658
  %v660 = vpop.f32.mrf.mxu0
  %v661 = vadd.f32 %v548, %v660
  %v662 = vpop.f32.mrf.mxu0
  %v663 = vadd.f32 %v550, %v662
  %v664 = vpop.f32.mrf.mxu0
  %v665 = vadd.f32 %v552, %v664
  %666 = vmatprep.mubr.bf16.mxu0 0
  %667 = vmatmul.mubr.bf16.gmra.mxu0 %v207
  %v668 = vpop.f32.mrf.mxu0
  %v669 = vadd.f32 %v556, %v668
  %v670 = vpop.f32.mrf.mxu0
  %v671 = vadd.f32 %v558, %v670
  %v672 = vpop.f32.mrf.mxu0
  %v673 = vadd.f32 %v560, %v672
  %v674 = vpop.f32.mrf.mxu0
  %v675 = vadd.f32 %v562, %v674
  %676 = vmatprep.mubr.bf16.mxu0 0
  %677 = vmatmul.mubr.bf16.gmra.mxu0 %v210
  %v678 = vpop.f32.mrf.mxu0
  %v679 = vadd.f32 %v566, %v678
  %v680 = vpop.f32.mrf.mxu0
  %v681 = vadd.f32 %v568, %v680
  %v682 = vpop.f32.mrf.mxu0
  %v683 = vadd.f32 %v570, %v682
  %v684 = vpop.f32.mrf.mxu0
  %v685 = vadd.f32 %v572, %v684
  %686 = vmatprep.mubr.bf16.mxu0 0
  %687 = vmatmul.mubr.bf16.gmra.mxu0 %v213
  %v688 = vpop.f32.mrf.mxu0
  %v689 = vadd.f32 %v576, %v688
  %v690 = vpop.f32.mrf.mxu0
  %v691 = vadd.f32 %v578, %v690
  %v692 = vpop.f32.mrf.mxu0
  %v693 = vadd.f32 %v580, %v692
  %v694 = vpop.f32.mrf.mxu0
  %v695 = vadd.f32 %v582, %v694
  %696 = vmatprep.mubr.bf16.mxu0 0
  %697 = vmatmul.mubr.bf16.gmra.mxu0 %v216
  %v698 = vpop.f32.mrf.mxu0
  %v699 = vadd.f32 %v586, %v698
  %v700 = vpop.f32.mrf.mxu0
  %v701 = vadd.f32 %v588, %v700
  %v702 = vpop.f32.mrf.mxu0
  %v703 = vadd.f32 %v590, %v702
  %v704 = vpop.f32.mrf.mxu0
  %v705 = vadd.f32 %v592, %v704
  %706 = vdwg.mxu0
  %v707 = vmax.f32 %v629, 0.0
  %v708 = vmax.f32 %v631, 0.0
  %v709 = vmax.f32 %v633, 0.0
  %v710 = vmax.f32 %v635, 0.0
  %v711 = vmax.f32 %v639, 0.0
  %v712 = vmax.f32 %v641, 0.0
  %v713 = vmax.f32 %v643, 0.0
  %v714 = vmax.f32 %v645, 0.0
  %v715 = vmax.f32 %v649, 0.0
  %v716 = vmax.f32 %v651, 0.0
  %v717 = vmax.f32 %v653, 0.0
  %v718 = vmax.f32 %v655, 0.0
  %v719 = vmax.f32 %v659, 0.0
  %v720 = vmax.f32 %v661, 0.0
  %v721 = vmax.f32 %v663, 0.0
  %v722 = vmax.f32 %v665, 0.0
  %v723 = vmax.f32 %v669, 0.0
  %v724 = vmax.f32 %v671, 0.0
  %v725 = vmax.f32 %v673, 0.0
  %v726 = vmax.f32 %v675, 0.0
  %v727 = vmax.f32 %v679, 0.0
  %v728 = vmax.f32 %v681, 0.0
  %v729 = vmax.f32 %v683, 0.0
  %v730 = vmax.f32 %v685, 0.0
  %v731 = vmax.f32 %v689, 0.0
  %v732 = vmax.f32 %v691, 0.0
  %v733 = vmax.f32 %v693, 0.0
  %v734 = vmax.f32 %v695, 0.0
  %v735 = vmax.f32 %v699, 0.0
  %v736 = vmax.f32 %v701, 0.0
  %v737 = vmax.f32 %v703, 0.0
  %v738 = vmax.f32 %v705, 0.0
  %v739 = vpack.c.bf16 %v709, %v707
  %v740 = vpack.c.bf16 %v710, %v708
  %v741 = vpack.c.bf16 %v713, %v711
  %v742 = vpack.c.bf16 %v714, %v712
  %v743 = vpack.c.bf16 %v717, %v715
  %v744 = vpack.c.bf16 %v718, %v716
  %v745 = vpack.c.bf16 %v721, %v719
  %v746 = vpack.c.bf16 %v722, %v720
  %v747 = vpack.c.bf16 %v725, %v723
  %v748 = vpack.c.bf16 %v726, %v724
  %v749 = vpack.c.bf16 %v729, %v727
  %v750 = vpack.c.bf16 %v730, %v728
  %v751 = vpack.c.bf16 %v733, %v731
  %v752 = vpack.c.bf16 %v734, %v732
  %v753 = vpack.c.bf16 %v737, %v735
  %v754 = vpack.c.bf16 %v738, %v736
  %v755 = vld [vmem:[%s3] sm:$0xf]
  %v756 = vld [vmem:[%s3 + $0x4] sm:$0xf]
  %v757 = vld [vmem:[%s3 + $0x8] sm:$0xf]
  %v758 = vld [vmem:[%s3 + $0xc] sm:$0xf]
  %v759 = vld [vmem:[%s3 + $0x10] sm:$0xf]
  %v760 = vld [vmem:[%s3 + $0x14] sm:$0xf]
  %v761 = vld [vmem:[%s3 + $0x18] sm:$0xf]
  %v762 = vld [vmem:[%s3 + $0x1c] sm:$0xf]
  %v763 = vld [vmem:[%s3 + $0x20] sm:$0xf]
  %v764 = vld [vmem:[%s3 + $0x24] sm:$0xf]
  %v765 = vld [vmem:[%s3 + $0x28] sm:$0xf]
  %v766 = vld [vmem:[%s3 + $0x2c] sm:$0xf]
  %v767 = vld [vmem:[%s3 + $0x30] sm:$0xf]
  %v768 = vld [vmem:[%s3 + $0x34] sm:$0xf]
  %v769 = vld [vmem:[%s3 + $0x38] sm:$0xf]
  %v770 = vld [vmem:[%s3 + $0x3c] sm:$0xf]
  %v771 = vld [vmem:[%s3 + $0x40] sm:$0xf]
  %v772 = vld [vmem:[%s3 + $0x44] sm:$0xf]
  %v773 = vld [vmem:[%s3 + $0x48] sm:$0xf]
  %v774 = vld [vmem:[%s3 + $0x4c] sm:$0xf]
  %v775 = vld [vmem:[%s3 + $0x50] sm:$0xf]
  %v776 = vld [vmem:[%s3 + $0x54] sm:$0xf]
  %v777 = vld [vmem:[%s3 + $0x58] sm:$0xf]
  %v778 = vld [vmem:[%s3 + $0x5c] sm:$0xf]
  %v779 = vld [vmem:[%s3 + $0x60] sm:$0xf]
  %v780 = vld [vmem:[%s3 + $0x64] sm:$0xf]
  %v781 = vld [vmem:[%s3 + $0x68] sm:$0xf]
  %v782 = vld [vmem:[%s3 + $0x6c] sm:$0xf]
  %v783 = vld [vmem:[%s3 + $0x70] sm:$0xf]
  %v784 = vld [vmem:[%s3 + $0x74] sm:$0xf]
  %v785 = vld [vmem:[%s3 + $0x78] sm:$0xf]
  %v786 = vld [vmem:[%s3 + $0x7c] sm:$0xf]
  %v787 = vld [vmem:[%s4] sm:$0x1]
  %v789 = vlaneseq
  %v790 = vshrl.u32 %v789, 7
  %v791 = vsub.s32 0, %v790
  %v792 = vrot.slane %v787, %v791
  %v826 = vunpack.c.l.b16 %v755
  %v827 = vunpack.c.l.b16 %v756
  %v828 = vunpack.c.l.b16 %v757
  %v829 = vunpack.c.l.b16 %v758
  %v830 = vunpack.c.l.b16 %v759
  %v831 = vunpack.c.l.b16 %v760
  %v832 = vunpack.c.l.b16 %v761
  %v833 = vunpack.c.l.b16 %v762
  %v834 = vunpack.c.l.b16 %v763
  %v835 = vunpack.c.l.b16 %v764
  %v836 = vunpack.c.l.b16 %v765
  %v837 = vunpack.c.l.b16 %v766
  %v838 = vunpack.c.l.b16 %v767
  %v839 = vunpack.c.l.b16 %v768
  %v840 = vunpack.c.l.b16 %v769
  %v841 = vunpack.c.l.b16 %v770
  %v842 = vunpack.c.l.b16 %v771
  %v843 = vunpack.c.l.b16 %v772
  %v844 = vunpack.c.l.b16 %v773
  %v845 = vunpack.c.l.b16 %v774
  %v846 = vunpack.c.l.b16 %v775
  %v847 = vunpack.c.l.b16 %v776
  %v848 = vunpack.c.l.b16 %v777
  %v849 = vunpack.c.l.b16 %v778
  %v850 = vunpack.c.l.b16 %v779
  %v851 = vunpack.c.l.b16 %v780
  %v852 = vunpack.c.l.b16 %v781
  %v853 = vunpack.c.l.b16 %v782
  %v854 = vunpack.c.l.b16 %v783
  %v855 = vunpack.c.l.b16 %v784
  %v856 = vunpack.c.l.b16 %v785
  %v857 = vunpack.c.l.b16 %v786
  %v858 = vpack.c.b16 %v827, %v826
  %v859 = vpack.c.b16 %v829, %v828
  %v860 = vpack.c.b16 %v831, %v830
  %v861 = vpack.c.b16 %v833, %v832
  %v862 = vpack.c.b16 %v835, %v834
  %v863 = vpack.c.b16 %v837, %v836
  %v864 = vpack.c.b16 %v839, %v838
  %v865 = vpack.c.b16 %v841, %v840
  %v866 = vpack.c.b16 %v843, %v842
  %v867 = vpack.c.b16 %v845, %v844
  %v868 = vpack.c.b16 %v847, %v846
  %v869 = vpack.c.b16 %v849, %v848
  %v870 = vpack.c.b16 %v851, %v850
  %v871 = vpack.c.b16 %v853, %v852
  %v872 = vpack.c.b16 %v855, %v854
  %v873 = vpack.c.b16 %v857, %v856
  %890 = vmatprep.subr.bf16.mxu0 0
  %891 = vmatpush1.bf16.msra.mxu0 %v865
  %892 = vmatprep.subr.bf16.mxu0 0
  %893 = vmatpush1.bf16.msra.mxu0 %v864
  %894 = vmatprep.subr.bf16.mxu0 0
  %895 = vmatpush1.bf16.msra.mxu0 %v863
  %896 = vmatprep.subr.bf16.mxu0 0
  %897 = vmatpush1.bf16.msra.mxu0 %v862
  %898 = vmatprep.subr.bf16.mxu0 0
  %899 = vmatpush1.bf16.msra.mxu0 %v861
  %900 = vmatprep.subr.bf16.mxu0 0
  %901 = vmatpush1.bf16.msra.mxu0 %v860
  %902 = vmatprep.subr.bf16.mxu0 0
  %903 = vmatpush1.bf16.msra.mxu0 %v859
  %904 = vmatprep.subr.bf16.mxu0 0
  %905 = vmatpush1.bf16.msra.mxu0 %v858
  %906 = vmatprep.subr.bf16.mxu0 0
  %907 = vmatpush2.bf16.msra.mxu0 %v873
  %908 = vmatprep.subr.bf16.mxu0 0
  %909 = vmatpush2.bf16.msra.mxu0 %v872
  %910 = vmatprep.subr.bf16.mxu0 0
  %911 = vmatpush2.bf16.msra.mxu0 %v871
  %912 = vmatprep.subr.bf16.mxu0 0
  %913 = vmatpush2.bf16.msra.mxu0 %v870
  %914 = vmatprep.subr.bf16.mxu0 0
  %915 = vmatpush2.bf16.msra.mxu0 %v869
  %916 = vmatprep.subr.bf16.mxu0 0
  %917 = vmatpush2.bf16.msra.mxu0 %v868
  %918 = vmatprep.subr.bf16.mxu0 0
  %919 = vmatpush2.bf16.msra.mxu0 %v867
  %920 = vmatprep.subr.bf16.mxu0 0
  %921 = vmatpush2.bf16.msra.mxu0 %v866
  %922 = vmatprep.mubr.bf16.mxu0 %v740
  %923 = vmatmul.mubr.bf16.gmra.mxu0 %v739
  %v924 = vpop.f32.mrf.mxu0
  %v925 = vadd.f32 %v792, %v924
  %v926 = vpop.f32.mrf.mxu0
  %v927 = vpop.f32.mrf.mxu0
  %v928 = vadd.f32 %v792, %v927
  %v929 = vpop.f32.mrf.mxu0
  %930 = vmatprep.mubr.bf16.mxu0 %v742
  %931 = vmatmul.mubr.bf16.gmra.mxu0 %v741
  %v932 = vpop.f32.mrf.mxu0
  %v933 = vadd.f32 %v792, %v932
  %v934 = vpop.f32.mrf.mxu0
  %v935 = vpop.f32.mrf.mxu0
  %v936 = vadd.f32 %v792, %v935
  %v937 = vpop.f32.mrf.mxu0
  %938 = vmatprep.mubr.bf16.mxu0 %v744
  %939 = vmatmul.mubr.bf16.gmra.mxu0 %v743
  %v940 = vpop.f32.mrf.mxu0
  %v941 = vadd.f32 %v792, %v940
  %v942 = vpop.f32.mrf.mxu0
  %v943 = vpop.f32.mrf.mxu0
  %v944 = vadd.f32 %v792, %v943
  %v945 = vpop.f32.mrf.mxu0
  %946 = vmatprep.mubr.bf16.mxu0 %v746
  %947 = vmatmul.mubr.bf16.gmra.mxu0 %v745
  %v948 = vpop.f32.mrf.mxu0
  %v949 = vadd.f32 %v792, %v948
  %v950 = vpop.f32.mrf.mxu0
  %v951 = vpop.f32.mrf.mxu0
  %v952 = vadd.f32 %v792, %v951
  %v953 = vpop.f32.mrf.mxu0
  %954 = vmatprep.mubr.bf16.mxu0 %v748
  %955 = vmatmul.mubr.bf16.gmra.mxu0 %v747
  %v956 = vpop.f32.mrf.mxu0
  %v957 = vadd.f32 %v792, %v956
  %v958 = vpop.f32.mrf.mxu0
  %v959 = vpop.f32.mrf.mxu0
  %v960 = vadd.f32 %v792, %v959
  %v961 = vpop.f32.mrf.mxu0
  %962 = vmatprep.mubr.bf16.mxu0 %v750
  %963 = vmatmul.mubr.bf16.gmra.mxu0 %v749
  %v964 = vpop.f32.mrf.mxu0
  %v965 = vadd.f32 %v792, %v964
  %v966 = vpop.f32.mrf.mxu0
  %v967 = vpop.f32.mrf.mxu0
  %v968 = vadd.f32 %v792, %v967
  %v969 = vpop.f32.mrf.mxu0
  %970 = vmatprep.mubr.bf16.mxu0 %v752
  %971 = vmatmul.mubr.bf16.gmra.mxu0 %v751
  %v972 = vpop.f32.mrf.mxu0
  %v973 = vadd.f32 %v792, %v972
  %v974 = vpop.f32.mrf.mxu0
  %v975 = vpop.f32.mrf.mxu0
  %v976 = vadd.f32 %v792, %v975
  %v977 = vpop.f32.mrf.mxu0
  %978 = vmatprep.mubr.bf16.mxu0 %v754
  %979 = vmatmul.mubr.bf16.gmra.mxu0 %v753
  %v980 = vpop.f32.mrf.mxu0
  %v981 = vadd.f32 %v792, %v980
  %v982 = vpop.f32.mrf.mxu0
  %v983 = vpop.f32.mrf.mxu0
  %v984 = vadd.f32 %v792, %v983
  %v985 = vpop.f32.mrf.mxu0
  %986 = vdwg.mxu0
  %987 = vst [vmem:[%s5] sm:$0xff] %v925
  %988 = vst [vmem:[%s5 + $0x8] sm:$0xff] %v928
  %989 = vst [vmem:[%s5 + $0x10] sm:$0xff] %v933
  %990 = vst [vmem:[%s5 + $0x18] sm:$0xff] %v936
  %991 = vst [vmem:[%s5 + $0x20] sm:$0xff] %v941
  %992 = vst [vmem:[%s5 + $0x28] sm:$0xff] %v944
  %993 = vst [vmem:[%s5 + $0x30] sm:$0xff] %v949
  %994 = vst [vmem:[%s5 + $0x38] sm:$0xff] %v952
  %995 = vst [vmem:[%s5 + $0x40] sm:$0xff] %v957
  %996 = vst [vmem:[%s5 + $0x48] sm:$0xff] %v960
  %997 = vst [vmem:[%s5 + $0x50] sm:$0xff] %v965
  %998 = vst [vmem:[%s5 + $0x58] sm:$0xff] %v968
  %999 = vst [vmem:[%s5 + $0x60] sm:$0xff] %v973
  %1000 = vst [vmem:[%s5 + $0x68] sm:$0xff] %v976
  %1001 = vst [vmem:[%s5 + $0x70] sm:$0xff] %v981
  %1002 = vst [vmem:[%s5 + $0x78] sm:$0xff] %v984
  // Predicated region
  $region22: #{unet_forward.7} parent=0 // pred_check
    _
  $region23: #{unet_forward.7} parent=0 // pred_check_branch
    %1004 = sbr.rel (0) target = $region25
  $region24: #{unet_forward.7} parent=0 // pred_region
    _
  $region25: #{unet_forward.7} parent=0 // pred_fallthru
    _
  // Predicated region
  $region26: #{unet_forward.7} parent=0 // pred_check
    _
  $region27: #{unet_forward.7} parent=0 // pred_check_branch
    %1006 = sbr.rel (0) target = $region29
  $region28: #{unet_forward.7} parent=0 // pred_region
    _
  $region29: #{unet_forward.7} parent=0 // pred_fallthru
    _

</llo_original>
